<compile_context>
chip_gen: v7x
topology: tpu7x:2x2x1
jax: 0.10.0
libtpu: 0.0.40
codegen_flags: <defaults>
</compile_context>

<pallas_src>
import math
import jax
import jax.numpy as jnp
from jax import lax
from jax.experimental import pallas as pl
from jax.experimental.pallas import tpu as pltpu

# ---- config, consistent with ViT(chw=(4,16,16), n_patches=4, n_blocks=2,
# ---- hidden_d=32, n_heads=2, out_d=10)
B = 2
C, H_IMG, W_IMG = 4, 16, 16
N_PATCHES = 4
N_BLOCKS = 2
HIDDEN_D = 32
N_HEADS = 2
OUT_D = 10

PATCH = H_IMG // N_PATCHES
INPUT_D = C * PATCH * PATCH            # 64
NP2 = N_PATCHES * N_PATCHES            # 16
T = NP2 + 1                            # 17 tokens (cls + patches)
DH = HIDDEN_D // N_HEADS               # per-head dim
SCALING = DH ** (-0.5)                 # applied AFTER softmax (as in reference)
LN_EPS = 1e-5
FF_D = 4 * HIDDEN_D                    # MLP expansion = 4

F32 = jnp.float32


# -------------------------- glue: patchify (pure data rearrangement) ---------
def patchify(images):
    # (B, C, H, W) -> (B, NP2, C*PATCH*PATCH); flatten order matches
    # torch patch.flatten(): channel-major, then patch rows, then cols.
    n, c, h, w = images.shape
    x = images.reshape(n, c, N_PATCHES, PATCH, N_PATCHES, PATCH)
    x = x.transpose(0, 2, 4, 1, 3, 5)          # (B, Pi, Pj, C, ph, pw)
    return x.reshape(n, NP2, c * PATCH * PATCH)


# -------------------------- in-kernel helpers ---------------------------------
def _layernorm(v, g, b):
    mu = jnp.mean(v, axis=-1, keepdims=True)
    var = jnp.mean((v - mu) ** 2, axis=-1, keepdims=True)
    return (v - mu) * lax.rsqrt(var + LN_EPS) * g + b


def _gelu_exact(x):
    return 0.5 * x * (1.0 + lax.erf(x / math.sqrt(2.0)))


# -------------------------- fused ViT kernel ----------------------------------
def vit_kernel(patches_ref, wmap_ref, bmap_ref, cls_ref, pos_ref,
               ln1g_ref, ln1b_ref, wqkv_ref, bqkv_ref, wo_ref, bo_ref,
               ln2g_ref, ln2b_ref, w1_ref, b1_ref, w2_ref, b2_ref,
               hlng_ref, hlnb_ref, wh_ref, bh_ref, out_ref):
    # --- patch embedding: linear map, prepend class token, add positions ---
    p = patches_ref[0]                                            # (NP2, INPUT_D)
    tok = jnp.dot(p, wmap_ref[...], preferred_element_type=F32) + bmap_ref[...]
    x = jnp.concatenate([cls_ref[...], tok], axis=0) + pos_ref[...]   # (T, D)

    # --- transformer encoder blocks (statically unrolled) ---
    for l in range(N_BLOCKS):
        # LN -> MultiHeadAttention -> residual
        xn = _layernorm(x, ln1g_ref[l], ln1b_ref[l])
        qkv = jnp.dot(xn, wqkv_ref[l], preferred_element_type=F32) + bqkv_ref[l]
        wo_l = wo_ref[l]                                          # (D, D)

        proj = None
        for h in range(N_HEADS):
            qh = qkv[:, h * DH:(h + 1) * DH]
            kh = qkv[:, HIDDEN_D + h * DH: HIDDEN_D + (h + 1) * DH]
            vh = qkv[:, 2 * HIDDEN_D + h * DH: 2 * HIDDEN_D + (h + 1) * DH]
            # q @ k^T without materializing the transpose
            e = lax.dot_general(qh, kh, (((1,), (1,)), ((), ())),
                                preferred_element_type=F32)       # (T, T)
            e = e - jnp.max(e, axis=-1, keepdims=True)
            pe = jnp.exp(e)
            inv = pl.reciprocal(jnp.sum(pe, axis=-1, keepdims=True), approx=True)
            att = pe * inv
            # scale applied AFTER softmax in the reference; fold it into v
            ho = jnp.dot(att, vh * SCALING, preferred_element_type=F32)  # (T, DH)
            # concat(heads) @ wo  ==  sum_h head_h @ wo[h*DH:(h+1)*DH, :]
            term = jnp.dot(ho, wo_l[h * DH:(h + 1) * DH, :],
                           preferred_element_type=F32)            # (T, D)
            proj = term if proj is None else proj + term
        x = x + proj + bo_ref[l]

        # LN -> MLP (exact GELU) -> residual
        xn2 = _layernorm(x, ln2g_ref[l], ln2b_ref[l])
        h1 = jnp.dot(xn2, w1_ref[l], preferred_element_type=F32) + b1_ref[l]
        h1 = _gelu_exact(h1)
        x = x + jnp.dot(h1, w2_ref[l], preferred_element_type=F32) + b2_ref[l]

    # --- classification head: mean over tokens -> LN -> Linear ---
    m = jnp.mean(x, axis=0, keepdims=True)                        # (1, D)
    mn = _layernorm(m, hlng_ref[...], hlnb_ref[...])
    out_ref[0] = jnp.dot(mn, wh_ref[...], preferred_element_type=F32) + bh_ref[...]


def _const_spec(arr):
    nd = arr.ndim
    return pl.BlockSpec(arr.shape, lambda b, nd=nd: (0,) * nd)


def vit_pallas(patches, P):
    args = (patches, P["wmap"], P["bmap"], P["cls"], P["pos"],
            P["ln1_g"], P["ln1_b"], P["wqkv"], P["bqkv"], P["wo"], P["bo"],
            P["ln2_g"], P["ln2_b"], P["w1"], P["b1"], P["w2"], P["b2"],
            P["head_ln_g"], P["head_ln_b"], P["wh"], P["bh"])
    in_specs = [pl.BlockSpec((1, NP2, INPUT_D), lambda b: (b, 0, 0))]
    in_specs += [_const_spec(a) for a in args[1:]]
    out = pl.pallas_call(
        vit_kernel,
        out_shape=jax.ShapeDtypeStruct((B, 1, OUT_D), F32),
        grid=(B,),
        in_specs=in_specs,
        out_specs=pl.BlockSpec((1, 1, OUT_D), lambda b: (b, 0, 0)),
        compiler_params=pltpu.CompilerParams(dimension_semantics=("parallel",)),
    )(*args)
    return out.reshape(B, OUT_D)


# -------------------------- parameter init (deterministic) --------------------
def init_params(key):
    def rnd(k, shape, scale=0.02):
        return scale * jax.random.normal(k, shape, dtype=F32)

    keys = jax.random.split(key, 4 + 6 * N_BLOCKS)
    it = iter(keys)
    P = {
        "wmap": rnd(next(it), (INPUT_D, HIDDEN_D)),
        "bmap": jnp.zeros((1, HIDDEN_D), F32),
        "cls": rnd(next(it), (1, HIDDEN_D), scale=1.0),
        "pos": rnd(next(it), (T, HIDDEN_D), scale=1.0),
        "head_ln_g": jnp.ones((1, HIDDEN_D), F32),
        "head_ln_b": jnp.zeros((1, HIDDEN_D), F32),
        "wh": rnd(next(it), (HIDDEN_D, OUT_D)),
        "bh": jnp.zeros((1, OUT_D), F32),
    }
    ln1g, ln1b, ln2g, ln2b = [], [], [], []
    wqkv, bqkv, wo, bo = [], [], [], []
    w1, b1, w2, b2 = [], [], [], []
    for _ in range(N_BLOCKS):
        wq = rnd(next(it), (HIDDEN_D, HIDDEN_D))
        wk = rnd(next(it), (HIDDEN_D, HIDDEN_D))
        wv = rnd(next(it), (HIDDEN_D, HIDDEN_D))
        wqkv.append(jnp.concatenate([wq, wk, wv], axis=1))        # (D, 3D) fused
        bqkv.append(jnp.zeros((1, 3 * HIDDEN_D), F32))
        wo.append(rnd(next(it), (HIDDEN_D, HIDDEN_D)))
        bo.append(jnp.zeros((1, HIDDEN_D), F32))
        w1.append(rnd(next(it), (HIDDEN_D, FF_D)))
        b1.append(jnp.zeros((1, FF_D), F32))
        w2.append(rnd(next(it), (FF_D, HIDDEN_D)))
        b2.append(jnp.zeros((1, HIDDEN_D), F32))
        ln1g.append(jnp.ones((1, HIDDEN_D), F32))
        ln1b.append(jnp.zeros((1, HIDDEN_D), F32))
        ln2g.append(jnp.ones((1, HIDDEN_D), F32))
        ln2b.append(jnp.zeros((1, HIDDEN_D), F32))
    P.update(
        ln1_g=jnp.stack(ln1g), ln1_b=jnp.stack(ln1b),
        wqkv=jnp.stack(wqkv), bqkv=jnp.stack(bqkv),
        wo=jnp.stack(wo), bo=jnp.stack(bo),
        ln2_g=jnp.stack(ln2g), ln2_b=jnp.stack(ln2b),
        w1=jnp.stack(w1), b1=jnp.stack(b1),
        w2=jnp.stack(w2), b2=jnp.stack(b2),
    )
    return P


# -------------------------- full forward ---------------------------------------
@jax.jit
def vit_forward(images, params):
    patches = patchify(images)                 # (B, NP2, INPUT_D) — pure reshape
    return vit_pallas(patches, params)         # (B, OUT_D)


if __name__ == "__main__":
    key = jax.random.PRNGKey(0)
    k_img, k_par = jax.random.split(key)
    images = jax.random.normal(k_img, (B, C, H_IMG, W_IMG), dtype=F32)
    params = init_params(k_par)

    out = vit_forward(images, params)
    out = jax.block_until_ready(out)
    assert out.shape == (B, OUT_D) and out.dtype == jnp.float32
    assert bool(jnp.all(jnp.isfinite(out)))
    print("KERNEL_OK")
</pallas_src>

<mosaic_0001>
module attributes {stable_mosaic.version = 11 : i64} {
  func.func @vit_kernel(%arg0: i32, %arg1: memref<1x16x64xf32, #tpu.memory_space<vmem>>, %arg2: memref<64x32xf32, #tpu.memory_space<vmem>>, %arg3: memref<1x32xf32, #tpu.memory_space<vmem>>, %arg4: memref<1x32xf32, #tpu.memory_space<vmem>>, %arg5: memref<17x32xf32, #tpu.memory_space<vmem>>, %arg6: memref<2x1x32xf32, #tpu.memory_space<vmem>>, %arg7: memref<2x1x32xf32, #tpu.memory_space<vmem>>, %arg8: memref<2x32x96xf32, #tpu.memory_space<vmem>>, %arg9: memref<2x1x96xf32, #tpu.memory_space<vmem>>, %arg10: memref<2x32x32xf32, #tpu.memory_space<vmem>>, %arg11: memref<2x1x32xf32, #tpu.memory_space<vmem>>, %arg12: memref<2x1x32xf32, #tpu.memory_space<vmem>>, %arg13: memref<2x1x32xf32, #tpu.memory_space<vmem>>, %arg14: memref<2x32x128xf32, #tpu.memory_space<vmem>>, %arg15: memref<2x1x128xf32, #tpu.memory_space<vmem>>, %arg16: memref<2x128x32xf32, #tpu.memory_space<vmem>>, %arg17: memref<2x1x32xf32, #tpu.memory_space<vmem>>, %arg18: memref<1x32xf32, #tpu.memory_space<vmem>>, %arg19: memref<1x32xf32, #tpu.memory_space<vmem>>, %arg20: memref<32x10xf32, #tpu.memory_space<vmem>>, %arg21: memref<1x10xf32, #tpu.memory_space<vmem>>, %arg22: memref<1x1x10xf32, #tpu.memory_space<vmem>>) attributes {dimension_semantics = [#tpu.dimension_semantics<parallel>], iteration_bounds = array<i64: 2>, scalar_prefetch = 0 : i64, scratch_operands = 0 : i64, tpu.core_type = #tpu.core_type<tc>, window_params = [{transform_indices = @transform_0, window_bounds = array<i64: 1, 16, 64>}, {pipeline_mode = #tpu.pipeline_mode<synchronous>, transform_indices = @transform_1, window_bounds = array<i64: 64, 32>}, {pipeline_mode = #tpu.pipeline_mode<synchronous>, transform_indices = @transform_2, window_bounds = array<i64: 1, 32>}, {pipeline_mode = #tpu.pipeline_mode<synchronous>, transform_indices = @transform_3, window_bounds = array<i64: 1, 32>}, {pipeline_mode = #tpu.pipeline_mode<synchronous>, transform_indices = @transform_4, window_bounds = array<i64: 17, 32>}, {pipeline_mode = #tpu.pipeline_mode<synchronous>, transform_indices = @transform_5, window_bounds = array<i64: 2, 1, 32>}, {pipeline_mode = #tpu.pipeline_mode<synchronous>, transform_indices = @transform_6, window_bounds = array<i64: 2, 1, 32>}, {pipeline_mode = #tpu.pipeline_mode<synchronous>, transform_indices = @transform_7, window_bounds = array<i64: 2, 32, 96>}, {pipeline_mode = #tpu.pipeline_mode<synchronous>, transform_indices = @transform_8, window_bounds = array<i64: 2, 1, 96>}, {pipeline_mode = #tpu.pipeline_mode<synchronous>, transform_indices = @transform_9, window_bounds = array<i64: 2, 32, 32>}, {pipeline_mode = #tpu.pipeline_mode<synchronous>, transform_indices = @transform_10, window_bounds = array<i64: 2, 1, 32>}, {pipeline_mode = #tpu.pipeline_mode<synchronous>, transform_indices = @transform_11, window_bounds = array<i64: 2, 1, 32>}, {pipeline_mode = #tpu.pipeline_mode<synchronous>, transform_indices = @transform_12, window_bounds = array<i64: 2, 1, 32>}, {pipeline_mode = #tpu.pipeline_mode<synchronous>, transform_indices = @transform_13, window_bounds = array<i64: 2, 32, 128>}, {pipeline_mode = #tpu.pipeline_mode<synchronous>, transform_indices = @transform_14, window_bounds = array<i64: 2, 1, 128>}, {pipeline_mode = #tpu.pipeline_mode<synchronous>, transform_indices = @transform_15, window_bounds = array<i64: 2, 128, 32>}, {pipeline_mode = #tpu.pipeline_mode<synchronous>, transform_indices = @transform_16, window_bounds = array<i64: 2, 1, 32>}, {pipeline_mode = #tpu.pipeline_mode<synchronous>, transform_indices = @transform_17, window_bounds = array<i64: 1, 32>}, {pipeline_mode = #tpu.pipeline_mode<synchronous>, transform_indices = @transform_18, window_bounds = array<i64: 1, 32>}, {pipeline_mode = #tpu.pipeline_mode<synchronous>, transform_indices = @transform_19, window_bounds = array<i64: 32, 10>}, {pipeline_mode = #tpu.pipeline_mode<synchronous>, transform_indices = @transform_20, window_bounds = array<i64: 1, 10>}, {transform_indices = @transform_21, window_bounds = array<i64: 1, 1, 10>}]} {
    %c0 = arith.constant 0 : index
    %c0_0 = arith.constant 0 : index
    %c0_1 = arith.constant 0 : index
    %0 = vector.load %arg1[%c0, %c0_0, %c0_1] : memref<1x16x64xf32, #tpu.memory_space<vmem>>, vector<1x16x64xf32>
    %1 = vector.shape_cast %0 : vector<1x16x64xf32> to vector<16x64xf32>
    %c0_2 = arith.constant 0 : index
    %c0_3 = arith.constant 0 : index
    %2 = vector.load %arg2[%c0_2, %c0_3] : memref<64x32xf32, #tpu.memory_space<vmem>>, vector<64x32xf32>
    %cst = arith.constant dense<0.000000e+00> : vector<16x32xf32>
    %3 = tpu.matmul %1, %2, %cst {dimension_numbers = #tpu.dot_dimension_numbers<[1], [0], [0], [1], [0, 0, 1, 1], [], []>} : vector<16x64xf32>, vector<64x32xf32>, vector<16x32xf32> -> vector<16x32xf32>
    %c0_4 = arith.constant 0 : index
    %c0_5 = arith.constant 0 : index
    %4 = vector.load %arg3[%c0_4, %c0_5] : memref<1x32xf32, #tpu.memory_space<vmem>>, vector<1x32xf32>
    %5 = vector.broadcast %4 : vector<1x32xf32> to vector<16x32xf32>
    %6 = arith.addf %3, %5 : vector<16x32xf32>
    %c0_6 = arith.constant 0 : index
    %c0_7 = arith.constant 0 : index
    %7 = vector.load %arg4[%c0_6, %c0_7] : memref<1x32xf32, #tpu.memory_space<vmem>>, vector<1x32xf32>
    %8 = tpu.concatenate %7, %6 in 0 : vector<1x32xf32>, vector<16x32xf32> -> vector<17x32xf32>
    %c0_8 = arith.constant 0 : index
    %c0_9 = arith.constant 0 : index
    %9 = vector.load %arg5[%c0_8, %c0_9] : memref<17x32xf32, #tpu.memory_space<vmem>>, vector<17x32xf32>
    %10 = arith.addf %8, %9 : vector<17x32xf32>
    %c0_10 = arith.constant 0 : index
    %c0_11 = arith.constant 0 : index
    %c0_12 = arith.constant 0 : index
    %11 = vector.load %arg6[%c0_10, %c0_11, %c0_12] : memref<2x1x32xf32, #tpu.memory_space<vmem>>, vector<1x1x32xf32>
    %12 = vector.shape_cast %11 : vector<1x1x32xf32> to vector<1x32xf32>
    %c0_13 = arith.constant 0 : index
    %c0_14 = arith.constant 0 : index
    %c0_15 = arith.constant 0 : index
    %13 = vector.load %arg7[%c0_13, %c0_14, %c0_15] : memref<2x1x32xf32, #tpu.memory_space<vmem>>, vector<1x1x32xf32>
    %14 = vector.shape_cast %13 : vector<1x1x32xf32> to vector<1x32xf32>
    %cst_16 = arith.constant dense<0.000000e+00> : vector<17xf32>
    %15 = vector.multi_reduction <add>, %10, %cst_16 [1] : vector<17x32xf32> to vector<17xf32>
    %16 = vector.shape_cast %15 : vector<17xf32> to vector<17x1xf32>
    %cst_17 = arith.constant 3.200000e+01 : f32
    %17 = vector.broadcast %cst_17 : f32 to vector<17x1xf32>
    %18 = arith.divf %16, %17 : vector<17x1xf32>
    %19 = vector.broadcast %18 : vector<17x1xf32> to vector<17x32xf32>
    %20 = arith.subf %10, %19 : vector<17x32xf32>
    %21 = arith.mulf %20, %20 : vector<17x32xf32>
    %cst_18 = arith.constant dense<0.000000e+00> : vector<17xf32>
    %22 = vector.multi_reduction <add>, %21, %cst_18 [1] : vector<17x32xf32> to vector<17xf32>
    %23 = vector.shape_cast %22 : vector<17xf32> to vector<17x1xf32>
    %cst_19 = arith.constant 3.200000e+01 : f32
    %24 = vector.broadcast %cst_19 : f32 to vector<17x1xf32>
    %25 = arith.divf %23, %24 : vector<17x1xf32>
    %26 = vector.broadcast %18 : vector<17x1xf32> to vector<17x32xf32>
    %27 = arith.subf %10, %26 : vector<17x32xf32>
    %cst_20 = arith.constant 9.99999974E-6 : f32
    %28 = vector.broadcast %cst_20 : f32 to vector<17x1xf32>
    %29 = arith.addf %25, %28 : vector<17x1xf32>
    %30 = math.rsqrt %29 : vector<17x1xf32>
    %31 = vector.broadcast %30 : vector<17x1xf32> to vector<17x32xf32>
    %32 = arith.mulf %27, %31 : vector<17x32xf32>
    %33 = vector.broadcast %12 : vector<1x32xf32> to vector<17x32xf32>
    %34 = arith.mulf %32, %33 : vector<17x32xf32>
    %35 = vector.broadcast %14 : vector<1x32xf32> to vector<17x32xf32>
    %36 = arith.addf %34, %35 : vector<17x32xf32>
    %c0_21 = arith.constant 0 : index
    %c0_22 = arith.constant 0 : index
    %c0_23 = arith.constant 0 : index
    %37 = vector.load %arg8[%c0_21, %c0_22, %c0_23] : memref<2x32x96xf32, #tpu.memory_space<vmem>>, vector<1x32x96xf32>
    %38 = vector.shape_cast %37 : vector<1x32x96xf32> to vector<32x96xf32>
    %cst_24 = arith.constant dense<0.000000e+00> : vector<17x96xf32>
    %39 = tpu.matmul %36, %38, %cst_24 {dimension_numbers = #tpu.dot_dimension_numbers<[1], [0], [0], [1], [0, 0, 1, 1], [], []>} : vector<17x32xf32>, vector<32x96xf32>, vector<17x96xf32> -> vector<17x96xf32>
    %c0_25 = arith.constant 0 : index
    %c0_26 = arith.constant 0 : index
    %c0_27 = arith.constant 0 : index
    %40 = vector.load %arg9[%c0_25, %c0_26, %c0_27] : memref<2x1x96xf32, #tpu.memory_space<vmem>>, vector<1x1x96xf32>
    %41 = vector.shape_cast %40 : vector<1x1x96xf32> to vector<1x96xf32>
    %42 = vector.broadcast %41 : vector<1x96xf32> to vector<17x96xf32>
    %43 = arith.addf %39, %42 : vector<17x96xf32>
    %c0_28 = arith.constant 0 : index
    %c0_29 = arith.constant 0 : index
    %c0_30 = arith.constant 0 : index
    %44 = vector.load %arg10[%c0_28, %c0_29, %c0_30] : memref<2x32x32xf32, #tpu.memory_space<vmem>>, vector<1x32x32xf32>
    %45 = vector.shape_cast %44 : vector<1x32x32xf32> to vector<32x32xf32>
    %46 = vector.extract_strided_slice %43 {offsets = [0, 0], sizes = [17, 16], strides = [1, 1]} : vector<17x96xf32> to vector<17x16xf32>
    %47 = vector.extract_strided_slice %43 {offsets = [0, 32], sizes = [17, 16], strides = [1, 1]} : vector<17x96xf32> to vector<17x16xf32>
    %48 = vector.extract_strided_slice %43 {offsets = [0, 64], sizes = [17, 16], strides = [1, 1]} : vector<17x96xf32> to vector<17x16xf32>
    %cst_31 = arith.constant dense<0.000000e+00> : vector<17x17xf32>
    %49 = tpu.matmul %46, %47, %cst_31 {dimension_numbers = #tpu.dot_dimension_numbers<[1], [1], [0], [0], [0, 0, 1, 0], [], []>} : vector<17x16xf32>, vector<17x16xf32>, vector<17x17xf32> -> vector<17x17xf32>
    %cst_32 = arith.constant dense<0xFF800000> : vector<17xf32>
    %50 = vector.multi_reduction <maximumf>, %49, %cst_32 [1] : vector<17x17xf32> to vector<17xf32>
    %51 = vector.shape_cast %50 : vector<17xf32> to vector<17x1xf32>
    %52 = vector.broadcast %51 : vector<17x1xf32> to vector<17x17xf32>
    %53 = arith.subf %49, %52 : vector<17x17xf32>
    %54 = math.exp %53 : vector<17x17xf32>
    %cst_33 = arith.constant dense<0.000000e+00> : vector<17xf32>
    %55 = vector.multi_reduction <add>, %54, %cst_33 [1] : vector<17x17xf32> to vector<17xf32>
    %56 = vector.shape_cast %55 : vector<17xf32> to vector<17x1xf32>
    %57 = tpu.reciprocal %56 {approx = true} : vector<17x1xf32> -> vector<17x1xf32>
    %58 = vector.broadcast %57 : vector<17x1xf32> to vector<17x17xf32>
    %59 = arith.mulf %54, %58 : vector<17x17xf32>
    %cst_34 = arith.constant 2.500000e-01 : f32
    %60 = vector.broadcast %cst_34 : f32 to vector<17x16xf32>
    %61 = arith.mulf %48, %60 : vector<17x16xf32>
    %cst_35 = arith.constant dense<0.000000e+00> : vector<17x16xf32>
    %62 = tpu.matmul %59, %61, %cst_35 {dimension_numbers = #tpu.dot_dimension_numbers<[1], [0], [0], [1], [0, 0, 1, 1], [], []>} : vector<17x17xf32>, vector<17x16xf32>, vector<17x16xf32> -> vector<17x16xf32>
    %63 = vector.extract_strided_slice %45 {offsets = [0, 0], sizes = [16, 32], strides = [1, 1]} : vector<32x32xf32> to vector<16x32xf32>
    %cst_36 = arith.constant dense<0.000000e+00> : vector<17x32xf32>
    %64 = tpu.matmul %62, %63, %cst_36 {dimension_numbers = #tpu.dot_dimension_numbers<[1], [0], [0], [1], [0, 0, 1, 1], [], []>} : vector<17x16xf32>, vector<16x32xf32>, vector<17x32xf32> -> vector<17x32xf32>
    %65 = vector.extract_strided_slice %43 {offsets = [0, 16], sizes = [17, 16], strides = [1, 1]} : vector<17x96xf32> to vector<17x16xf32>
    %66 = vector.extract_strided_slice %43 {offsets = [0, 48], sizes = [17, 16], strides = [1, 1]} : vector<17x96xf32> to vector<17x16xf32>
    %67 = vector.extract_strided_slice %43 {offsets = [0, 80], sizes = [17, 16], strides = [1, 1]} : vector<17x96xf32> to vector<17x16xf32>
    %cst_37 = arith.constant dense<0.000000e+00> : vector<17x17xf32>
    %68 = tpu.matmul %65, %66, %cst_37 {dimension_numbers = #tpu.dot_dimension_numbers<[1], [1], [0], [0], [0, 0, 1, 0], [], []>} : vector<17x16xf32>, vector<17x16xf32>, vector<17x17xf32> -> vector<17x17xf32>
    %cst_38 = arith.constant dense<0xFF800000> : vector<17xf32>
    %69 = vector.multi_reduction <maximumf>, %68, %cst_38 [1] : vector<17x17xf32> to vector<17xf32>
    %70 = vector.shape_cast %69 : vector<17xf32> to vector<17x1xf32>
    %71 = vector.broadcast %70 : vector<17x1xf32> to vector<17x17xf32>
    %72 = arith.subf %68, %71 : vector<17x17xf32>
    %73 = math.exp %72 : vector<17x17xf32>
    %cst_39 = arith.constant dense<0.000000e+00> : vector<17xf32>
    %74 = vector.multi_reduction <add>, %73, %cst_39 [1] : vector<17x17xf32> to vector<17xf32>
    %75 = vector.shape_cast %74 : vector<17xf32> to vector<17x1xf32>
    %76 = tpu.reciprocal %75 {approx = true} : vector<17x1xf32> -> vector<17x1xf32>
    %77 = vector.broadcast %76 : vector<17x1xf32> to vector<17x17xf32>
    %78 = arith.mulf %73, %77 : vector<17x17xf32>
    %cst_40 = arith.constant 2.500000e-01 : f32
    %79 = vector.broadcast %cst_40 : f32 to vector<17x16xf32>
    %80 = arith.mulf %67, %79 : vector<17x16xf32>
    %cst_41 = arith.constant dense<0.000000e+00> : vector<17x16xf32>
    %81 = tpu.matmul %78, %80, %cst_41 {dimension_numbers = #tpu.dot_dimension_numbers<[1], [0], [0], [1], [0, 0, 1, 1], [], []>} : vector<17x17xf32>, vector<17x16xf32>, vector<17x16xf32> -> vector<17x16xf32>
    %82 = vector.extract_strided_slice %45 {offsets = [16, 0], sizes = [16, 32], strides = [1, 1]} : vector<32x32xf32> to vector<16x32xf32>
    %cst_42 = arith.constant dense<0.000000e+00> : vector<17x32xf32>
    %83 = tpu.matmul %81, %82, %cst_42 {dimension_numbers = #tpu.dot_dimension_numbers<[1], [0], [0], [1], [0, 0, 1, 1], [], []>} : vector<17x16xf32>, vector<16x32xf32>, vector<17x32xf32> -> vector<17x32xf32>
    %84 = arith.addf %64, %83 : vector<17x32xf32>
    %85 = arith.addf %10, %84 : vector<17x32xf32>
    %c0_43 = arith.constant 0 : index
    %c0_44 = arith.constant 0 : index
    %c0_45 = arith.constant 0 : index
    %86 = vector.load %arg11[%c0_43, %c0_44, %c0_45] : memref<2x1x32xf32, #tpu.memory_space<vmem>>, vector<1x1x32xf32>
    %87 = vector.shape_cast %86 : vector<1x1x32xf32> to vector<1x32xf32>
    %88 = vector.broadcast %87 : vector<1x32xf32> to vector<17x32xf32>
    %89 = arith.addf %85, %88 : vector<17x32xf32>
    %c0_46 = arith.constant 0 : index
    %c0_47 = arith.constant 0 : index
    %c0_48 = arith.constant 0 : index
    %90 = vector.load %arg12[%c0_46, %c0_47, %c0_48] : memref<2x1x32xf32, #tpu.memory_space<vmem>>, vector<1x1x32xf32>
    %91 = vector.shape_cast %90 : vector<1x1x32xf32> to vector<1x32xf32>
    %c0_49 = arith.constant 0 : index
    %c0_50 = arith.constant 0 : index
    %c0_51 = arith.constant 0 : index
    %92 = vector.load %arg13[%c0_49, %c0_50, %c0_51] : memref<2x1x32xf32, #tpu.memory_space<vmem>>, vector<1x1x32xf32>
    %93 = vector.shape_cast %92 : vector<1x1x32xf32> to vector<1x32xf32>
    %cst_52 = arith.constant dense<0.000000e+00> : vector<17xf32>
    %94 = vector.multi_reduction <add>, %89, %cst_52 [1] : vector<17x32xf32> to vector<17xf32>
    %95 = vector.shape_cast %94 : vector<17xf32> to vector<17x1xf32>
    %cst_53 = arith.constant 3.200000e+01 : f32
    %96 = vector.broadcast %cst_53 : f32 to vector<17x1xf32>
    %97 = arith.divf %95, %96 : vector<17x1xf32>
    %98 = vector.broadcast %97 : vector<17x1xf32> to vector<17x32xf32>
    %99 = arith.subf %89, %98 : vector<17x32xf32>
    %100 = arith.mulf %99, %99 : vector<17x32xf32>
    %cst_54 = arith.constant dense<0.000000e+00> : vector<17xf32>
    %101 = vector.multi_reduction <add>, %100, %cst_54 [1] : vector<17x32xf32> to vector<17xf32>
    %102 = vector.shape_cast %101 : vector<17xf32> to vector<17x1xf32>
    %cst_55 = arith.constant 3.200000e+01 : f32
    %103 = vector.broadcast %cst_55 : f32 to vector<17x1xf32>
    %104 = arith.divf %102, %103 : vector<17x1xf32>
    %105 = vector.broadcast %97 : vector<17x1xf32> to vector<17x32xf32>
    %106 = arith.subf %89, %105 : vector<17x32xf32>
    %cst_56 = arith.constant 9.99999974E-6 : f32
    %107 = vector.broadcast %cst_56 : f32 to vector<17x1xf32>
    %108 = arith.addf %104, %107 : vector<17x1xf32>
    %109 = math.rsqrt %108 : vector<17x1xf32>
    %110 = vector.broadcast %109 : vector<17x1xf32> to vector<17x32xf32>
    %111 = arith.mulf %106, %110 : vector<17x32xf32>
    %112 = vector.broadcast %91 : vector<1x32xf32> to vector<17x32xf32>
    %113 = arith.mulf %111, %112 : vector<17x32xf32>
    %114 = vector.broadcast %93 : vector<1x32xf32> to vector<17x32xf32>
    %115 = arith.addf %113, %114 : vector<17x32xf32>
    %c0_57 = arith.constant 0 : index
    %c0_58 = arith.constant 0 : index
    %c0_59 = arith.constant 0 : index
    %116 = vector.load %arg14[%c0_57, %c0_58, %c0_59] : memref<2x32x128xf32, #tpu.memory_space<vmem>>, vector<1x32x128xf32>
    %117 = vector.shape_cast %116 : vector<1x32x128xf32> to vector<32x128xf32>
    %cst_60 = arith.constant dense<0.000000e+00> : vector<17x128xf32>
    %118 = tpu.matmul %115, %117, %cst_60 {dimension_numbers = #tpu.dot_dimension_numbers<[1], [0], [0], [1], [0, 0, 1, 1], [], []>} : vector<17x32xf32>, vector<32x128xf32>, vector<17x128xf32> -> vector<17x128xf32>
    %c0_61 = arith.constant 0 : index
    %c0_62 = arith.constant 0 : index
    %c0_63 = arith.constant 0 : index
    %119 = vector.load %arg15[%c0_61, %c0_62, %c0_63] : memref<2x1x128xf32, #tpu.memory_space<vmem>>, vector<1x1x128xf32>
    %120 = vector.shape_cast %119 : vector<1x1x128xf32> to vector<1x128xf32>
    %121 = vector.broadcast %120 : vector<1x128xf32> to vector<17x128xf32>
    %122 = arith.addf %118, %121 : vector<17x128xf32>
    %cst_64 = arith.constant 5.000000e-01 : f32
    %123 = vector.broadcast %cst_64 : f32 to vector<17x128xf32>
    %124 = arith.mulf %123, %122 : vector<17x128xf32>
    %cst_65 = arith.constant 1.41421354 : f32
    %125 = vector.broadcast %cst_65 : f32 to vector<17x128xf32>
    %126 = arith.divf %122, %125 : vector<17x128xf32>
    %127 = math.erf %126 : vector<17x128xf32>
    %cst_66 = arith.constant 1.000000e+00 : f32
    %128 = vector.broadcast %cst_66 : f32 to vector<17x128xf32>
    %129 = arith.addf %128, %127 : vector<17x128xf32>
    %130 = arith.mulf %124, %129 : vector<17x128xf32>
    %c0_67 = arith.constant 0 : index
    %c0_68 = arith.constant 0 : index
    %c0_69 = arith.constant 0 : index
    %131 = vector.load %arg16[%c0_67, %c0_68, %c0_69] : memref<2x128x32xf32, #tpu.memory_space<vmem>>, vector<1x128x32xf32>
    %132 = vector.shape_cast %131 : vector<1x128x32xf32> to vector<128x32xf32>
    %cst_70 = arith.constant dense<0.000000e+00> : vector<17x32xf32>
    %133 = tpu.matmul %130, %132, %cst_70 {dimension_numbers = #tpu.dot_dimension_numbers<[1], [0], [0], [1], [0, 0, 1, 1], [], []>} : vector<17x128xf32>, vector<128x32xf32>, vector<17x32xf32> -> vector<17x32xf32>
    %134 = arith.addf %89, %133 : vector<17x32xf32>
    %c0_71 = arith.constant 0 : index
    %c0_72 = arith.constant 0 : index
    %c0_73 = arith.constant 0 : index
    %135 = vector.load %arg17[%c0_71, %c0_72, %c0_73] : memref<2x1x32xf32, #tpu.memory_space<vmem>>, vector<1x1x32xf32>
    %136 = vector.shape_cast %135 : vector<1x1x32xf32> to vector<1x32xf32>
    %137 = vector.broadcast %136 : vector<1x32xf32> to vector<17x32xf32>
    %138 = arith.addf %134, %137 : vector<17x32xf32>
    %c1 = arith.constant 1 : index
    %c0_74 = arith.constant 0 : index
    %c0_75 = arith.constant 0 : index
    %139 = vector.load %arg6[%c1, %c0_74, %c0_75] : memref<2x1x32xf32, #tpu.memory_space<vmem>>, vector<1x1x32xf32>
    %140 = vector.shape_cast %139 : vector<1x1x32xf32> to vector<1x32xf32>
    %c1_76 = arith.constant 1 : index
    %c0_77 = arith.constant 0 : index
    %c0_78 = arith.constant 0 : index
    %141 = vector.load %arg7[%c1_76, %c0_77, %c0_78] : memref<2x1x32xf32, #tpu.memory_space<vmem>>, vector<1x1x32xf32>
    %142 = vector.shape_cast %141 : vector<1x1x32xf32> to vector<1x32xf32>
    %cst_79 = arith.constant dense<0.000000e+00> : vector<17xf32>
    %143 = vector.multi_reduction <add>, %138, %cst_79 [1] : vector<17x32xf32> to vector<17xf32>
    %144 = vector.shape_cast %143 : vector<17xf32> to vector<17x1xf32>
    %cst_80 = arith.constant 3.200000e+01 : f32
    %145 = vector.broadcast %cst_80 : f32 to vector<17x1xf32>
    %146 = arith.divf %144, %145 : vector<17x1xf32>
    %147 = vector.broadcast %146 : vector<17x1xf32> to vector<17x32xf32>
    %148 = arith.subf %138, %147 : vector<17x32xf32>
    %149 = arith.mulf %148, %148 : vector<17x32xf32>
    %cst_81 = arith.constant dense<0.000000e+00> : vector<17xf32>
    %150 = vector.multi_reduction <add>, %149, %cst_81 [1] : vector<17x32xf32> to vector<17xf32>
    %151 = vector.shape_cast %150 : vector<17xf32> to vector<17x1xf32>
    %cst_82 = arith.constant 3.200000e+01 : f32
    %152 = vector.broadcast %cst_82 : f32 to vector<17x1xf32>
    %153 = arith.divf %151, %152 : vector<17x1xf32>
    %154 = vector.broadcast %146 : vector<17x1xf32> to vector<17x32xf32>
    %155 = arith.subf %138, %154 : vector<17x32xf32>
    %cst_83 = arith.constant 9.99999974E-6 : f32
    %156 = vector.broadcast %cst_83 : f32 to vector<17x1xf32>
    %157 = arith.addf %153, %156 : vector<17x1xf32>
    %158 = math.rsqrt %157 : vector<17x1xf32>
    %159 = vector.broadcast %158 : vector<17x1xf32> to vector<17x32xf32>
    %160 = arith.mulf %155, %159 : vector<17x32xf32>
    %161 = vector.broadcast %140 : vector<1x32xf32> to vector<17x32xf32>
    %162 = arith.mulf %160, %161 : vector<17x32xf32>
    %163 = vector.broadcast %142 : vector<1x32xf32> to vector<17x32xf32>
    %164 = arith.addf %162, %163 : vector<17x32xf32>
    %c1_84 = arith.constant 1 : index
    %c0_85 = arith.constant 0 : index
    %c0_86 = arith.constant 0 : index
    %165 = vector.load %arg8[%c1_84, %c0_85, %c0_86] : memref<2x32x96xf32, #tpu.memory_space<vmem>>, vector<1x32x96xf32>
    %166 = vector.shape_cast %165 : vector<1x32x96xf32> to vector<32x96xf32>
    %cst_87 = arith.constant dense<0.000000e+00> : vector<17x96xf32>
    %167 = tpu.matmul %164, %166, %cst_87 {dimension_numbers = #tpu.dot_dimension_numbers<[1], [0], [0], [1], [0, 0, 1, 1], [], []>} : vector<17x32xf32>, vector<32x96xf32>, vector<17x96xf32> -> vector<17x96xf32>
    %c1_88 = arith.constant 1 : index
    %c0_89 = arith.constant 0 : index
    %c0_90 = arith.constant 0 : index
    %168 = vector.load %arg9[%c1_88, %c0_89, %c0_90] : memref<2x1x96xf32, #tpu.memory_space<vmem>>, vector<1x1x96xf32>
    %169 = vector.shape_cast %168 : vector<1x1x96xf32> to vector<1x96xf32>
    %170 = vector.broadcast %169 : vector<1x96xf32> to vector<17x96xf32>
    %171 = arith.addf %167, %170 : vector<17x96xf32>
    %c1_91 = arith.constant 1 : index
    %c0_92 = arith.constant 0 : index
    %c0_93 = arith.constant 0 : index
    %172 = vector.load %arg10[%c1_91, %c0_92, %c0_93] : memref<2x32x32xf32, #tpu.memory_space<vmem>>, vector<1x32x32xf32>
    %173 = vector.shape_cast %172 : vector<1x32x32xf32> to vector<32x32xf32>
    %174 = vector.extract_strided_slice %171 {offsets = [0, 0], sizes = [17, 16], strides = [1, 1]} : vector<17x96xf32> to vector<17x16xf32>
    %175 = vector.extract_strided_slice %171 {offsets = [0, 32], sizes = [17, 16], strides = [1, 1]} : vector<17x96xf32> to vector<17x16xf32>
    %176 = vector.extract_strided_slice %171 {offsets = [0, 64], sizes = [17, 16], strides = [1, 1]} : vector<17x96xf32> to vector<17x16xf32>
    %cst_94 = arith.constant dense<0.000000e+00> : vector<17x17xf32>
    %177 = tpu.matmul %174, %175, %cst_94 {dimension_numbers = #tpu.dot_dimension_numbers<[1], [1], [0], [0], [0, 0, 1, 0], [], []>} : vector<17x16xf32>, vector<17x16xf32>, vector<17x17xf32> -> vector<17x17xf32>
    %cst_95 = arith.constant dense<0xFF800000> : vector<17xf32>
    %178 = vector.multi_reduction <maximumf>, %177, %cst_95 [1] : vector<17x17xf32> to vector<17xf32>
    %179 = vector.shape_cast %178 : vector<17xf32> to vector<17x1xf32>
    %180 = vector.broadcast %179 : vector<17x1xf32> to vector<17x17xf32>
    %181 = arith.subf %177, %180 : vector<17x17xf32>
    %182 = math.exp %181 : vector<17x17xf32>
    %cst_96 = arith.constant dense<0.000000e+00> : vector<17xf32>
    %183 = vector.multi_reduction <add>, %182, %cst_96 [1] : vector<17x17xf32> to vector<17xf32>
    %184 = vector.shape_cast %183 : vector<17xf32> to vector<17x1xf32>
    %185 = tpu.reciprocal %184 {approx = true} : vector<17x1xf32> -> vector<17x1xf32>
    %186 = vector.broadcast %185 : vector<17x1xf32> to vector<17x17xf32>
    %187 = arith.mulf %182, %186 : vector<17x17xf32>
    %cst_97 = arith.constant 2.500000e-01 : f32
    %188 = vector.broadcast %cst_97 : f32 to vector<17x16xf32>
    %189 = arith.mulf %176, %188 : vector<17x16xf32>
    %cst_98 = arith.constant dense<0.000000e+00> : vector<17x16xf32>
    %190 = tpu.matmul %187, %189, %cst_98 {dimension_numbers = #tpu.dot_dimension_numbers<[1], [0], [0], [1], [0, 0, 1, 1], [], []>} : vector<17x17xf32>, vector<17x16xf32>, vector<17x16xf32> -> vector<17x16xf32>
    %191 = vector.extract_strided_slice %173 {offsets = [0, 0], sizes = [16, 32], strides = [1, 1]} : vector<32x32xf32> to vector<16x32xf32>
    %cst_99 = arith.constant dense<0.000000e+00> : vector<17x32xf32>
    %192 = tpu.matmul %190, %191, %cst_99 {dimension_numbers = #tpu.dot_dimension_numbers<[1], [0], [0], [1], [0, 0, 1, 1], [], []>} : vector<17x16xf32>, vector<16x32xf32>, vector<17x32xf32> -> vector<17x32xf32>
    %193 = vector.extract_strided_slice %171 {offsets = [0, 16], sizes = [17, 16], strides = [1, 1]} : vector<17x96xf32> to vector<17x16xf32>
    %194 = vector.extract_strided_slice %171 {offsets = [0, 48], sizes = [17, 16], strides = [1, 1]} : vector<17x96xf32> to vector<17x16xf32>
    %195 = vector.extract_strided_slice %171 {offsets = [0, 80], sizes = [17, 16], strides = [1, 1]} : vector<17x96xf32> to vector<17x16xf32>
    %cst_100 = arith.constant dense<0.000000e+00> : vector<17x17xf32>
    %196 = tpu.matmul %193, %194, %cst_100 {dimension_numbers = #tpu.dot_dimension_numbers<[1], [1], [0], [0], [0, 0, 1, 0], [], []>} : vector<17x16xf32>, vector<17x16xf32>, vector<17x17xf32> -> vector<17x17xf32>
    %cst_101 = arith.constant dense<0xFF800000> : vector<17xf32>
    %197 = vector.multi_reduction <maximumf>, %196, %cst_101 [1] : vector<17x17xf32> to vector<17xf32>
    %198 = vector.shape_cast %197 : vector<17xf32> to vector<17x1xf32>
    %199 = vector.broadcast %198 : vector<17x1xf32> to vector<17x17xf32>
    %200 = arith.subf %196, %199 : vector<17x17xf32>
    %201 = math.exp %200 : vector<17x17xf32>
    %cst_102 = arith.constant dense<0.000000e+00> : vector<17xf32>
    %202 = vector.multi_reduction <add>, %201, %cst_102 [1] : vector<17x17xf32> to vector<17xf32>
    %203 = vector.shape_cast %202 : vector<17xf32> to vector<17x1xf32>
    %204 = tpu.reciprocal %203 {approx = true} : vector<17x1xf32> -> vector<17x1xf32>
    %205 = vector.broadcast %204 : vector<17x1xf32> to vector<17x17xf32>
    %206 = arith.mulf %201, %205 : vector<17x17xf32>
    %cst_103 = arith.constant 2.500000e-01 : f32
    %207 = vector.broadcast %cst_103 : f32 to vector<17x16xf32>
    %208 = arith.mulf %195, %207 : vector<17x16xf32>
    %cst_104 = arith.constant dense<0.000000e+00> : vector<17x16xf32>
    %209 = tpu.matmul %206, %208, %cst_104 {dimension_numbers = #tpu.dot_dimension_numbers<[1], [0], [0], [1], [0, 0, 1, 1], [], []>} : vector<17x17xf32>, vector<17x16xf32>, vector<17x16xf32> -> vector<17x16xf32>
    %210 = vector.extract_strided_slice %173 {offsets = [16, 0], sizes = [16, 32], strides = [1, 1]} : vector<32x32xf32> to vector<16x32xf32>
    %cst_105 = arith.constant dense<0.000000e+00> : vector<17x32xf32>
    %211 = tpu.matmul %209, %210, %cst_105 {dimension_numbers = #tpu.dot_dimension_numbers<[1], [0], [0], [1], [0, 0, 1, 1], [], []>} : vector<17x16xf32>, vector<16x32xf32>, vector<17x32xf32> -> vector<17x32xf32>
    %212 = arith.addf %192, %211 : vector<17x32xf32>
    %213 = arith.addf %138, %212 : vector<17x32xf32>
    %c1_106 = arith.constant 1 : index
    %c0_107 = arith.constant 0 : index
    %c0_108 = arith.constant 0 : index
    %214 = vector.load %arg11[%c1_106, %c0_107, %c0_108] : memref<2x1x32xf32, #tpu.memory_space<vmem>>, vector<1x1x32xf32>
    %215 = vector.shape_cast %214 : vector<1x1x32xf32> to vector<1x32xf32>
    %216 = vector.broadcast %215 : vector<1x32xf32> to vector<17x32xf32>
    %217 = arith.addf %213, %216 : vector<17x32xf32>
    %c1_109 = arith.constant 1 : index
    %c0_110 = arith.constant 0 : index
    %c0_111 = arith.constant 0 : index
    %218 = vector.load %arg12[%c1_109, %c0_110, %c0_111] : memref<2x1x32xf32, #tpu.memory_space<vmem>>, vector<1x1x32xf32>
    %219 = vector.shape_cast %218 : vector<1x1x32xf32> to vector<1x32xf32>
    %c1_112 = arith.constant 1 : index
    %c0_113 = arith.constant 0 : index
    %c0_114 = arith.constant 0 : index
    %220 = vector.load %arg13[%c1_112, %c0_113, %c0_114] : memref<2x1x32xf32, #tpu.memory_space<vmem>>, vector<1x1x32xf32>
    %221 = vector.shape_cast %220 : vector<1x1x32xf32> to vector<1x32xf32>
    %cst_115 = arith.constant dense<0.000000e+00> : vector<17xf32>
    %222 = vector.multi_reduction <add>, %217, %cst_115 [1] : vector<17x32xf32> to vector<17xf32>
    %223 = vector.shape_cast %222 : vector<17xf32> to vector<17x1xf32>
    %cst_116 = arith.constant 3.200000e+01 : f32
    %224 = vector.broadcast %cst_116 : f32 to vector<17x1xf32>
    %225 = arith.divf %223, %224 : vector<17x1xf32>
    %226 = vector.broadcast %225 : vector<17x1xf32> to vector<17x32xf32>
    %227 = arith.subf %217, %226 : vector<17x32xf32>
    %228 = arith.mulf %227, %227 : vector<17x32xf32>
    %cst_117 = arith.constant dense<0.000000e+00> : vector<17xf32>
    %229 = vector.multi_reduction <add>, %228, %cst_117 [1] : vector<17x32xf32> to vector<17xf32>
    %230 = vector.shape_cast %229 : vector<17xf32> to vector<17x1xf32>
    %cst_118 = arith.constant 3.200000e+01 : f32
    %231 = vector.broadcast %cst_118 : f32 to vector<17x1xf32>
    %232 = arith.divf %230, %231 : vector<17x1xf32>
    %233 = vector.broadcast %225 : vector<17x1xf32> to vector<17x32xf32>
    %234 = arith.subf %217, %233 : vector<17x32xf32>
    %cst_119 = arith.constant 9.99999974E-6 : f32
    %235 = vector.broadcast %cst_119 : f32 to vector<17x1xf32>
    %236 = arith.addf %232, %235 : vector<17x1xf32>
    %237 = math.rsqrt %236 : vector<17x1xf32>
    %238 = vector.broadcast %237 : vector<17x1xf32> to vector<17x32xf32>
    %239 = arith.mulf %234, %238 : vector<17x32xf32>
    %240 = vector.broadcast %219 : vector<1x32xf32> to vector<17x32xf32>
    %241 = arith.mulf %239, %240 : vector<17x32xf32>
    %242 = vector.broadcast %221 : vector<1x32xf32> to vector<17x32xf32>
    %243 = arith.addf %241, %242 : vector<17x32xf32>
    %c1_120 = arith.constant 1 : index
    %c0_121 = arith.constant 0 : index
    %c0_122 = arith.constant 0 : index
    %244 = vector.load %arg14[%c1_120, %c0_121, %c0_122] : memref<2x32x128xf32, #tpu.memory_space<vmem>>, vector<1x32x128xf32>
    %245 = vector.shape_cast %244 : vector<1x32x128xf32> to vector<32x128xf32>
    %cst_123 = arith.constant dense<0.000000e+00> : vector<17x128xf32>
    %246 = tpu.matmul %243, %245, %cst_123 {dimension_numbers = #tpu.dot_dimension_numbers<[1], [0], [0], [1], [0, 0, 1, 1], [], []>} : vector<17x32xf32>, vector<32x128xf32>, vector<17x128xf32> -> vector<17x128xf32>
    %c1_124 = arith.constant 1 : index
    %c0_125 = arith.constant 0 : index
    %c0_126 = arith.constant 0 : index
    %247 = vector.load %arg15[%c1_124, %c0_125, %c0_126] : memref<2x1x128xf32, #tpu.memory_space<vmem>>, vector<1x1x128xf32>
    %248 = vector.shape_cast %247 : vector<1x1x128xf32> to vector<1x128xf32>
    %249 = vector.broadcast %248 : vector<1x128xf32> to vector<17x128xf32>
    %250 = arith.addf %246, %249 : vector<17x128xf32>
    %cst_127 = arith.constant 5.000000e-01 : f32
    %251 = vector.broadcast %cst_127 : f32 to vector<17x128xf32>
    %252 = arith.mulf %251, %250 : vector<17x128xf32>
    %cst_128 = arith.constant 1.41421354 : f32
    %253 = vector.broadcast %cst_128 : f32 to vector<17x128xf32>
    %254 = arith.divf %250, %253 : vector<17x128xf32>
    %255 = math.erf %254 : vector<17x128xf32>
    %cst_129 = arith.constant 1.000000e+00 : f32
    %256 = vector.broadcast %cst_129 : f32 to vector<17x128xf32>
    %257 = arith.addf %256, %255 : vector<17x128xf32>
    %258 = arith.mulf %252, %257 : vector<17x128xf32>
    %c1_130 = arith.constant 1 : index
    %c0_131 = arith.constant 0 : index
    %c0_132 = arith.constant 0 : index
    %259 = vector.load %arg16[%c1_130, %c0_131, %c0_132] : memref<2x128x32xf32, #tpu.memory_space<vmem>>, vector<1x128x32xf32>
    %260 = vector.shape_cast %259 : vector<1x128x32xf32> to vector<128x32xf32>
    %cst_133 = arith.constant dense<0.000000e+00> : vector<17x32xf32>
    %261 = tpu.matmul %258, %260, %cst_133 {dimension_numbers = #tpu.dot_dimension_numbers<[1], [0], [0], [1], [0, 0, 1, 1], [], []>} : vector<17x128xf32>, vector<128x32xf32>, vector<17x32xf32> -> vector<17x32xf32>
    %262 = arith.addf %217, %261 : vector<17x32xf32>
    %c1_134 = arith.constant 1 : index
    %c0_135 = arith.constant 0 : index
    %c0_136 = arith.constant 0 : index
    %263 = vector.load %arg17[%c1_134, %c0_135, %c0_136] : memref<2x1x32xf32, #tpu.memory_space<vmem>>, vector<1x1x32xf32>
    %264 = vector.shape_cast %263 : vector<1x1x32xf32> to vector<1x32xf32>
    %265 = vector.broadcast %264 : vector<1x32xf32> to vector<17x32xf32>
    %266 = arith.addf %262, %265 : vector<17x32xf32>
    %cst_137 = arith.constant dense<0.000000e+00> : vector<32xf32>
    %267 = vector.multi_reduction <add>, %266, %cst_137 [0] : vector<17x32xf32> to vector<32xf32>
    %268 = vector.shape_cast %267 : vector<32xf32> to vector<1x32xf32>
    %cst_138 = arith.constant 1.700000e+01 : f32
    %269 = vector.broadcast %cst_138 : f32 to vector<1x32xf32>
    %270 = arith.divf %268, %269 : vector<1x32xf32>
    %c0_139 = arith.constant 0 : index
    %c0_140 = arith.constant 0 : index
    %271 = vector.load %arg18[%c0_139, %c0_140] : memref<1x32xf32, #tpu.memory_space<vmem>>, vector<1x32xf32>
    %c0_141 = arith.constant 0 : index
    %c0_142 = arith.constant 0 : index
    %272 = vector.load %arg19[%c0_141, %c0_142] : memref<1x32xf32, #tpu.memory_space<vmem>>, vector<1x32xf32>
    %cst_143 = arith.constant dense<0.000000e+00> : vector<1xf32>
    %273 = vector.multi_reduction <add>, %270, %cst_143 [1] : vector<1x32xf32> to vector<1xf32>
    %274 = vector.shape_cast %273 : vector<1xf32> to vector<1x1xf32>
    %cst_144 = arith.constant 3.200000e+01 : f32
    %275 = vector.broadcast %cst_144 : f32 to vector<1x1xf32>
    %276 = arith.divf %274, %275 : vector<1x1xf32>
    %277 = vector.broadcast %276 : vector<1x1xf32> to vector<1x32xf32>
    %278 = arith.subf %270, %277 : vector<1x32xf32>
    %279 = arith.mulf %278, %278 : vector<1x32xf32>
    %cst_145 = arith.constant dense<0.000000e+00> : vector<1xf32>
    %280 = vector.multi_reduction <add>, %279, %cst_145 [1] : vector<1x32xf32> to vector<1xf32>
    %281 = vector.shape_cast %280 : vector<1xf32> to vector<1x1xf32>
    %cst_146 = arith.constant 3.200000e+01 : f32
    %282 = vector.broadcast %cst_146 : f32 to vector<1x1xf32>
    %283 = arith.divf %281, %282 : vector<1x1xf32>
    %284 = vector.broadcast %276 : vector<1x1xf32> to vector<1x32xf32>
    %285 = arith.subf %270, %284 : vector<1x32xf32>
    %cst_147 = arith.constant 9.99999974E-6 : f32
    %286 = vector.broadcast %cst_147 : f32 to vector<1x1xf32>
    %287 = arith.addf %283, %286 : vector<1x1xf32>
    %288 = math.rsqrt %287 : vector<1x1xf32>
    %289 = vector.broadcast %288 : vector<1x1xf32> to vector<1x32xf32>
    %290 = arith.mulf %285, %289 : vector<1x32xf32>
    %291 = arith.mulf %290, %271 : vector<1x32xf32>
    %292 = arith.addf %291, %272 : vector<1x32xf32>
    %c0_148 = arith.constant 0 : index
    %c0_149 = arith.constant 0 : index
    %293 = vector.load %arg20[%c0_148, %c0_149] : memref<32x10xf32, #tpu.memory_space<vmem>>, vector<32x10xf32>
    %cst_150 = arith.constant dense<0.000000e+00> : vector<1x10xf32>
    %294 = tpu.matmul %292, %293, %cst_150 {dimension_numbers = #tpu.dot_dimension_numbers<[1], [0], [0], [1], [0, 0, 1, 1], [], []>} : vector<1x32xf32>, vector<32x10xf32>, vector<1x10xf32> -> vector<1x10xf32>
    %c0_151 = arith.constant 0 : index
    %c0_152 = arith.constant 0 : index
    %295 = vector.load %arg21[%c0_151, %c0_152] : memref<1x10xf32, #tpu.memory_space<vmem>>, vector<1x10xf32>
    %296 = arith.addf %294, %295 : vector<1x10xf32>
    %c0_153 = arith.constant 0 : index
    %c0_154 = arith.constant 0 : index
    %c0_155 = arith.constant 0 : index
    %297 = vector.load %arg22[%c0_153, %c0_154, %c0_155] : memref<1x1x10xf32, #tpu.memory_space<vmem>>, vector<1x1x10xf32>
    %298 = vector.shape_cast %297 : vector<1x1x10xf32> to vector<1x10xf32>
    %299 = vector.shape_cast %296 : vector<1x10xf32> to vector<1x1x10xf32>
    tpu.vector_store %arg22[%c0_153, %c0_154, %c0_155], %299 {strides = array<i32>} : memref<1x1x10xf32, #tpu.memory_space<vmem>>, vector<1x1x10xf32>,
    return
  }
  func.func @transform_0(%arg0: i32) -> (i32, i32, i32) {
    %c0_i32 = arith.constant 0 : i32
    %c0_i32_0 = arith.constant 0 : i32
    %c0_i32_1 = arith.constant 0 : i32
    return %arg0, %c0_i32, %c0_i32_0 : i32, i32, i32
  }
  func.func @transform_1(%arg0: i32) -> (i32, i32) {
    %c0_i32 = arith.constant 0 : i32
    %c0_i32_0 = arith.constant 0 : i32
    %c0_i32_1 = arith.constant 0 : i32
    return %c0_i32, %c0_i32_0 : i32, i32
  }
  func.func @transform_2(%arg0: i32) -> (i32, i32) {
    %c0_i32 = arith.constant 0 : i32
    %c0_i32_0 = arith.constant 0 : i32
    %c0_i32_1 = arith.constant 0 : i32
    return %c0_i32, %c0_i32_0 : i32, i32
  }
  func.func @transform_3(%arg0: i32) -> (i32, i32) {
    %c0_i32 = arith.constant 0 : i32
    %c0_i32_0 = arith.constant 0 : i32
    %c0_i32_1 = arith.constant 0 : i32
    return %c0_i32, %c0_i32_0 : i32, i32
  }
  func.func @transform_4(%arg0: i32) -> (i32, i32) {
    %c0_i32 = arith.constant 0 : i32
    %c0_i32_0 = arith.constant 0 : i32
    %c0_i32_1 = arith.constant 0 : i32
    return %c0_i32, %c0_i32_0 : i32, i32
  }
  func.func @transform_5(%arg0: i32) -> (i32, i32, i32) {
    %c0_i32 = arith.constant 0 : i32
    %c0_i32_0 = arith.constant 0 : i32
    %c0_i32_1 = arith.constant 0 : i32
    %c0_i32_2 = arith.constant 0 : i32
    return %c0_i32, %c0_i32_0, %c0_i32_1 : i32, i32, i32
  }
  func.func @transform_6(%arg0: i32) -> (i32, i32, i32) {
    %c0_i32 = arith.constant 0 : i32
    %c0_i32_0 = arith.constant 0 : i32
    %c0_i32_1 = arith.constant 0 : i32
    %c0_i32_2 = arith.constant 0 : i32
    return %c0_i32, %c0_i32_0, %c0_i32_1 : i32, i32, i32
  }
  func.func @transform_7(%arg0: i32) -> (i32, i32, i32) {
    %c0_i32 = arith.constant 0 : i32
    %c0_i32_0 = arith.constant 0 : i32
    %c0_i32_1 = arith.constant 0 : i32
    %c0_i32_2 = arith.constant 0 : i32
    return %c0_i32, %c0_i32_0, %c0_i32_1 : i32, i32, i32
  }
  func.func @transform_8(%arg0: i32) -> (i32, i32, i32) {
    %c0_i32 = arith.constant 0 : i32
    %c0_i32_0 = arith.constant 0 : i32
    %c0_i32_1 = arith.constant 0 : i32
    %c0_i32_2 = arith.constant 0 : i32
    return %c0_i32, %c0_i32_0, %c0_i32_1 : i32, i32, i32
  }
  func.func @transform_9(%arg0: i32) -> (i32, i32, i32) {
    %c0_i32 = arith.constant 0 : i32
    %c0_i32_0 = arith.constant 0 : i32
    %c0_i32_1 = arith.constant 0 : i32
    %c0_i32_2 = arith.constant 0 : i32
    return %c0_i32, %c0_i32_0, %c0_i32_1 : i32, i32, i32
  }
  func.func @transform_10(%arg0: i32) -> (i32, i32, i32) {
    %c0_i32 = arith.constant 0 : i32
    %c0_i32_0 = arith.constant 0 : i32
    %c0_i32_1 = arith.constant 0 : i32
    %c0_i32_2 = arith.constant 0 : i32
    return %c0_i32, %c0_i32_0, %c0_i32_1 : i32, i32, i32
  }
  func.func @transform_11(%arg0: i32) -> (i32, i32, i32) {
    %c0_i32 = arith.constant 0 : i32
    %c0_i32_0 = arith.constant 0 : i32
    %c0_i32_1 = arith.constant 0 : i32
    %c0_i32_2 = arith.constant 0 : i32
    return %c0_i32, %c0_i32_0, %c0_i32_1 : i32, i32, i32
  }
  func.func @transform_12(%arg0: i32) -> (i32, i32, i32) {
    %c0_i32 = arith.constant 0 : i32
    %c0_i32_0 = arith.constant 0 : i32
    %c0_i32_1 = arith.constant 0 : i32
    %c0_i32_2 = arith.constant 0 : i32
    return %c0_i32, %c0_i32_0, %c0_i32_1 : i32, i32, i32
  }
  func.func @transform_13(%arg0: i32) -> (i32, i32, i32) {
    %c0_i32 = arith.constant 0 : i32
    %c0_i32_0 = arith.constant 0 : i32
    %c0_i32_1 = arith.constant 0 : i32
    %c0_i32_2 = arith.constant 0 : i32
    return %c0_i32, %c0_i32_0, %c0_i32_1 : i32, i32, i32
  }
  func.func @transform_14(%arg0: i32) -> (i32, i32, i32) {
    %c0_i32 = arith.constant 0 : i32
    %c0_i32_0 = arith.constant 0 : i32
    %c0_i32_1 = arith.constant 0 : i32
    %c0_i32_2 = arith.constant 0 : i32
    return %c0_i32, %c0_i32_0, %c0_i32_1 : i32, i32, i32
  }
  func.func @transform_15(%arg0: i32) -> (i32, i32, i32) {
    %c0_i32 = arith.constant 0 : i32
    %c0_i32_0 = arith.constant 0 : i32
    %c0_i32_1 = arith.constant 0 : i32
    %c0_i32_2 = arith.constant 0 : i32
    return %c0_i32, %c0_i32_0, %c0_i32_1 : i32, i32, i32
  }
  func.func @transform_16(%arg0: i32) -> (i32, i32, i32) {
    %c0_i32 = arith.constant 0 : i32
    %c0_i32_0 = arith.constant 0 : i32
    %c0_i32_1 = arith.constant 0 : i32
    %c0_i32_2 = arith.constant 0 : i32
    return %c0_i32, %c0_i32_0, %c0_i32_1 : i32, i32, i32
  }
  func.func @transform_17(%arg0: i32) -> (i32, i32) {
    %c0_i32 = arith.constant 0 : i32
    %c0_i32_0 = arith.constant 0 : i32
    %c0_i32_1 = arith.constant 0 : i32
    return %c0_i32, %c0_i32_0 : i32, i32
  }
  func.func @transform_18(%arg0: i32) -> (i32, i32) {
    %c0_i32 = arith.constant 0 : i32
    %c0_i32_0 = arith.constant 0 : i32
    %c0_i32_1 = arith.constant 0 : i32
    return %c0_i32, %c0_i32_0 : i32, i32
  }
  func.func @transform_19(%arg0: i32) -> (i32, i32) {
    %c0_i32 = arith.constant 0 : i32
    %c0_i32_0 = arith.constant 0 : i32
    %c0_i32_1 = arith.constant 0 : i32
    return %c0_i32, %c0_i32_0 : i32, i32
  }
  func.func @transform_20(%arg0: i32) -> (i32, i32) {
    %c0_i32 = arith.constant 0 : i32
    %c0_i32_0 = arith.constant 0 : i32
    %c0_i32_1 = arith.constant 0 : i32
    return %c0_i32, %c0_i32_0 : i32, i32
  }
  func.func @transform_21(%arg0: i32) -> (i32, i32, i32) {
    %c0_i32 = arith.constant 0 : i32
    %c0_i32_0 = arith.constant 0 : i32
    %c0_i32_1 = arith.constant 0 : i32
    return %arg0, %c0_i32, %c0_i32_0 : i32, i32, i32
  }
}

</mosaic_0001>

<llo_original>
// kernel: vit_forward.1
$region0: #{vit_forward.1}
  #allocation0 [shape = 'u32[]', space=smem, size = 0x4, offset = 0x4, fixed_abs, tag = 'smem constant byte address 0x4 - core index']
  #allocation1 [shape = 'u32[144,128]{1,0:T(1,128)}', space=vmem, size = 0x12000, scoped, tag = 'internal scratch']
  %s0 = inlined_call_operand.vmem [shape: f32[2,16,64], index: 0, kind: input, shape index: {}]
  %s1 = inlined_call_operand.vmem [shape: f32[64,32], index: 1, kind: input, shape index: {}]
  %s2 = inlined_call_operand.vmem [shape: f32[1,32], index: 2, kind: input, shape index: {}]
  %s3 = inlined_call_operand.vmem [shape: f32[1,32], index: 3, kind: input, shape index: {}]
  %s4 = inlined_call_operand.vmem [shape: f32[17,32], index: 4, kind: input, shape index: {}]
  %s5 = inlined_call_operand.vmem [shape: f32[2,1,32], index: 5, kind: input, shape index: {}]
  %s6 = inlined_call_operand.vmem [shape: f32[2,1,32], index: 6, kind: input, shape index: {}]
  %s7 = inlined_call_operand.vmem [shape: f32[2,32,96], index: 7, kind: input, shape index: {}]
  %s8 = inlined_call_operand.vmem [shape: f32[2,1,96], index: 8, kind: input, shape index: {}]
  %s9 = inlined_call_operand.vmem [shape: f32[2,32,32], index: 9, kind: input, shape index: {}]
  %s10 = inlined_call_operand.vmem [shape: f32[2,1,32], index: 10, kind: input, shape index: {}]
  %s11 = inlined_call_operand.vmem [shape: f32[2,1,32], index: 11, kind: input, shape index: {}]
  %s12 = inlined_call_operand.vmem [shape: f32[2,1,32], index: 12, kind: input, shape index: {}]
  %s13 = inlined_call_operand.vmem [shape: f32[2,32,128], index: 13, kind: input, shape index: {}]
  %s14 = inlined_call_operand.vmem [shape: f32[2,1,128], index: 14, kind: input, shape index: {}]
  %s15 = inlined_call_operand.vmem [shape: f32[2,128,32], index: 15, kind: input, shape index: {}]
  %s16 = inlined_call_operand.vmem [shape: f32[2,1,32], index: 16, kind: input, shape index: {}]
  %s17 = inlined_call_operand.vmem [shape: f32[1,32], index: 17, kind: input, shape index: {}]
  %s18 = inlined_call_operand.vmem [shape: f32[1,32], index: 18, kind: input, shape index: {}]
  %s19 = inlined_call_operand.vmem [shape: f32[32,10], index: 19, kind: input, shape index: {}]
  %s20 = inlined_call_operand.vmem [shape: f32[1,10], index: 20, kind: input, shape index: {}]
  %s21 = inlined_call_operand.hbm [shape: f32[2,1,10], index: 21, kind: output, shape index: {}]
  %s22 = sld [smem:[#allocation0]]
  $region117: #{vit_forward.1} parent=0
    _
  %s24 = ssub.s32 1, %s22
  %s25 = scalar_select 0, %s24, %s22
  $region1: #{vit_forward.1} parent=0
    #allocation2 [shape = 'u8[1024]{0}', space=vmem, size = 0x400, scoped, tag = 'output window, operand 0']
    #allocation3 [shape = 's32[2]{0}', space=sflag, size = 0x8, scoped, tag = 'scoped memory for vit_forward.1']
    %26 = vsyncpa [#allocation3], 0
    %s27 = scalar_lea.sflag [#allocation3], 1
    %28 = vsyncpa %s27, 0
    loop: start=0, step=1, limit=4
    $region2: #{vit_forward.1} parent=1 // loop_pre_header
      _
    $region3: #{vit_forward.1} parent=1 // loop_header
      %s30 = sphi 0, %s34
      %p31 = scmp.ge.s32.totalorder %s30, 4
      %s40 = sphi 0, %s42
      %s43 = sphi 0, %s40
      %s44 = sphi 0, %s43
      %s60 = sphi 0, %s44
      %s64 = sphi 0, %s64
      %s66 = sphi 0, %s64
      %s67 = sphi 0, %s66
      %s81 = sphi 0, %s67
      %s85 = sphi 0, %s85
      %s87 = sphi 0, %s85
      %s88 = sphi 0, %s87
      %s102 = sphi 0, %s88
      %s106 = sphi 0, %s106
      %s108 = sphi 0, %s106
      %s109 = sphi 0, %s108
      %s123 = sphi 0, %s109
      %s127 = sphi 0, %s127
      %s129 = sphi 0, %s127
      %s130 = sphi 0, %s129
      %s144 = sphi 0, %s130
      %s148 = sphi 0, %s148
      %s150 = sphi 0, %s148
      %s151 = sphi 0, %s150
      %s165 = sphi 0, %s151
      %s169 = sphi 0, %s169
      %s171 = sphi 0, %s169
      %s172 = sphi 0, %s171
      %s186 = sphi 0, %s172
      %s190 = sphi 0, %s190
      %s192 = sphi 0, %s190
      %s193 = sphi 0, %s192
      %s207 = sphi 0, %s193
      %s211 = sphi 0, %s211
      %s213 = sphi 0, %s211
      %s214 = sphi 0, %s213
      %s228 = sphi 0, %s214
      %s232 = sphi 0, %s232
      %s234 = sphi 0, %s232
      %s235 = sphi 0, %s234
      %s249 = sphi 0, %s235
      %s253 = sphi 0, %s253
      %s255 = sphi 0, %s253
      %s256 = sphi 0, %s255
      %s270 = sphi 0, %s256
      %s274 = sphi 0, %s274
      %s276 = sphi 0, %s274
      %s277 = sphi 0, %s276
      %s291 = sphi 0, %s277
      %s295 = sphi 0, %s295
      %s297 = sphi 0, %s295
      %s298 = sphi 0, %s297
      %s312 = sphi 0, %s298
      %s316 = sphi 0, %s316
      %s318 = sphi 0, %s316
      %s319 = sphi 0, %s318
      %s333 = sphi 0, %s319
      %s337 = sphi 0, %s337
      %s339 = sphi 0, %s337
      %s340 = sphi 0, %s339
      %s354 = sphi 0, %s340
      %s358 = sphi 0, %s358
      %s360 = sphi 0, %s358
      %s361 = sphi 0, %s360
      %s375 = sphi 0, %s361
      %s379 = sphi 0, %s379
      %s381 = sphi 0, %s379
      %s382 = sphi 0, %s381
      %s396 = sphi 0, %s382
      %s400 = sphi 0, %s400
      %s402 = sphi 0, %s400
      %s403 = sphi 0, %s402
      %s417 = sphi 0, %s403
      %s421 = sphi 0, %s421
      %s423 = sphi 0, %s421
      %s424 = sphi 0, %s423
      %s438 = sphi 0, %s424
      %s442 = sphi 0, %s442
      %s444 = sphi 0, %s442
      %s445 = sphi 0, %s444
      %s459 = sphi 0, %s445
      %s463 = sphi 0, %s463
      %s465 = sphi 0, %s463
      %s466 = sphi 0, %s465
      %s480 = sphi 0, %s466
      %s486 = sphi 0, %s488
      %s489 = sphi 0, %s486
      %s490 = sphi 0, %s489
      %s506 = sphi 0, %s490
    $region4: #{vit_forward.1} parent=1 // loop_header_branch
      %33 = sbr.rel (%p31) target = $region8
    $region5: #{vit_forward.1} parent=1 // loop_body
      %s35 = ssub.s32 %s30, 1
      %s36 = ssub.s32 %s30, 2
      %s37 = sadd.s32 %s30, 1
      %s38 = ssub.s32 %s30, %s37
      %p39 = scmp.eq.s32.totalorder %s38, 0
      %s41 = sadd.s32 %s40, 1
      %s42 = scalar_select %p39, %s40, %s41
      %p45 = pneg %p39
      %p46 = scmp.eq.s32.totalorder %s30, 1
      %p47 = por %p45, %p46
      %p48 = scmp.ne.s32.totalorder %s40, %s43
      %p49 = scmp.eq.s32.totalorder %s30, 0
      %p50 = por %p48, %p49
      %p51 = scmp.ne.s32.totalorder %s40, %s43
      %p52 = scmp.eq.s32.totalorder %s35, 1
      %p53 = por %p51, %p52
      %p54 = scmp.ne.s32.totalorder %s43, %s44
      %p55 = scmp.eq.s32.totalorder %s35, 0
      %p56 = por %p54, %p55
      %p57 = scmp.ne.s32.totalorder %s43, %s44
      %p58 = scmp.eq.s32.totalorder %s36, 1
      %p59 = por %p57, %p58
      %p61 = scmp.ne.s32.totalorder %s44, %s60
      %p62 = scmp.eq.s32.totalorder %s36, 0
      %p63 = por %p61, %p62
      %s65 = sadd.s32 %s64, 1
      %p68 = scmp.eq.s32.totalorder %s30, 1
      %p69 = scmp.ne.s32.totalorder %s64, %s66
      %p70 = scmp.eq.s32.totalorder %s30, 0
      %p71 = por %p69, %p70
      %p72 = scmp.ne.s32.totalorder %s64, %s66
      %p73 = scmp.eq.s32.totalorder %s35, 1
      %p74 = por %p72, %p73
      %p75 = scmp.ne.s32.totalorder %s66, %s67
      %p76 = scmp.eq.s32.totalorder %s35, 0
      %p77 = por %p75, %p76
      %p78 = scmp.ne.s32.totalorder %s66, %s67
      %p79 = scmp.eq.s32.totalorder %s36, 1
      %p80 = por %p78, %p79
      %p82 = scmp.ne.s32.totalorder %s67, %s81
      %p83 = scmp.eq.s32.totalorder %s36, 0
      %p84 = por %p82, %p83
      %s86 = sadd.s32 %s85, 1
      %p89 = scmp.eq.s32.totalorder %s30, 1
      %p90 = scmp.ne.s32.totalorder %s85, %s87
      %p91 = scmp.eq.s32.totalorder %s30, 0
      %p92 = por %p90, %p91
      %p93 = scmp.ne.s32.totalorder %s85, %s87
      %p94 = scmp.eq.s32.totalorder %s35, 1
      %p95 = por %p93, %p94
      %p96 = scmp.ne.s32.totalorder %s87, %s88
      %p97 = scmp.eq.s32.totalorder %s35, 0
      %p98 = por %p96, %p97
      %p99 = scmp.ne.s32.totalorder %s87, %s88
      %p100 = scmp.eq.s32.totalorder %s36, 1
      %p101 = por %p99, %p100
      %p103 = scmp.ne.s32.totalorder %s88, %s102
      %p104 = scmp.eq.s32.totalorder %s36, 0
      %p105 = por %p103, %p104
      %s107 = sadd.s32 %s106, 1
      %p110 = scmp.eq.s32.totalorder %s30, 1
      %p111 = scmp.ne.s32.totalorder %s106, %s108
      %p112 = scmp.eq.s32.totalorder %s30, 0
      %p113 = por %p111, %p112
      %p114 = scmp.ne.s32.totalorder %s106, %s108
      %p115 = scmp.eq.s32.totalorder %s35, 1
      %p116 = por %p114, %p115
      %p117 = scmp.ne.s32.totalorder %s108, %s109
      %p118 = scmp.eq.s32.totalorder %s35, 0
      %p119 = por %p117, %p118
      %p120 = scmp.ne.s32.totalorder %s108, %s109
      %p121 = scmp.eq.s32.totalorder %s36, 1
      %p122 = por %p120, %p121
      %p124 = scmp.ne.s32.totalorder %s109, %s123
      %p125 = scmp.eq.s32.totalorder %s36, 0
      %p126 = por %p124, %p125
      %s128 = sadd.s32 %s127, 1
      %p131 = scmp.eq.s32.totalorder %s30, 1
      %p132 = scmp.ne.s32.totalorder %s127, %s129
      %p133 = scmp.eq.s32.totalorder %s30, 0
      %p134 = por %p132, %p133
      %p135 = scmp.ne.s32.totalorder %s127, %s129
      %p136 = scmp.eq.s32.totalorder %s35, 1
      %p137 = por %p135, %p136
      %p138 = scmp.ne.s32.totalorder %s129, %s130
      %p139 = scmp.eq.s32.totalorder %s35, 0
      %p140 = por %p138, %p139
      %p141 = scmp.ne.s32.totalorder %s129, %s130
      %p142 = scmp.eq.s32.totalorder %s36, 1
      %p143 = por %p141, %p142
      %p145 = scmp.ne.s32.totalorder %s130, %s144
      %p146 = scmp.eq.s32.totalorder %s36, 0
      %p147 = por %p145, %p146
      %s149 = sadd.s32 %s148, 1
      %p152 = scmp.eq.s32.totalorder %s30, 1
      %p153 = scmp.ne.s32.totalorder %s148, %s150
      %p154 = scmp.eq.s32.totalorder %s30, 0
      %p155 = por %p153, %p154
      %p156 = scmp.ne.s32.totalorder %s148, %s150
      %p157 = scmp.eq.s32.totalorder %s35, 1
      %p158 = por %p156, %p157
      %p159 = scmp.ne.s32.totalorder %s150, %s151
      %p160 = scmp.eq.s32.totalorder %s35, 0
      %p161 = por %p159, %p160
      %p162 = scmp.ne.s32.totalorder %s150, %s151
      %p163 = scmp.eq.s32.totalorder %s36, 1
      %p164 = por %p162, %p163
      %p166 = scmp.ne.s32.totalorder %s151, %s165
      %p167 = scmp.eq.s32.totalorder %s36, 0
      %p168 = por %p166, %p167
      %s170 = sadd.s32 %s169, 1
      %p173 = scmp.eq.s32.totalorder %s30, 1
      %p174 = scmp.ne.s32.totalorder %s169, %s171
      %p175 = scmp.eq.s32.totalorder %s30, 0
      %p176 = por %p174, %p175
      %p177 = scmp.ne.s32.totalorder %s169, %s171
      %p178 = scmp.eq.s32.totalorder %s35, 1
      %p179 = por %p177, %p178
      %p180 = scmp.ne.s32.totalorder %s171, %s172
      %p181 = scmp.eq.s32.totalorder %s35, 0
      %p182 = por %p180, %p181
      %p183 = scmp.ne.s32.totalorder %s171, %s172
      %p184 = scmp.eq.s32.totalorder %s36, 1
      %p185 = por %p183, %p184
      %p187 = scmp.ne.s32.totalorder %s172, %s186
      %p188 = scmp.eq.s32.totalorder %s36, 0
      %p189 = por %p187, %p188
      %s191 = sadd.s32 %s190, 1
      %p194 = scmp.eq.s32.totalorder %s30, 1
      %p195 = scmp.ne.s32.totalorder %s190, %s192
      %p196 = scmp.eq.s32.totalorder %s30, 0
      %p197 = por %p195, %p196
      %p198 = scmp.ne.s32.totalorder %s190, %s192
      %p199 = scmp.eq.s32.totalorder %s35, 1
      %p200 = por %p198, %p199
      %p201 = scmp.ne.s32.totalorder %s192, %s193
      %p202 = scmp.eq.s32.totalorder %s35, 0
      %p203 = por %p201, %p202
      %p204 = scmp.ne.s32.totalorder %s192, %s193
      %p205 = scmp.eq.s32.totalorder %s36, 1
      %p206 = por %p204, %p205
      %p208 = scmp.ne.s32.totalorder %s193, %s207
      %p209 = scmp.eq.s32.totalorder %s36, 0
      %p210 = por %p208, %p209
      %s212 = sadd.s32 %s211, 1
      %p215 = scmp.eq.s32.totalorder %s30, 1
      %p216 = scmp.ne.s32.totalorder %s211, %s213
      %p217 = scmp.eq.s32.totalorder %s30, 0
      %p218 = por %p216, %p217
      %p219 = scmp.ne.s32.totalorder %s211, %s213
      %p220 = scmp.eq.s32.totalorder %s35, 1
      %p221 = por %p219, %p220
      %p222 = scmp.ne.s32.totalorder %s213, %s214
      %p223 = scmp.eq.s32.totalorder %s35, 0
      %p224 = por %p222, %p223
      %p225 = scmp.ne.s32.totalorder %s213, %s214
      %p226 = scmp.eq.s32.totalorder %s36, 1
      %p227 = por %p225, %p226
      %p229 = scmp.ne.s32.totalorder %s214, %s228
      %p230 = scmp.eq.s32.totalorder %s36, 0
      %p231 = por %p229, %p230
      %s233 = sadd.s32 %s232, 1
      %p236 = scmp.eq.s32.totalorder %s30, 1
      %p237 = scmp.ne.s32.totalorder %s232, %s234
      %p238 = scmp.eq.s32.totalorder %s30, 0
      %p239 = por %p237, %p238
      %p240 = scmp.ne.s32.totalorder %s232, %s234
      %p241 = scmp.eq.s32.totalorder %s35, 1
      %p242 = por %p240, %p241
      %p243 = scmp.ne.s32.totalorder %s234, %s235
      %p244 = scmp.eq.s32.totalorder %s35, 0
      %p245 = por %p243, %p244
      %p246 = scmp.ne.s32.totalorder %s234, %s235
      %p247 = scmp.eq.s32.totalorder %s36, 1
      %p248 = por %p246, %p247
      %p250 = scmp.ne.s32.totalorder %s235, %s249
      %p251 = scmp.eq.s32.totalorder %s36, 0
      %p252 = por %p250, %p251
      %s254 = sadd.s32 %s253, 1
      %p257 = scmp.eq.s32.totalorder %s30, 1
      %p258 = scmp.ne.s32.totalorder %s253, %s255
      %p259 = scmp.eq.s32.totalorder %s30, 0
      %p260 = por %p258, %p259
      %p261 = scmp.ne.s32.totalorder %s253, %s255
      %p262 = scmp.eq.s32.totalorder %s35, 1
      %p263 = por %p261, %p262
      %p264 = scmp.ne.s32.totalorder %s255, %s256
      %p265 = scmp.eq.s32.totalorder %s35, 0
      %p266 = por %p264, %p265
      %p267 = scmp.ne.s32.totalorder %s255, %s256
      %p268 = scmp.eq.s32.totalorder %s36, 1
      %p269 = por %p267, %p268
      %p271 = scmp.ne.s32.totalorder %s256, %s270
      %p272 = scmp.eq.s32.totalorder %s36, 0
      %p273 = por %p271, %p272
      %s275 = sadd.s32 %s274, 1
      %p278 = scmp.eq.s32.totalorder %s30, 1
      %p279 = scmp.ne.s32.totalorder %s274, %s276
      %p280 = scmp.eq.s32.totalorder %s30, 0
      %p281 = por %p279, %p280
      %p282 = scmp.ne.s32.totalorder %s274, %s276
      %p283 = scmp.eq.s32.totalorder %s35, 1
      %p284 = por %p282, %p283
      %p285 = scmp.ne.s32.totalorder %s276, %s277
      %p286 = scmp.eq.s32.totalorder %s35, 0
      %p287 = por %p285, %p286
      %p288 = scmp.ne.s32.totalorder %s276, %s277
      %p289 = scmp.eq.s32.totalorder %s36, 1
      %p290 = por %p288, %p289
      %p292 = scmp.ne.s32.totalorder %s277, %s291
      %p293 = scmp.eq.s32.totalorder %s36, 0
      %p294 = por %p292, %p293
      %s296 = sadd.s32 %s295, 1
      %p299 = scmp.eq.s32.totalorder %s30, 1
      %p300 = scmp.ne.s32.totalorder %s295, %s297
      %p301 = scmp.eq.s32.totalorder %s30, 0
      %p302 = por %p300, %p301
      %p303 = scmp.ne.s32.totalorder %s295, %s297
      %p304 = scmp.eq.s32.totalorder %s35, 1
      %p305 = por %p303, %p304
      %p306 = scmp.ne.s32.totalorder %s297, %s298
      %p307 = scmp.eq.s32.totalorder %s35, 0
      %p308 = por %p306, %p307
      %p309 = scmp.ne.s32.totalorder %s297, %s298
      %p310 = scmp.eq.s32.totalorder %s36, 1
      %p311 = por %p309, %p310
      %p313 = scmp.ne.s32.totalorder %s298, %s312
      %p314 = scmp.eq.s32.totalorder %s36, 0
      %p315 = por %p313, %p314
      %s317 = sadd.s32 %s316, 1
      %p320 = scmp.eq.s32.totalorder %s30, 1
      %p321 = scmp.ne.s32.totalorder %s316, %s318
      %p322 = scmp.eq.s32.totalorder %s30, 0
      %p323 = por %p321, %p322
      %p324 = scmp.ne.s32.totalorder %s316, %s318
      %p325 = scmp.eq.s32.totalorder %s35, 1
      %p326 = por %p324, %p325
      %p327 = scmp.ne.s32.totalorder %s318, %s319
      %p328 = scmp.eq.s32.totalorder %s35, 0
      %p329 = por %p327, %p328
      %p330 = scmp.ne.s32.totalorder %s318, %s319
      %p331 = scmp.eq.s32.totalorder %s36, 1
      %p332 = por %p330, %p331
      %p334 = scmp.ne.s32.totalorder %s319, %s333
      %p335 = scmp.eq.s32.totalorder %s36, 0
      %p336 = por %p334, %p335
      %s338 = sadd.s32 %s337, 1
      %p341 = scmp.eq.s32.totalorder %s30, 1
      %p342 = scmp.ne.s32.totalorder %s337, %s339
      %p343 = scmp.eq.s32.totalorder %s30, 0
      %p344 = por %p342, %p343
      %p345 = scmp.ne.s32.totalorder %s337, %s339
      %p346 = scmp.eq.s32.totalorder %s35, 1
      %p347 = por %p345, %p346
      %p348 = scmp.ne.s32.totalorder %s339, %s340
      %p349 = scmp.eq.s32.totalorder %s35, 0
      %p350 = por %p348, %p349
      %p351 = scmp.ne.s32.totalorder %s339, %s340
      %p352 = scmp.eq.s32.totalorder %s36, 1
      %p353 = por %p351, %p352
      %p355 = scmp.ne.s32.totalorder %s340, %s354
      %p356 = scmp.eq.s32.totalorder %s36, 0
      %p357 = por %p355, %p356
      %s359 = sadd.s32 %s358, 1
      %p362 = scmp.eq.s32.totalorder %s30, 1
      %p363 = scmp.ne.s32.totalorder %s358, %s360
      %p364 = scmp.eq.s32.totalorder %s30, 0
      %p365 = por %p363, %p364
      %p366 = scmp.ne.s32.totalorder %s358, %s360
      %p367 = scmp.eq.s32.totalorder %s35, 1
      %p368 = por %p366, %p367
      %p369 = scmp.ne.s32.totalorder %s360, %s361
      %p370 = scmp.eq.s32.totalorder %s35, 0
      %p371 = por %p369, %p370
      %p372 = scmp.ne.s32.totalorder %s360, %s361
      %p373 = scmp.eq.s32.totalorder %s36, 1
      %p374 = por %p372, %p373
      %p376 = scmp.ne.s32.totalorder %s361, %s375
      %p377 = scmp.eq.s32.totalorder %s36, 0
      %p378 = por %p376, %p377
      %s380 = sadd.s32 %s379, 1
      %p383 = scmp.eq.s32.totalorder %s30, 1
      %p384 = scmp.ne.s32.totalorder %s379, %s381
      %p385 = scmp.eq.s32.totalorder %s30, 0
      %p386 = por %p384, %p385
      %p387 = scmp.ne.s32.totalorder %s379, %s381
      %p388 = scmp.eq.s32.totalorder %s35, 1
      %p389 = por %p387, %p388
      %p390 = scmp.ne.s32.totalorder %s381, %s382
      %p391 = scmp.eq.s32.totalorder %s35, 0
      %p392 = por %p390, %p391
      %p393 = scmp.ne.s32.totalorder %s381, %s382
      %p394 = scmp.eq.s32.totalorder %s36, 1
      %p395 = por %p393, %p394
      %p397 = scmp.ne.s32.totalorder %s382, %s396
      %p398 = scmp.eq.s32.totalorder %s36, 0
      %p399 = por %p397, %p398
      %s401 = sadd.s32 %s400, 1
      %p404 = scmp.eq.s32.totalorder %s30, 1
      %p405 = scmp.ne.s32.totalorder %s400, %s402
      %p406 = scmp.eq.s32.totalorder %s30, 0
      %p407 = por %p405, %p406
      %p408 = scmp.ne.s32.totalorder %s400, %s402
      %p409 = scmp.eq.s32.totalorder %s35, 1
      %p410 = por %p408, %p409
      %p411 = scmp.ne.s32.totalorder %s402, %s403
      %p412 = scmp.eq.s32.totalorder %s35, 0
      %p413 = por %p411, %p412
      %p414 = scmp.ne.s32.totalorder %s402, %s403
      %p415 = scmp.eq.s32.totalorder %s36, 1
      %p416 = por %p414, %p415
      %p418 = scmp.ne.s32.totalorder %s403, %s417
      %p419 = scmp.eq.s32.totalorder %s36, 0
      %p420 = por %p418, %p419
      %s422 = sadd.s32 %s421, 1
      %p425 = scmp.eq.s32.totalorder %s30, 1
      %p426 = scmp.ne.s32.totalorder %s421, %s423
      %p427 = scmp.eq.s32.totalorder %s30, 0
      %p428 = por %p426, %p427
      %p429 = scmp.ne.s32.totalorder %s421, %s423
      %p430 = scmp.eq.s32.totalorder %s35, 1
      %p431 = por %p429, %p430
      %p432 = scmp.ne.s32.totalorder %s423, %s424
      %p433 = scmp.eq.s32.totalorder %s35, 0
      %p434 = por %p432, %p433
      %p435 = scmp.ne.s32.totalorder %s423, %s424
      %p436 = scmp.eq.s32.totalorder %s36, 1
      %p437 = por %p435, %p436
      %p439 = scmp.ne.s32.totalorder %s424, %s438
      %p440 = scmp.eq.s32.totalorder %s36, 0
      %p441 = por %p439, %p440
      %s443 = sadd.s32 %s442, 1
      %p446 = scmp.eq.s32.totalorder %s30, 1
      %p447 = scmp.ne.s32.totalorder %s442, %s444
      %p448 = scmp.eq.s32.totalorder %s30, 0
      %p449 = por %p447, %p448
      %p450 = scmp.ne.s32.totalorder %s442, %s444
      %p451 = scmp.eq.s32.totalorder %s35, 1
      %p452 = por %p450, %p451
      %p453 = scmp.ne.s32.totalorder %s444, %s445
      %p454 = scmp.eq.s32.totalorder %s35, 0
      %p455 = por %p453, %p454
      %p456 = scmp.ne.s32.totalorder %s444, %s445
      %p457 = scmp.eq.s32.totalorder %s36, 1
      %p458 = por %p456, %p457
      %p460 = scmp.ne.s32.totalorder %s445, %s459
      %p461 = scmp.eq.s32.totalorder %s36, 0
      %p462 = por %p460, %p461
      %s464 = sadd.s32 %s463, 1
      %p467 = scmp.eq.s32.totalorder %s30, 1
      %p468 = scmp.ne.s32.totalorder %s463, %s465
      %p469 = scmp.eq.s32.totalorder %s30, 0
      %p470 = por %p468, %p469
      %p471 = scmp.ne.s32.totalorder %s463, %s465
      %p472 = scmp.eq.s32.totalorder %s35, 1
      %p473 = por %p471, %p472
      %p474 = scmp.ne.s32.totalorder %s465, %s466
      %p475 = scmp.eq.s32.totalorder %s35, 0
      %p476 = por %p474, %p475
      %p477 = scmp.ne.s32.totalorder %s465, %s466
      %p478 = scmp.eq.s32.totalorder %s36, 1
      %p479 = por %p477, %p478
      %p481 = scmp.ne.s32.totalorder %s466, %s480
      %p482 = scmp.eq.s32.totalorder %s36, 0
      %p483 = por %p481, %p482
      %s484 = ssub.s32 %s30, %s37
      %p485 = scmp.eq.s32.totalorder %s484, 0
      %s487 = sadd.s32 %s486, 1
      %s488 = scalar_select %p485, %s486, %s487
      %p491 = pneg %p485
      %p492 = scmp.eq.s32.totalorder %s30, 1
      %p493 = por %p491, %p492
      %p494 = scmp.ne.s32.totalorder %s486, %s489
      %p495 = scmp.eq.s32.totalorder %s30, 0
      %p496 = por %p494, %p495
      %p497 = scmp.ne.s32.totalorder %s486, %s489
      %p498 = scmp.eq.s32.totalorder %s35, 1
      %p499 = por %p497, %p498
      %p500 = scmp.ne.s32.totalorder %s489, %s490
      %p501 = scmp.eq.s32.totalorder %s35, 0
      %p502 = por %p500, %p501
      %p503 = scmp.ne.s32.totalorder %s489, %s490
      %p504 = scmp.eq.s32.totalorder %s36, 1
      %p505 = por %p503, %p504
      %p507 = scmp.ne.s32.totalorder %s490, %s506
      %p508 = scmp.eq.s32.totalorder %s36, 0
      %p509 = por %p507, %p508
      %p510 = scmp.le.s32.totalorder 1, %s30
      %p511 = scmp.lt.s32.totalorder %s30, 3
      %p512 = pnand %p510, %p511
      %p513 = pneg %p512
      // Predicated region
      $region9: #{vit_forward.1} parent=5 // pred_check
        _
      $region10: #{vit_forward.1} parent=5 // pred_check_branch
        %515 = sbr.rel (%p512) target = $region12
      $region11: #{vit_forward.1} parent=5 // pred_region
        %s516 = ssub.s32 %s30, 1
        // Predicated region
        $region13: #{vit_forward.1} parent=11 // pred_check
          %p517 = pneg %p77
        $region14: #{vit_forward.1} parent=11 // pred_check_branch
          %519 = sbr.rel (%p517) target = $region16
        $region15: #{vit_forward.1} parent=11 // pred_region
          _
        $region16: #{vit_forward.1} parent=11 // pred_fallthru
          _
        // Predicated region
        $region17: #{vit_forward.1} parent=11 // pred_check
          %p520 = pneg %p98
        $region18: #{vit_forward.1} parent=11 // pred_check_branch
          %522 = sbr.rel (%p520) target = $region20
        $region19: #{vit_forward.1} parent=11 // pred_region
          _
        $region20: #{vit_forward.1} parent=11 // pred_fallthru
          _
        // Predicated region
        $region21: #{vit_forward.1} parent=11 // pred_check
          %p523 = pneg %p119
        $region22: #{vit_forward.1} parent=11 // pred_check_branch
          %525 = sbr.rel (%p523) target = $region24
        $region23: #{vit_forward.1} parent=11 // pred_region
          _
        $region24: #{vit_forward.1} parent=11 // pred_fallthru
          _
        // Predicated region
        $region25: #{vit_forward.1} parent=11 // pred_check
          %p526 = pneg %p140
        $region26: #{vit_forward.1} parent=11 // pred_check_branch
          %528 = sbr.rel (%p526) target = $region28
        $region27: #{vit_forward.1} parent=11 // pred_region
          _
        $region28: #{vit_forward.1} parent=11 // pred_fallthru
          _
        // Predicated region
        $region29: #{vit_forward.1} parent=11 // pred_check
          %p529 = pneg %p161
        $region30: #{vit_forward.1} parent=11 // pred_check_branch
          %531 = sbr.rel (%p529) target = $region32
        $region31: #{vit_forward.1} parent=11 // pred_region
          _
        $region32: #{vit_forward.1} parent=11 // pred_fallthru
          _
        // Predicated region
        $region33: #{vit_forward.1} parent=11 // pred_check
          %p532 = pneg %p182
        $region34: #{vit_forward.1} parent=11 // pred_check_branch
          %534 = sbr.rel (%p532) target = $region36
        $region35: #{vit_forward.1} parent=11 // pred_region
          _
        $region36: #{vit_forward.1} parent=11 // pred_fallthru
          _
        // Predicated region
        $region37: #{vit_forward.1} parent=11 // pred_check
          %p535 = pneg %p203
        $region38: #{vit_forward.1} parent=11 // pred_check_branch
          %537 = sbr.rel (%p535) target = $region40
        $region39: #{vit_forward.1} parent=11 // pred_region
          _
        $region40: #{vit_forward.1} parent=11 // pred_fallthru
          _
        // Predicated region
        $region41: #{vit_forward.1} parent=11 // pred_check
          %p538 = pneg %p224
        $region42: #{vit_forward.1} parent=11 // pred_check_branch
          %540 = sbr.rel (%p538) target = $region44
        $region43: #{vit_forward.1} parent=11 // pred_region
          _
        $region44: #{vit_forward.1} parent=11 // pred_fallthru
          _
        // Predicated region
        $region45: #{vit_forward.1} parent=11 // pred_check
          %p541 = pneg %p245
        $region46: #{vit_forward.1} parent=11 // pred_check_branch
          %543 = sbr.rel (%p541) target = $region48
        $region47: #{vit_forward.1} parent=11 // pred_region
          _
        $region48: #{vit_forward.1} parent=11 // pred_fallthru
          _
        // Predicated region
        $region49: #{vit_forward.1} parent=11 // pred_check
          %p544 = pneg %p266
        $region50: #{vit_forward.1} parent=11 // pred_check_branch
          %546 = sbr.rel (%p544) target = $region52
        $region51: #{vit_forward.1} parent=11 // pred_region
          _
        $region52: #{vit_forward.1} parent=11 // pred_fallthru
          _
        // Predicated region
        $region53: #{vit_forward.1} parent=11 // pred_check
          %p547 = pneg %p287
        $region54: #{vit_forward.1} parent=11 // pred_check_branch
          %549 = sbr.rel (%p547) target = $region56
        $region55: #{vit_forward.1} parent=11 // pred_region
          _
        $region56: #{vit_forward.1} parent=11 // pred_fallthru
          _
        // Predicated region
        $region57: #{vit_forward.1} parent=11 // pred_check
          %p550 = pneg %p308
        $region58: #{vit_forward.1} parent=11 // pred_check_branch
          %552 = sbr.rel (%p550) target = $region60
        $region59: #{vit_forward.1} parent=11 // pred_region
          _
        $region60: #{vit_forward.1} parent=11 // pred_fallthru
          _
        // Predicated region
        $region61: #{vit_forward.1} parent=11 // pred_check
          %p553 = pneg %p329
        $region62: #{vit_forward.1} parent=11 // pred_check_branch
          %555 = sbr.rel (%p553) target = $region64
        $region63: #{vit_forward.1} parent=11 // pred_region
          _
        $region64: #{vit_forward.1} parent=11 // pred_fallthru
          _
        // Predicated region
        $region65: #{vit_forward.1} parent=11 // pred_check
          %p556 = pneg %p350
        $region66: #{vit_forward.1} parent=11 // pred_check_branch
          %558 = sbr.rel (%p556) target = $region68
        $region67: #{vit_forward.1} parent=11 // pred_region
          _
        $region68: #{vit_forward.1} parent=11 // pred_fallthru
          _
        // Predicated region
        $region69: #{vit_forward.1} parent=11 // pred_check
          %p559 = pneg %p371
        $region70: #{vit_forward.1} parent=11 // pred_check_branch
          %561 = sbr.rel (%p559) target = $region72
        $region71: #{vit_forward.1} parent=11 // pred_region
          _
        $region72: #{vit_forward.1} parent=11 // pred_fallthru
          _
        // Predicated region
        $region73: #{vit_forward.1} parent=11 // pred_check
          %p562 = pneg %p392
        $region74: #{vit_forward.1} parent=11 // pred_check_branch
          %564 = sbr.rel (%p562) target = $region76
        $region75: #{vit_forward.1} parent=11 // pred_region
          _
        $region76: #{vit_forward.1} parent=11 // pred_fallthru
          _
        // Predicated region
        $region77: #{vit_forward.1} parent=11 // pred_check
          %p565 = pneg %p413
        $region78: #{vit_forward.1} parent=11 // pred_check_branch
          %567 = sbr.rel (%p565) target = $region80
        $region79: #{vit_forward.1} parent=11 // pred_region
          _
        $region80: #{vit_forward.1} parent=11 // pred_fallthru
          _
        // Predicated region
        $region81: #{vit_forward.1} parent=11 // pred_check
          %p568 = pneg %p434
        $region82: #{vit_forward.1} parent=11 // pred_check_branch
          %570 = sbr.rel (%p568) target = $region84
        $region83: #{vit_forward.1} parent=11 // pred_region
          _
        $region84: #{vit_forward.1} parent=11 // pred_fallthru
          _
        // Predicated region
        $region85: #{vit_forward.1} parent=11 // pred_check
          %p571 = pneg %p455
        $region86: #{vit_forward.1} parent=11 // pred_check_branch
          %573 = sbr.rel (%p571) target = $region88
        $region87: #{vit_forward.1} parent=11 // pred_region
          _
        $region88: #{vit_forward.1} parent=11 // pred_fallthru
          _
        // Predicated region
        $region89: #{vit_forward.1} parent=11 // pred_check
          %p574 = pneg %p476
        $region90: #{vit_forward.1} parent=11 // pred_check_branch
          %576 = sbr.rel (%p574) target = $region92
        $region91: #{vit_forward.1} parent=11 // pred_region
          _
        $region92: #{vit_forward.1} parent=11 // pred_fallthru
          _
      $region12: #{vit_forward.1} parent=5 // pred_fallthru
        _
      %p577 = scmp.lt.s32.totalorder %s30, 2
      // Predicated region
      $region93: #{vit_forward.1} parent=5 // pred_check
        %p578 = pneg %p577
      $region94: #{vit_forward.1} parent=5 // pred_check_branch
        %580 = sbr.rel (%p578) target = $region96
      $region95: #{vit_forward.1} parent=5 // pred_region
        // Predicated region
        $region97: #{vit_forward.1} parent=95 // pred_check
          %p581 = pneg %p50
        $region98: #{vit_forward.1} parent=95 // pred_check_branch
          %583 = sbr.rel (%p581) target = $region100
        $region99: #{vit_forward.1} parent=95 // pred_region
          %p584 = scmp.lt.s32.totalorder %s30, 1
          %s585 = scalar_select %p584, %s30, 1
          %s586 = smul.addr %s585, 2
          %s587 = smul.addr %s586, 8
          %s588 = scalar_lea.vmem %s0, %s587
        $region100: #{vit_forward.1} parent=95 // pred_fallthru
          _
      $region96: #{vit_forward.1} parent=5 // pred_fallthru
        _
      %p589 = scmp.le.s32.totalorder 1, %s30
      %p590 = scmp.lt.s32.totalorder %s30, 3
      %p591 = pnand %p589, %p590
      %p592 = pneg %p591
      // Predicated region
      $region101: #{vit_forward.1} parent=5 // pred_check
        _
      $region102: #{vit_forward.1} parent=5 // pred_check_branch
        %594 = sbr.rel (%p591) target = $region104
      $region103: #{vit_forward.1} parent=5 // pred_region
        %s595 = ssub.s32 %s30, 1
        %p596 = scmp.lt.s32.totalorder %s35, 1
        %s597 = scalar_select %p596, %s35, 1
        %s598 = smul.addr %s597, 2
        %s599 = smul.addr %s598, 8
        %s600 = scalar_lea.vmem %s0, %s599
        %p601 = pneg %p56
        %p602 = pneg %p53
        %p603 = pneg %p77
        %p604 = pneg %p74
        %p605 = pneg %p98
        %p606 = pneg %p95
        %p607 = pneg %p119
        %p608 = pneg %p116
        %p609 = pneg %p140
        %p610 = pneg %p137
        %p611 = pneg %p161
        %p612 = pneg %p158
        %p613 = pneg %p182
        %p614 = pneg %p179
        %p615 = pneg %p203
        %p616 = pneg %p200
        %p617 = pneg %p224
        %p618 = pneg %p221
        %p619 = pneg %p245
        %p620 = pneg %p242
        %p621 = pneg %p266
        %p622 = pneg %p263
        %p623 = pneg %p287
        %p624 = pneg %p284
        %p625 = pneg %p308
        %p626 = pneg %p305
        %p627 = pneg %p329
        %p628 = pneg %p326
        %p629 = pneg %p350
        %p630 = pneg %p347
        %p631 = pneg %p371
        %p632 = pneg %p368
        %p633 = pneg %p392
        %p634 = pneg %p389
        %p635 = pneg %p413
        %p636 = pneg %p410
        %p637 = pneg %p434
        %p638 = pneg %p431
        %p639 = pneg %p455
        %p640 = pneg %p452
        %p641 = pneg %p476
        %p642 = pneg %p473
        %p643 = pneg %p502
        %p644 = pneg %p499
        %s645 = sand.u32 %s489, 1
        %s646 = scalar_lea.sflag [#allocation3], %s645
        %s647 = sand.u32 %s489, 1
        %s648 = scalar_lea.vmem [#allocation2], %s647
        %p649 = scmp.lt.s32.totalorder %s35, 1
        %s650 = scalar_select %p649, %s35, 1
        %s651 = smul.addr %s650, 2
        %s652 = smul.addr %s651, 8
        %s653 = scalar_lea.vmem %s0, %s652
        %v654 = vld [vmem:[%s653] sm:$0xff]
        %v655 = vld [vmem:[%s653 + $0x8] sm:$0xff]
        %v656 = vld [vmem:[%s1] sm:$0xff]
        %v657 = vld [vmem:[%s1 + $0x8] sm:$0xff]
        %v658 = vld [vmem:[%s1 + $0x10] sm:$0xff]
        %v659 = vld [vmem:[%s1 + $0x18] sm:$0xff]
        %v660 = vld [vmem:[%s1 + $0x20] sm:$0xff]
        %v661 = vld [vmem:[%s1 + $0x28] sm:$0xff]
        %v662 = vld [vmem:[%s1 + $0x30] sm:$0xff]
        %v663 = vld [vmem:[%s1 + $0x38] sm:$0xff]
        %v664 = vld [vmem:[%s2] sm:$0x1]
        %v666 = vlaneseq
        %v667 = vshrl.u32 %v666, 7
        %v668 = vsub.s32 0, %v667
        %v669 = vrot.slane %v664, %v668
        %vm671 = vcmask 523264
        %v673 = vsel %vm671, %v654, 0
        %v676 = vsel %vm671, %v655, 0
        %678 = vmatprep.subr.mxu0 0.0
        %679 = vmatpush1.msra.mxu0 %v656
        %680 = vmatprep.subr.mxu0 0.0
        %681 = vmatpush1.msra.mxu0 %v657
        %682 = vmatprep.subr.mxu0 0.0
        %683 = vmatpush1.msra.mxu0 %v658
        %684 = vmatprep.subr.mxu0 0.0
        %685 = vmatpush1.msra.mxu0 %v659
        %686 = vmatprep.subr.mxu0 0.0
        %687 = vmatpush1.msra.mxu0 %v660
        %688 = vmatprep.subr.mxu0 0.0
        %689 = vmatpush1.msra.mxu0 %v661
        %690 = vmatprep.subr.mxu0 0.0
        %691 = vmatpush1.msra.mxu0 %v662
        %692 = vmatprep.subr.mxu0 0.0
        %693 = vmatpush1.msra.mxu0 %v663
        %694 = vmatprep.subr.mxu0 0.0
        %695 = vmatpush1.msra.mxu0 0.0
        %696 = vmatprep.subr.mxu0 0.0
        %697 = vmatpush1.msra.mxu0 0.0
        %698 = vmatprep.subr.mxu0 0.0
        %699 = vmatpush1.msra.mxu0 0.0
        %700 = vmatprep.subr.mxu0 0.0
        %701 = vmatpush1.msra.mxu0 0.0
        %702 = vmatprep.subr.mxu0 0.0
        %703 = vmatpush1.msra.mxu0 0.0
        %704 = vmatprep.subr.mxu0 0.0
        %705 = vmatpush1.msra.mxu0 0.0
        %706 = vmatprep.subr.mxu0 0.0
        %707 = vmatpush1.msra.mxu0 0.0
        %708 = vmatprep.subr.mxu0 0.0
        %709 = vmatpush1.msra.mxu0 0.0
        %710 = vmatprep.subr.mxu0 0.0
        %711 = vmatpush1.msra.mxu0 0.0
        %712 = vmatprep.subr.mxu0 0.0
        %713 = vmatpush1.msra.mxu0 0.0
        %714 = vmatprep.subr.mxu0 0.0
        %715 = vmatpush1.msra.mxu0 0.0
        %716 = vmatprep.subr.mxu0 0.0
        %717 = vmatpush1.msra.mxu0 0.0
        %718 = vmatprep.subr.mxu0 0.0
        %719 = vmatpush1.msra.mxu0 0.0
        %720 = vmatprep.subr.mxu0 0.0
        %721 = vmatpush1.msra.mxu0 0.0
        %722 = vmatprep.subr.mxu0 0.0
        %723 = vmatpush1.msra.mxu0 0.0
        %724 = vmatprep.subr.mxu0 0.0
        %725 = vmatpush1.msra.mxu0 0.0
        %726 = vmatprep.subr.mxu0 0.0
        %727 = vmatpush1.msra.mxu0 0.0
        %728 = vmatprep.subr.mxu0 0.0
        %729 = vmatpush1.msra.mxu0 0.0
        %730 = vmatprep.subr.mxu0 0.0
        %731 = vmatpush1.msra.mxu0 0.0
        %732 = vmatprep.subr.mxu0 0.0
        %733 = vmatpush1.msra.mxu0 0.0
        %734 = vmatprep.subr.mxu0 0.0
        %735 = vmatpush1.msra.mxu0 0.0
        %736 = vmatprep.subr.mxu0 0.0
        %737 = vmatpush1.msra.mxu0 0.0
        %738 = vmatprep.subr.mxu0 0.0
        %739 = vmatpush1.msra.mxu0 0.0
        %740 = vmatprep.subr.mxu0 0.0
        %741 = vmatpush1.msra.mxu0 0.0
        %742 = vmatprep.mubr.f32.mxu0 0.0
        %743 = vmatmul.mubr.f32.gmra.mrb[0].mxu0 %v673
        %v744 = vpop.f32.mrb[0].mxu0
        %v745 = vadd.f32 %v669, %v744
        %v746 = vpop.f32.mrb[0].mxu0
        %747 = vmatprep.mubr.f32.mxu0 0.0
        %748 = vmatmul.mubr.f32.gmra.mrb[0].mxu0 %v676
        %v749 = vpop.f32.mrb[0].mxu0
        %v750 = vadd.f32 %v669, %v749
        %v751 = vpop.f32.mrb[0].mxu0
        %752 = vdwg.mxu0
        %v753 = vld [vmem:[%s3] sm:$0x1]
        %vm756 = vcmask 1040384
        %v757 = vrot.slane %v745, 7
        %v758 = vrot.slane %v750, 7
        %v759 = vsel %vm756, %v757, %v758
        %v763 = vsel %vm756, %v753, %v757
        %v764 = vld [vmem:[%s4] sm:$0xff]
        %v765 = vld [vmem:[%s4 + $0x8] sm:$0xff]
        %v766 = vld [vmem:[%s4 + $0x10] sm:$0x1]
        %v767 = vadd.f32 %v763, %v764
        %v768 = vadd.f32 %v759, %v765
        %v769 = vadd.f32 %v758, %v766
        %v770 = vld [vmem:[%s5] sm:$0x1]
        %v771 = vld [vmem:[%s6] sm:$0x1]
        %vm772 = vcmask 261120
        %v773 = vsel %vm772, %v767, 0.0
        %774 = vadd.xlane.f32.xlu0 %v773
        %v775 = vpop.xlane.xlu0 %774
        %v776 = vsel %vm772, %v768, 0.0
        %777 = vadd.xlane.f32.xlu0 %v776
        %v778 = vpop.xlane.xlu0 %777
        %vm779 = vcmask 253952
        %v780 = vsel %vm779, %v769, 0.0
        %781 = vadd.xlane.f32.xlu0 %v780
        %v782 = vpop.xlane.xlu0 %781
        %v783 = vrcp.pop 32.0
        %v784 = vmul.f32 %v775, %v783
        %v785 = vmul.f32 %v778, %v783
        %v786 = vmul.f32 %v782, %v783
        %v787 = vsub.f32 %v767, %v784
        %v788 = vsub.f32 %v768, %v785
        %v789 = vsub.f32 %v769, %v786
        %v790 = vmul.f32 %v787, %v787
        %v791 = vmul.f32 %v788, %v788
        %v792 = vmul.f32 %v789, %v789
        %v793 = vsel %vm772, %v790, 0.0
        %794 = vadd.xlane.f32.xlu0 %v793
        %v795 = vpop.xlane.xlu0 %794
        %v796 = vsel %vm772, %v791, 0.0
        %797 = vadd.xlane.f32.xlu0 %v796
        %v798 = vpop.xlane.xlu0 %797
        %v799 = vsel %vm779, %v792, 0.0
        %800 = vadd.xlane.f32.xlu0 %v799
        %v801 = vpop.xlane.xlu0 %800
        %v802 = vmul.f32 %v795, %v783
        %v803 = vmul.f32 %v798, %v783
        %v804 = vmul.f32 %v801, %v783
        %v805 = vadd.f32 %v802, 1e-05
        %v806 = vadd.f32 %v803, 1e-05
        %v807 = vadd.f32 %v804, 1e-05
        %v808 = vrsqrt.pop %v805
        %v809 = vrsqrt.pop %v806
        %v810 = vrsqrt.pop %v807
        %v811 = vmul.f32 %v787, %v808
        %v812 = vmul.f32 %v788, %v809
        %v813 = vmul.f32 %v789, %v810
        %v815 = vlaneseq
        %v816 = vshrl.u32 %v815, 7
        %v817 = vsub.s32 0, %v816
        %v818 = vrot.slane %v770, %v817
        %v820 = vmul.f32 %v811, %v818
        %v821 = vmul.f32 %v812, %v818
        %v822 = vmul.f32 %v813, %v818
        %v824 = vlaneseq
        %v825 = vshrl.u32 %v824, 7
        %v826 = vsub.s32 0, %v825
        %v827 = vrot.slane %v771, %v826
        %v829 = vadd.f32 %v820, %v827
        %v830 = vadd.f32 %v821, %v827
        %v831 = vadd.f32 %v822, %v827
        %v832 = vld [vmem:[%s7] sm:$0xff]
        %v833 = vld [vmem:[%s7 + $0x8] sm:$0xff]
        %v834 = vld [vmem:[%s7 + $0x10] sm:$0xff]
        %v835 = vld [vmem:[%s7 + $0x18] sm:$0xff]
        %v836 = vld [vmem:[%s8] sm:$0x1]
        %v838 = vlaneseq
        %v839 = vshrl.u32 %v838, 7
        %v840 = vsub.s32 0, %v839
        %v841 = vrot.slane %v836, %v840
        %v844 = vsel %vm772, %v829, 0
        %v847 = vsel %vm772, %v830, 0
        %v850 = vsel %vm772, %v831, 0
        %852 = vmatprep.subr.mxu0 0.0
        %853 = vmatpush1.msra.mxu0 %v832
        %854 = vmatprep.subr.mxu0 0.0
        %855 = vmatpush1.msra.mxu0 %v833
        %856 = vmatprep.subr.mxu0 0.0
        %857 = vmatpush1.msra.mxu0 %v834
        %858 = vmatprep.subr.mxu0 0.0
        %859 = vmatpush1.msra.mxu0 %v835
        %860 = vmatprep.subr.mxu0 0.0
        %861 = vmatpush1.msra.mxu0 0.0
        %862 = vmatprep.subr.mxu0 0.0
        %863 = vmatpush1.msra.mxu0 0.0
        %864 = vmatprep.subr.mxu0 0.0
        %865 = vmatpush1.msra.mxu0 0.0
        %866 = vmatprep.subr.mxu0 0.0
        %867 = vmatpush1.msra.mxu0 0.0
        %868 = vmatprep.subr.mxu0 0.0
        %869 = vmatpush1.msra.mxu0 0.0
        %870 = vmatprep.subr.mxu0 0.0
        %871 = vmatpush1.msra.mxu0 0.0
        %872 = vmatprep.subr.mxu0 0.0
        %873 = vmatpush1.msra.mxu0 0.0
        %874 = vmatprep.subr.mxu0 0.0
        %875 = vmatpush1.msra.mxu0 0.0
        %876 = vmatprep.subr.mxu0 0.0
        %877 = vmatpush1.msra.mxu0 0.0
        %878 = vmatprep.subr.mxu0 0.0
        %879 = vmatpush1.msra.mxu0 0.0
        %880 = vmatprep.subr.mxu0 0.0
        %881 = vmatpush1.msra.mxu0 0.0
        %882 = vmatprep.subr.mxu0 0.0
        %883 = vmatpush1.msra.mxu0 0.0
        %884 = vmatprep.subr.mxu0 0.0
        %885 = vmatpush1.msra.mxu0 0.0
        %886 = vmatprep.subr.mxu0 0.0
        %887 = vmatpush1.msra.mxu0 0.0
        %888 = vmatprep.subr.mxu0 0.0
        %889 = vmatpush1.msra.mxu0 0.0
        %890 = vmatprep.subr.mxu0 0.0
        %891 = vmatpush1.msra.mxu0 0.0
        %892 = vmatprep.subr.mxu0 0.0
        %893 = vmatpush1.msra.mxu0 0.0
        %894 = vmatprep.subr.mxu0 0.0
        %895 = vmatpush1.msra.mxu0 0.0
        %896 = vmatprep.subr.mxu0 0.0
        %897 = vmatpush1.msra.mxu0 0.0
        %898 = vmatprep.subr.mxu0 0.0
        %899 = vmatpush1.msra.mxu0 0.0
        %900 = vmatprep.subr.mxu0 0.0
        %901 = vmatpush1.msra.mxu0 0.0
        %902 = vmatprep.subr.mxu0 0.0
        %903 = vmatpush1.msra.mxu0 0.0
        %904 = vmatprep.subr.mxu0 0.0
        %905 = vmatpush1.msra.mxu0 0.0
        %906 = vmatprep.subr.mxu0 0.0
        %907 = vmatpush1.msra.mxu0 0.0
        %908 = vmatprep.subr.mxu0 0.0
        %909 = vmatpush1.msra.mxu0 0.0
        %910 = vmatprep.subr.mxu0 0.0
        %911 = vmatpush1.msra.mxu0 0.0
        %912 = vmatprep.subr.mxu0 0.0
        %913 = vmatpush1.msra.mxu0 0.0
        %914 = vmatprep.subr.mxu0 0.0
        %915 = vmatpush1.msra.mxu0 0.0
        %916 = vmatprep.mubr.f32.mxu0 0.0
        %917 = vmatmul.mubr.f32.gmra.mrb[0].mxu0 %v844
        %v918 = vpop.f32.mrb[0].mxu0
        %v919 = vadd.f32 %v841, %v918
        %v920 = vpop.f32.mrb[0].mxu0
        %921 = vmatprep.mubr.f32.mxu0 0.0
        %922 = vmatmul.mubr.f32.gmra.mrb[0].mxu0 %v847
        %v923 = vpop.f32.mrb[0].mxu0
        %v924 = vadd.f32 %v841, %v923
        %v925 = vpop.f32.mrb[0].mxu0
        %926 = vmatprep.mubr.f32.mxu0 0.0
        %927 = vmatmul.mubr.f32.gmra.mrb[0].mxu0 %v850
        %v928 = vpop.f32.mrb[0].mxu0
        %v929 = vadd.f32 %v841, %v928
        %v930 = vpop.f32.mrb[0].mxu0
        %931 = vdwg.mxu0
        %v932 = vld [vmem:[%s9] sm:$0xff]
        %v933 = vld [vmem:[%s9 + $0x8] sm:$0xff]
        %v934 = vld [vmem:[%s9 + $0x10] sm:$0xff]
        %v935 = vld [vmem:[%s9 + $0x18] sm:$0xff]
        %939 = vrot.lane.b32.xlu0 %v919, 96
        %v940 = vpop.permute.xlu0 %939
        %941 = vrot.lane.b32.xlu0 %v924, 96
        %v942 = vpop.permute.xlu0 %941
        %943 = vrot.lane.b32.xlu0 %v929, 96
        %v944 = vpop.permute.xlu0 %943
        %vm945 = vcmask 130048
        %v946 = vsel %vm945, %v919, 0
        %v948 = vsel %vm945, %v924, 0
        %v950 = vsel %vm945, %v929, 0
        %v952 = vsel %vm945, %v940, 0
        %v954 = vsel %vm945, %v942, 0
        %v956 = vsel %vm945, %v944, 0
        %958 = vmatprep.subr.mxu0 0.0
        %959 = vmatpush1.xpose.msra.mxu0 %v952
        %960 = vmatprep.subr.mxu0 0.0
        %961 = vmatpush1.xpose.msra.mxu0 %v954
        %962 = vmatprep.subr.mxu0 0.0
        %963 = vmatpush1.xpose.msra.mxu0 %v956
        %964 = vmatprep.subr.mxu0 0.0
        %965 = vmatpush1.xpose.msra.mxu0 0.0
        %966 = vmatprep.subr.mxu0 0.0
        %967 = vmatpush1.xpose.msra.mxu0 0.0
        %968 = vmatprep.subr.mxu0 0.0
        %969 = vmatpush1.xpose.msra.mxu0 0.0
        %970 = vmatprep.subr.mxu0 0.0
        %971 = vmatpush1.xpose.msra.mxu0 0.0
        %972 = vmatprep.subr.mxu0 0.0
        %973 = vmatpush1.xpose.msra.mxu0 0.0
        %974 = vmatprep.subr.mxu0 0.0
        %975 = vmatpush1.xpose.msra.mxu0 0.0
        %976 = vmatprep.subr.mxu0 0.0
        %977 = vmatpush1.xpose.msra.mxu0 0.0
        %978 = vmatprep.subr.mxu0 0.0
        %979 = vmatpush1.xpose.msra.mxu0 0.0
        %980 = vmatprep.subr.mxu0 0.0
        %981 = vmatpush1.xpose.msra.mxu0 0.0
        %982 = vmatprep.subr.mxu0 0.0
        %983 = vmatpush1.xpose.msra.mxu0 0.0
        %984 = vmatprep.subr.mxu0 0.0
        %985 = vmatpush1.xpose.msra.mxu0 0.0
        %986 = vmatprep.subr.mxu0 0.0
        %987 = vmatpush1.xpose.msra.mxu0 0.0
        %988 = vmatprep.subr.mxu0 0.0
        %989 = vmatpush1.xpose.msra.mxu0 0.0
        %990 = vmatprep.subr.mxu0 0.0
        %991 = vmatpush1.xpose.msra.mxu0 0.0
        %992 = vmatprep.subr.mxu0 0.0
        %993 = vmatpush1.xpose.msra.mxu0 0.0
        %994 = vmatprep.subr.mxu0 0.0
        %995 = vmatpush1.xpose.msra.mxu0 0.0
        %996 = vmatprep.subr.mxu0 0.0
        %997 = vmatpush1.xpose.msra.mxu0 0.0
        %998 = vmatprep.subr.mxu0 0.0
        %999 = vmatpush1.xpose.msra.mxu0 0.0
        %1000 = vmatprep.subr.mxu0 0.0
        %1001 = vmatpush1.xpose.msra.mxu0 0.0
        %1002 = vmatprep.subr.mxu0 0.0
        %1003 = vmatpush1.xpose.msra.mxu0 0.0
        %1004 = vmatprep.subr.mxu0 0.0
        %1005 = vmatpush1.xpose.msra.mxu0 0.0
        %1006 = vmatprep.subr.mxu0 0.0
        %1007 = vmatpush1.xpose.msra.mxu0 0.0
        %1008 = vmatprep.subr.mxu0 0.0
        %1009 = vmatpush1.xpose.msra.mxu0 0.0
        %1010 = vmatprep.subr.mxu0 0.0
        %1011 = vmatpush1.xpose.msra.mxu0 0.0
        %1012 = vmatprep.subr.mxu0 0.0
        %1013 = vmatpush1.xpose.msra.mxu0 0.0
        %1014 = vmatprep.subr.mxu0 0.0
        %1015 = vmatpush1.xpose.msra.mxu0 0.0
        %1016 = vmatprep.subr.mxu0 0.0
        %1017 = vmatpush1.xpose.msra.mxu0 0.0
        %1018 = vmatprep.subr.mxu0 0.0
        %1019 = vmatpush1.xpose.msra.mxu0 0.0
        %1020 = vmatprep.subr.mxu0 0.0
        %1021 = vmatpush1.xpose.msra.mxu0 0.0
        %1022 = vmatprep.mubr.f32.mxu0 0.0
        %1023 = vmatmul.mubr.f32.gmra.mrb[0].mxu0 %v946
        %v1024 = vpop.f32.mrb[0].mxu0
        %v1025 = vadd.f32 0.0, %v1024
        %v1026 = vpop.f32.mrb[0].mxu0
        %1027 = vmatprep.mubr.f32.mxu0 0.0
        %1028 = vmatmul.mubr.f32.gmra.mrb[0].mxu0 %v948
        %v1029 = vpop.f32.mrb[0].mxu0
        %v1030 = vadd.f32 0.0, %v1029
        %v1031 = vpop.f32.mrb[0].mxu0
        %1032 = vmatprep.mubr.f32.mxu0 0.0
        %1033 = vmatmul.mubr.f32.gmra.mrb[0].mxu0 %v950
        %v1034 = vpop.f32.mrb[0].mxu0
        %v1035 = vadd.f32 0.0, %v1034
        %v1036 = vpop.f32.mrb[0].mxu0
        %1037 = vdwg.mxu0
        %vm1038 = vcmask 138240
        %v1039 = vsel %vm1038, %v1025, -inf
        %1040 = vmax.xlane.f32.xlu0 %v1039
        %v1041 = vpop.xlane.xlu0 %1040
        %v1042 = vsel %vm1038, %v1030, -inf
        %1043 = vmax.xlane.f32.xlu0 %v1042
        %v1044 = vpop.xlane.xlu0 %1043
        %vm1045 = vcmask 131072
        %v1046 = vsel %vm1045, %v1035, -inf
        %1047 = vmax.xlane.f32.xlu0 %v1046
        %v1048 = vpop.xlane.xlu0 %1047
        %v1049 = vsub.f32 %v1025, %v1041
        %v1050 = vsub.f32 %v1030, %v1044
        %v1051 = vsub.f32 %v1035, %v1048
        %v1052 = vmul.f32 %v1049, 1.442695
        %v1053 = vpow.pop %v1052
        %v1054 = vmul.f32 %v1050, 1.442695
        %v1055 = vpow.pop %v1054
        %v1056 = vmul.f32 %v1051, 1.442695
        %v1057 = vpow.pop %v1056
        %v1058 = vsel %vm1038, %v1053, 0.0
        %1059 = vadd.xlane.f32.xlu0 %v1058
        %v1060 = vpop.xlane.xlu0 %1059
        %v1061 = vsel %vm1038, %v1055, 0.0
        %1062 = vadd.xlane.f32.xlu0 %v1061
        %v1063 = vpop.xlane.xlu0 %1062
        %v1064 = vsel %vm1045, %v1057, 0.0
        %1065 = vadd.xlane.f32.xlu0 %v1064
        %v1066 = vpop.xlane.xlu0 %1065
        %v1067 = vrcp.pop %v1060
        %v1068 = vrcp.pop %v1063
        %v1069 = vrcp.pop %v1066
        %v1070 = vmul.f32 %v1053, %v1067
        %v1071 = vmul.f32 %v1055, %v1068
        %v1072 = vmul.f32 %v1057, %v1069
        %v1073 = vmul.f32 %v919, 0.25
        %v1074 = vmul.f32 %v924, 0.25
        %v1075 = vmul.f32 %v929, 0.25
        %1079 = vrot.lane.b32.xlu0 %v1073, 64
        %v1080 = vpop.permute.xlu0 %1079
        %1081 = vrot.lane.b32.xlu0 %v1074, 64
        %v1082 = vpop.permute.xlu0 %1081
        %1083 = vrot.lane.b32.xlu0 %v1075, 64
        %v1084 = vpop.permute.xlu0 %1083
        %v1088 = vsel %vm1038, %v1070, 0
        %v1091 = vsel %vm1038, %v1071, 0
        %v1094 = vsel %vm1038, %v1072, 0
        %v1096 = vsel %vm756, %v1084, 0
        %1098 = vmatprep.subr.mxu0 0.0
        %1099 = vmatpush1.msra.mxu0 %v1080
        %1100 = vmatprep.subr.mxu0 0.0
        %1101 = vmatpush1.msra.mxu0 %v1082
        %1102 = vmatprep.subr.mxu0 0.0
        %1103 = vmatpush1.msra.mxu0 %v1096
        %1104 = vmatprep.subr.mxu0 0.0
        %1105 = vmatpush1.msra.mxu0 0.0
        %1106 = vmatprep.subr.mxu0 0.0
        %1107 = vmatpush1.msra.mxu0 0.0
        %1108 = vmatprep.subr.mxu0 0.0
        %1109 = vmatpush1.msra.mxu0 0.0
        %1110 = vmatprep.subr.mxu0 0.0
        %1111 = vmatpush1.msra.mxu0 0.0
        %1112 = vmatprep.subr.mxu0 0.0
        %1113 = vmatpush1.msra.mxu0 0.0
        %1114 = vmatprep.subr.mxu0 0.0
        %1115 = vmatpush1.msra.mxu0 0.0
        %1116 = vmatprep.subr.mxu0 0.0
        %1117 = vmatpush1.msra.mxu0 0.0
        %1118 = vmatprep.subr.mxu0 0.0
        %1119 = vmatpush1.msra.mxu0 0.0
        %1120 = vmatprep.subr.mxu0 0.0
        %1121 = vmatpush1.msra.mxu0 0.0
        %1122 = vmatprep.subr.mxu0 0.0
        %1123 = vmatpush1.msra.mxu0 0.0
        %1124 = vmatprep.subr.mxu0 0.0
        %1125 = vmatpush1.msra.mxu0 0.0
        %1126 = vmatprep.subr.mxu0 0.0
        %1127 = vmatpush1.msra.mxu0 0.0
        %1128 = vmatprep.subr.mxu0 0.0
        %1129 = vmatpush1.msra.mxu0 0.0
        %1130 = vmatprep.subr.mxu0 0.0
        %1131 = vmatpush1.msra.mxu0 0.0
        %1132 = vmatprep.subr.mxu0 0.0
        %1133 = vmatpush1.msra.mxu0 0.0
        %1134 = vmatprep.subr.mxu0 0.0
        %1135 = vmatpush1.msra.mxu0 0.0
        %1136 = vmatprep.subr.mxu0 0.0
        %1137 = vmatpush1.msra.mxu0 0.0
        %1138 = vmatprep.subr.mxu0 0.0
        %1139 = vmatpush1.msra.mxu0 0.0
        %1140 = vmatprep.subr.mxu0 0.0
        %1141 = vmatpush1.msra.mxu0 0.0
        %1142 = vmatprep.subr.mxu0 0.0
        %1143 = vmatpush1.msra.mxu0 0.0
        %1144 = vmatprep.subr.mxu0 0.0
        %1145 = vmatpush1.msra.mxu0 0.0
        %1146 = vmatprep.subr.mxu0 0.0
        %1147 = vmatpush1.msra.mxu0 0.0
        %1148 = vmatprep.subr.mxu0 0.0
        %1149 = vmatpush1.msra.mxu0 0.0
        %1150 = vmatprep.subr.mxu0 0.0
        %1151 = vmatpush1.msra.mxu0 0.0
        %1152 = vmatprep.subr.mxu0 0.0
        %1153 = vmatpush1.msra.mxu0 0.0
        %1154 = vmatprep.subr.mxu0 0.0
        %1155 = vmatpush1.msra.mxu0 0.0
        %1156 = vmatprep.subr.mxu0 0.0
        %1157 = vmatpush1.msra.mxu0 0.0
        %1158 = vmatprep.subr.mxu0 0.0
        %1159 = vmatpush1.msra.mxu0 0.0
        %1160 = vmatprep.subr.mxu0 0.0
        %1161 = vmatpush1.msra.mxu0 0.0
        %1162 = vmatprep.mubr.f32.mxu0 0.0
        %1163 = vmatmul.mubr.f32.gmra.mrb[0].mxu0 %v1088
        %v1164 = vpop.f32.mrb[0].mxu0
        %v1165 = vadd.f32 0.0, %v1164
        %v1166 = vpop.f32.mrb[0].mxu0
        %1167 = vmatprep.mubr.f32.mxu0 0.0
        %1168 = vmatmul.mubr.f32.gmra.mrb[0].mxu0 %v1091
        %v1169 = vpop.f32.mrb[0].mxu0
        %v1170 = vadd.f32 0.0, %v1169
        %v1171 = vpop.f32.mrb[0].mxu0
        %1172 = vmatprep.mubr.f32.mxu0 0.0
        %1173 = vmatmul.mubr.f32.gmra.mrb[0].mxu0 %v1094
        %v1174 = vpop.f32.mrb[0].mxu0
        %v1175 = vadd.f32 0.0, %v1174
        %v1176 = vpop.f32.mrb[0].mxu0
        %1177 = vdwg.mxu0
        %1178 = vrot.lane.b32.xlu0 %v919, 112
        %v1179 = vpop.permute.xlu0 %1178
        %1180 = vrot.lane.b32.xlu0 %v924, 112
        %v1181 = vpop.permute.xlu0 %1180
        %1182 = vrot.lane.b32.xlu0 %v929, 112
        %v1183 = vpop.permute.xlu0 %1182
        %1184 = vrot.lane.b32.xlu0 %v919, 80
        %v1185 = vpop.permute.xlu0 %1184
        %1186 = vrot.lane.b32.xlu0 %v924, 80
        %v1187 = vpop.permute.xlu0 %1186
        %1188 = vrot.lane.b32.xlu0 %v929, 80
        %v1189 = vpop.permute.xlu0 %1188
        %v1190 = vsel %vm945, %v1179, 0
        %v1192 = vsel %vm945, %v1181, 0
        %v1194 = vsel %vm945, %v1183, 0
        %v1196 = vsel %vm945, %v1185, 0
        %v1198 = vsel %vm945, %v1187, 0
        %v1200 = vsel %vm945, %v1189, 0
        %1202 = vmatprep.subr.mxu0 0.0
        %1203 = vmatpush1.xpose.msra.mxu0 %v1196
        %1204 = vmatprep.subr.mxu0 0.0
        %1205 = vmatpush1.xpose.msra.mxu0 %v1198
        %1206 = vmatprep.subr.mxu0 0.0
        %1207 = vmatpush1.xpose.msra.mxu0 %v1200
        %1208 = vmatprep.subr.mxu0 0.0
        %1209 = vmatpush1.xpose.msra.mxu0 0.0
        %1210 = vmatprep.subr.mxu0 0.0
        %1211 = vmatpush1.xpose.msra.mxu0 0.0
        %1212 = vmatprep.subr.mxu0 0.0
        %1213 = vmatpush1.xpose.msra.mxu0 0.0
        %1214 = vmatprep.subr.mxu0 0.0
        %1215 = vmatpush1.xpose.msra.mxu0 0.0
        %1216 = vmatprep.subr.mxu0 0.0
        %1217 = vmatpush1.xpose.msra.mxu0 0.0
        %1218 = vmatprep.subr.mxu0 0.0
        %1219 = vmatpush1.xpose.msra.mxu0 0.0
        %1220 = vmatprep.subr.mxu0 0.0
        %1221 = vmatpush1.xpose.msra.mxu0 0.0
        %1222 = vmatprep.subr.mxu0 0.0
        %1223 = vmatpush1.xpose.msra.mxu0 0.0
        %1224 = vmatprep.subr.mxu0 0.0
        %1225 = vmatpush1.xpose.msra.mxu0 0.0
        %1226 = vmatprep.subr.mxu0 0.0
        %1227 = vmatpush1.xpose.msra.mxu0 0.0
        %1228 = vmatprep.subr.mxu0 0.0
        %1229 = vmatpush1.xpose.msra.mxu0 0.0
        %1230 = vmatprep.subr.mxu0 0.0
        %1231 = vmatpush1.xpose.msra.mxu0 0.0
        %1232 = vmatprep.subr.mxu0 0.0
        %1233 = vmatpush1.xpose.msra.mxu0 0.0
        %1234 = vmatprep.subr.mxu0 0.0
        %1235 = vmatpush1.xpose.msra.mxu0 0.0
        %1236 = vmatprep.subr.mxu0 0.0
        %1237 = vmatpush1.xpose.msra.mxu0 0.0
        %1238 = vmatprep.subr.mxu0 0.0
        %1239 = vmatpush1.xpose.msra.mxu0 0.0
        %1240 = vmatprep.subr.mxu0 0.0
        %1241 = vmatpush1.xpose.msra.mxu0 0.0
        %1242 = vmatprep.subr.mxu0 0.0
        %1243 = vmatpush1.xpose.msra.mxu0 0.0
        %1244 = vmatprep.subr.mxu0 0.0
        %1245 = vmatpush1.xpose.msra.mxu0 0.0
        %1246 = vmatprep.subr.mxu0 0.0
        %1247 = vmatpush1.xpose.msra.mxu0 0.0
        %1248 = vmatprep.subr.mxu0 0.0
        %1249 = vmatpush1.xpose.msra.mxu0 0.0
        %1250 = vmatprep.subr.mxu0 0.0
        %1251 = vmatpush1.xpose.msra.mxu0 0.0
        %1252 = vmatprep.subr.mxu0 0.0
        %1253 = vmatpush1.xpose.msra.mxu0 0.0
        %1254 = vmatprep.subr.mxu0 0.0
        %1255 = vmatpush1.xpose.msra.mxu0 0.0
        %1256 = vmatprep.subr.mxu0 0.0
        %1257 = vmatpush1.xpose.msra.mxu0 0.0
        %1258 = vmatprep.subr.mxu0 0.0
        %1259 = vmatpush1.xpose.msra.mxu0 0.0
        %1260 = vmatprep.subr.mxu0 0.0
        %1261 = vmatpush1.xpose.msra.mxu0 0.0
        %1262 = vmatprep.subr.mxu0 0.0
        %1263 = vmatpush1.xpose.msra.mxu0 0.0
        %1264 = vmatprep.subr.mxu0 0.0
        %1265 = vmatpush1.xpose.msra.mxu0 0.0
        %1266 = vmatprep.mubr.f32.mxu0 0.0
        %1267 = vmatmul.mubr.f32.gmra.mrb[0].mxu0 %v1190
        %v1268 = vpop.f32.mrb[0].mxu0
        %v1269 = vadd.f32 0.0, %v1268
        %v1270 = vpop.f32.mrb[0].mxu0
        %1271 = vmatprep.mubr.f32.mxu0 0.0
        %1272 = vmatmul.mubr.f32.gmra.mrb[0].mxu0 %v1192
        %v1273 = vpop.f32.mrb[0].mxu0
        %v1274 = vadd.f32 0.0, %v1273
        %v1275 = vpop.f32.mrb[0].mxu0
        %1276 = vmatprep.mubr.f32.mxu0 0.0
        %1277 = vmatmul.mubr.f32.gmra.mrb[0].mxu0 %v1194
        %v1278 = vpop.f32.mrb[0].mxu0
        %v1279 = vadd.f32 0.0, %v1278
        %v1280 = vpop.f32.mrb[0].mxu0
        %1281 = vdwg.mxu0
        %v1282 = vsel %vm1038, %v1269, -inf
        %1283 = vmax.xlane.f32.xlu0 %v1282
        %v1284 = vpop.xlane.xlu0 %1283
        %v1285 = vsel %vm1038, %v1274, -inf
        %1286 = vmax.xlane.f32.xlu0 %v1285
        %v1287 = vpop.xlane.xlu0 %1286
        %v1288 = vsel %vm1045, %v1279, -inf
        %1289 = vmax.xlane.f32.xlu0 %v1288
        %v1290 = vpop.xlane.xlu0 %1289
        %v1291 = vsub.f32 %v1269, %v1284
        %v1292 = vsub.f32 %v1274, %v1287
        %v1293 = vsub.f32 %v1279, %v1290
        %v1294 = vmul.f32 %v1291, 1.442695
        %v1295 = vpow.pop %v1294
        %v1296 = vmul.f32 %v1292, 1.442695
        %v1297 = vpow.pop %v1296
        %v1298 = vmul.f32 %v1293, 1.442695
        %v1299 = vpow.pop %v1298
        %v1300 = vsel %vm1038, %v1295, 0.0
        %1301 = vadd.xlane.f32.xlu0 %v1300
        %v1302 = vpop.xlane.xlu0 %1301
        %v1303 = vsel %vm1038, %v1297, 0.0
        %1304 = vadd.xlane.f32.xlu0 %v1303
        %v1305 = vpop.xlane.xlu0 %1304
        %v1306 = vsel %vm1045, %v1299, 0.0
        %1307 = vadd.xlane.f32.xlu0 %v1306
        %v1308 = vpop.xlane.xlu0 %1307
        %v1309 = vrcp.pop %v1302
        %v1310 = vrcp.pop %v1305
        %v1311 = vrcp.pop %v1308
        %v1312 = vmul.f32 %v1295, %v1309
        %v1313 = vmul.f32 %v1297, %v1310
        %v1314 = vmul.f32 %v1299, %v1311
        %1315 = vrot.lane.b32.xlu0 %v1073, 48
        %v1316 = vpop.permute.xlu0 %1315
        %1317 = vrot.lane.b32.xlu0 %v1074, 48
        %v1318 = vpop.permute.xlu0 %1317
        %1319 = vrot.lane.b32.xlu0 %v1075, 48
        %v1320 = vpop.permute.xlu0 %1319
        %v1324 = vsel %vm1038, %v1312, 0
        %v1327 = vsel %vm1038, %v1313, 0
        %v1330 = vsel %vm1038, %v1314, 0
        %v1332 = vsel %vm756, %v1320, 0
        %1334 = vmatprep.subr.mxu0 0.0
        %1335 = vmatpush1.msra.mxu0 %v1316
        %1336 = vmatprep.subr.mxu0 0.0
        %1337 = vmatpush1.msra.mxu0 %v1318
        %1338 = vmatprep.subr.mxu0 0.0
        %1339 = vmatpush1.msra.mxu0 %v1332
        %1340 = vmatprep.subr.mxu0 0.0
        %1341 = vmatpush1.msra.mxu0 0.0
        %1342 = vmatprep.subr.mxu0 0.0
        %1343 = vmatpush1.msra.mxu0 0.0
        %1344 = vmatprep.subr.mxu0 0.0
        %1345 = vmatpush1.msra.mxu0 0.0
        %1346 = vmatprep.subr.mxu0 0.0
        %1347 = vmatpush1.msra.mxu0 0.0
        %1348 = vmatprep.subr.mxu0 0.0
        %1349 = vmatpush1.msra.mxu0 0.0
        %1350 = vmatprep.subr.mxu0 0.0
        %1351 = vmatpush1.msra.mxu0 0.0
        %1352 = vmatprep.subr.mxu0 0.0
        %1353 = vmatpush1.msra.mxu0 0.0
        %1354 = vmatprep.subr.mxu0 0.0
        %1355 = vmatpush1.msra.mxu0 0.0
        %1356 = vmatprep.subr.mxu0 0.0
        %1357 = vmatpush1.msra.mxu0 0.0
        %1358 = vmatprep.subr.mxu0 0.0
        %1359 = vmatpush1.msra.mxu0 0.0
        %1360 = vmatprep.subr.mxu0 0.0
        %1361 = vmatpush1.msra.mxu0 0.0
        %1362 = vmatprep.subr.mxu0 0.0
        %1363 = vmatpush1.msra.mxu0 0.0
        %1364 = vmatprep.subr.mxu0 0.0
        %1365 = vmatpush1.msra.mxu0 0.0
        %1366 = vmatprep.subr.mxu0 0.0
        %1367 = vmatpush1.msra.mxu0 0.0
        %1368 = vmatprep.subr.mxu0 0.0
        %1369 = vmatpush1.msra.mxu0 0.0
        %1370 = vmatprep.subr.mxu0 0.0
        %1371 = vmatpush1.msra.mxu0 0.0
        %1372 = vmatprep.subr.mxu0 0.0
        %1373 = vmatpush1.msra.mxu0 0.0
        %1374 = vmatprep.subr.mxu0 0.0
        %1375 = vmatpush1.msra.mxu0 0.0
        %1376 = vmatprep.subr.mxu0 0.0
        %1377 = vmatpush1.msra.mxu0 0.0
        %1378 = vmatprep.subr.mxu0 0.0
        %1379 = vmatpush1.msra.mxu0 0.0
        %1380 = vmatprep.subr.mxu0 0.0
        %1381 = vmatpush1.msra.mxu0 0.0
        %1382 = vmatprep.subr.mxu0 0.0
        %1383 = vmatpush1.msra.mxu0 0.0
        %1384 = vmatprep.subr.mxu0 0.0
        %1385 = vmatpush1.msra.mxu0 0.0
        %1386 = vmatprep.subr.mxu0 0.0
        %1387 = vmatpush1.msra.mxu0 0.0
        %1388 = vmatprep.subr.mxu0 0.0
        %1389 = vmatpush1.msra.mxu0 0.0
        %1390 = vmatprep.subr.mxu0 0.0
        %1391 = vmatpush1.msra.mxu0 0.0
        %1392 = vmatprep.subr.mxu0 0.0
        %1393 = vmatpush1.msra.mxu0 0.0
        %1394 = vmatprep.subr.mxu0 0.0
        %1395 = vmatpush1.msra.mxu0 0.0
        %1396 = vmatprep.subr.mxu0 0.0
        %1397 = vmatpush1.msra.mxu0 0.0
        %1398 = vmatprep.mubr.f32.mxu0 0.0
        %1399 = vmatmul.mubr.f32.gmra.mrb[0].mxu0 %v1324
        %v1400 = vpop.f32.mrb[0].mxu0
        %v1401 = vadd.f32 0.0, %v1400
        %v1402 = vpop.f32.mrb[0].mxu0
        %1403 = vmatprep.mubr.f32.mxu0 0.0
        %1404 = vmatmul.mubr.f32.gmra.mrb[0].mxu0 %v1327
        %v1405 = vpop.f32.mrb[0].mxu0
        %v1406 = vadd.f32 0.0, %v1405
        %v1407 = vpop.f32.mrb[0].mxu0
        %1408 = vmatprep.mubr.f32.mxu0 0.0
        %1409 = vmatmul.mubr.f32.gmra.mrb[0].mxu0 %v1330
        %v1410 = vpop.f32.mrb[0].mxu0
        %v1411 = vadd.f32 0.0, %v1410
        %v1412 = vpop.f32.mrb[0].mxu0
        %1413 = vdwg.mxu0
        %v1415 = vsel %vm945, %v1401, 0
        %v1418 = vsel %vm945, %v1406, 0
        %v1421 = vsel %vm945, %v1411, 0
        %1423 = vmatprep.subr.mxu0 0.0
        %1424 = vmatpush1.msra.mxu0 %v934
        %1425 = vmatprep.subr.mxu0 0.0
        %1426 = vmatpush1.msra.mxu0 %v935
        %1427 = vmatprep.subr.mxu0 0.0
        %1428 = vmatpush1.msra.mxu0 0.0
        %1429 = vmatprep.subr.mxu0 0.0
        %1430 = vmatpush1.msra.mxu0 0.0
        %1431 = vmatprep.subr.mxu0 0.0
        %1432 = vmatpush1.msra.mxu0 0.0
        %1433 = vmatprep.subr.mxu0 0.0
        %1434 = vmatpush1.msra.mxu0 0.0
        %1435 = vmatprep.subr.mxu0 0.0
        %1436 = vmatpush1.msra.mxu0 0.0
        %1437 = vmatprep.subr.mxu0 0.0
        %1438 = vmatpush1.msra.mxu0 0.0
        %1439 = vmatprep.subr.mxu0 0.0
        %1440 = vmatpush1.msra.mxu0 0.0
        %1441 = vmatprep.subr.mxu0 0.0
        %1442 = vmatpush1.msra.mxu0 0.0
        %1443 = vmatprep.subr.mxu0 0.0
        %1444 = vmatpush1.msra.mxu0 0.0
        %1445 = vmatprep.subr.mxu0 0.0
        %1446 = vmatpush1.msra.mxu0 0.0
        %1447 = vmatprep.subr.mxu0 0.0
        %1448 = vmatpush1.msra.mxu0 0.0
        %1449 = vmatprep.subr.mxu0 0.0
        %1450 = vmatpush1.msra.mxu0 0.0
        %1451 = vmatprep.subr.mxu0 0.0
        %1452 = vmatpush1.msra.mxu0 0.0
        %1453 = vmatprep.subr.mxu0 0.0
        %1454 = vmatpush1.msra.mxu0 0.0
        %1455 = vmatprep.subr.mxu0 0.0
        %1456 = vmatpush1.msra.mxu0 0.0
        %1457 = vmatprep.subr.mxu0 0.0
        %1458 = vmatpush1.msra.mxu0 0.0
        %1459 = vmatprep.subr.mxu0 0.0
        %1460 = vmatpush1.msra.mxu0 0.0
        %1461 = vmatprep.subr.mxu0 0.0
        %1462 = vmatpush1.msra.mxu0 0.0
        %1463 = vmatprep.subr.mxu0 0.0
        %1464 = vmatpush1.msra.mxu0 0.0
        %1465 = vmatprep.subr.mxu0 0.0
        %1466 = vmatpush1.msra.mxu0 0.0
        %1467 = vmatprep.subr.mxu0 0.0
        %1468 = vmatpush1.msra.mxu0 0.0
        %1469 = vmatprep.subr.mxu0 0.0
        %1470 = vmatpush1.msra.mxu0 0.0
        %1471 = vmatprep.subr.mxu0 0.0
        %1472 = vmatpush1.msra.mxu0 0.0
        %1473 = vmatprep.subr.mxu0 0.0
        %1474 = vmatpush1.msra.mxu0 0.0
        %1475 = vmatprep.subr.mxu0 0.0
        %1476 = vmatpush1.msra.mxu0 0.0
        %1477 = vmatprep.subr.mxu0 0.0
        %1478 = vmatpush1.msra.mxu0 0.0
        %1479 = vmatprep.subr.mxu0 0.0
        %1480 = vmatpush1.msra.mxu0 0.0
        %1481 = vmatprep.subr.mxu0 0.0
        %1482 = vmatpush1.msra.mxu0 0.0
        %1483 = vmatprep.subr.mxu0 0.0
        %1484 = vmatpush1.msra.mxu0 0.0
        %1485 = vmatprep.subr.mxu0 0.0
        %1486 = vmatpush1.msra.mxu0 0.0
        %1487 = vmatprep.mubr.f32.mxu0 0.0
        %1488 = vmatmul.mubr.f32.gmra.mrb[0].mxu0 %v1415
        %v1489 = vpop.f32.mrb[0].mxu0
        %v1490 = vadd.f32 0.0, %v1489
        %v1491 = vpop.f32.mrb[0].mxu0
        %1492 = vmatprep.mubr.f32.mxu0 0.0
        %1493 = vmatmul.mubr.f32.gmra.mrb[0].mxu0 %v1418
        %v1494 = vpop.f32.mrb[0].mxu0
        %v1495 = vadd.f32 0.0, %v1494
        %v1496 = vpop.f32.mrb[0].mxu0
        %1497 = vmatprep.mubr.f32.mxu0 0.0
        %1498 = vmatmul.mubr.f32.gmra.mrb[0].mxu0 %v1421
        %v1499 = vpop.f32.mrb[0].mxu0
        %v1500 = vadd.f32 0.0, %v1499
        %v1501 = vpop.f32.mrb[0].mxu0
        %1502 = vdwg.mxu0
        %v1504 = vsel %vm945, %v1165, 0
        %v1507 = vsel %vm945, %v1170, 0
        %v1510 = vsel %vm945, %v1175, 0
        %1512 = vmatprep.subr.mxu0 0.0
        %1513 = vmatpush1.msra.mxu0 %v932
        %1514 = vmatprep.subr.mxu0 0.0
        %1515 = vmatpush1.msra.mxu0 %v933
        %1516 = vmatprep.subr.mxu0 0.0
        %1517 = vmatpush1.msra.mxu0 0.0
        %1518 = vmatprep.subr.mxu0 0.0
        %1519 = vmatpush1.msra.mxu0 0.0
        %1520 = vmatprep.subr.mxu0 0.0
        %1521 = vmatpush1.msra.mxu0 0.0
        %1522 = vmatprep.subr.mxu0 0.0
        %1523 = vmatpush1.msra.mxu0 0.0
        %1524 = vmatprep.subr.mxu0 0.0
        %1525 = vmatpush1.msra.mxu0 0.0
        %1526 = vmatprep.subr.mxu0 0.0
        %1527 = vmatpush1.msra.mxu0 0.0
        %1528 = vmatprep.subr.mxu0 0.0
        %1529 = vmatpush1.msra.mxu0 0.0
        %1530 = vmatprep.subr.mxu0 0.0
        %1531 = vmatpush1.msra.mxu0 0.0
        %1532 = vmatprep.subr.mxu0 0.0
        %1533 = vmatpush1.msra.mxu0 0.0
        %1534 = vmatprep.subr.mxu0 0.0
        %1535 = vmatpush1.msra.mxu0 0.0
        %1536 = vmatprep.subr.mxu0 0.0
        %1537 = vmatpush1.msra.mxu0 0.0
        %1538 = vmatprep.subr.mxu0 0.0
        %1539 = vmatpush1.msra.mxu0 0.0
        %1540 = vmatprep.subr.mxu0 0.0
        %1541 = vmatpush1.msra.mxu0 0.0
        %1542 = vmatprep.subr.mxu0 0.0
        %1543 = vmatpush1.msra.mxu0 0.0
        %1544 = vmatprep.subr.mxu0 0.0
        %1545 = vmatpush1.msra.mxu0 0.0
        %1546 = vmatprep.subr.mxu0 0.0
        %1547 = vmatpush1.msra.mxu0 0.0
        %1548 = vmatprep.subr.mxu0 0.0
        %1549 = vmatpush1.msra.mxu0 0.0
        %1550 = vmatprep.subr.mxu0 0.0
        %1551 = vmatpush1.msra.mxu0 0.0
        %1552 = vmatprep.subr.mxu0 0.0
        %1553 = vmatpush1.msra.mxu0 0.0
        %1554 = vmatprep.subr.mxu0 0.0
        %1555 = vmatpush1.msra.mxu0 0.0
        %1556 = vmatprep.subr.mxu0 0.0
        %1557 = vmatpush1.msra.mxu0 0.0
        %1558 = vmatprep.subr.mxu0 0.0
        %1559 = vmatpush1.msra.mxu0 0.0
        %1560 = vmatprep.subr.mxu0 0.0
        %1561 = vmatpush1.msra.mxu0 0.0
        %1562 = vmatprep.subr.mxu0 0.0
        %1563 = vmatpush1.msra.mxu0 0.0
        %1564 = vmatprep.subr.mxu0 0.0
        %1565 = vmatpush1.msra.mxu0 0.0
        %1566 = vmatprep.subr.mxu0 0.0
        %1567 = vmatpush1.msra.mxu0 0.0
        %1568 = vmatprep.subr.mxu0 0.0
        %1569 = vmatpush1.msra.mxu0 0.0
        %1570 = vmatprep.subr.mxu0 0.0
        %1571 = vmatpush1.msra.mxu0 0.0
        %1572 = vmatprep.subr.mxu0 0.0
        %1573 = vmatpush1.msra.mxu0 0.0
        %1574 = vmatprep.subr.mxu0 0.0
        %1575 = vmatpush1.msra.mxu0 0.0
        %1576 = vmatprep.mubr.f32.mxu0 0.0
        %1577 = vmatmul.mubr.f32.gmra.mrb[0].mxu0 %v1504
        %v1578 = vpop.f32.mrb[0].mxu0
        %v1579 = vadd.f32 %v1490, %v1578
        %v1580 = vpop.f32.mrb[0].mxu0
        %1581 = vmatprep.mubr.f32.mxu0 0.0
        %1582 = vmatmul.mubr.f32.gmra.mrb[0].mxu0 %v1507
        %v1583 = vpop.f32.mrb[0].mxu0
        %v1584 = vadd.f32 %v1495, %v1583
        %v1585 = vpop.f32.mrb[0].mxu0
        %1586 = vmatprep.mubr.f32.mxu0 0.0
        %1587 = vmatmul.mubr.f32.gmra.mrb[0].mxu0 %v1510
        %v1588 = vpop.f32.mrb[0].mxu0
        %v1589 = vadd.f32 %v1500, %v1588
        %v1590 = vpop.f32.mrb[0].mxu0
        %1591 = vdwg.mxu0
        %v1592 = vadd.f32 %v767, %v1579
        %v1593 = vadd.f32 %v768, %v1584
        %v1594 = vadd.f32 %v769, %v1589
        %v1595 = vld [vmem:[%s10] sm:$0x1]
        %v1597 = vlaneseq
        %v1598 = vshrl.u32 %v1597, 7
        %v1599 = vsub.s32 0, %v1598
        %v1600 = vrot.slane %v1595, %v1599
        %v1602 = vadd.f32 %v1592, %v1600
        %v1603 = vadd.f32 %v1593, %v1600
        %v1604 = vadd.f32 %v1594, %v1600
        %v1605 = vld [vmem:[%s11] sm:$0x1]
        %v1606 = vld [vmem:[%s12] sm:$0x1]
        %v1607 = vsel %vm772, %v1602, 0.0
        %1608 = vadd.xlane.f32.xlu0 %v1607
        %v1609 = vpop.xlane.xlu0 %1608
        %v1610 = vsel %vm772, %v1603, 0.0
        %1611 = vadd.xlane.f32.xlu0 %v1610
        %v1612 = vpop.xlane.xlu0 %1611
        %v1613 = vsel %vm779, %v1604, 0.0
        %1614 = vadd.xlane.f32.xlu0 %v1613
        %v1615 = vpop.xlane.xlu0 %1614
        %v1616 = vmul.f32 %v1609, %v783
        %v1617 = vmul.f32 %v1612, %v783
        %v1618 = vmul.f32 %v1615, %v783
        %v1619 = vsub.f32 %v1602, %v1616
        %v1620 = vsub.f32 %v1603, %v1617
        %v1621 = vsub.f32 %v1604, %v1618
        %v1622 = vmul.f32 %v1619, %v1619
        %v1623 = vmul.f32 %v1620, %v1620
        %v1624 = vmul.f32 %v1621, %v1621
        %v1625 = vsel %vm772, %v1622, 0.0
        %1626 = vadd.xlane.f32.xlu0 %v1625
        %v1627 = vpop.xlane.xlu0 %1626
        %v1628 = vsel %vm772, %v1623, 0.0
        %1629 = vadd.xlane.f32.xlu0 %v1628
        %v1630 = vpop.xlane.xlu0 %1629
        %v1631 = vsel %vm779, %v1624, 0.0
        %1632 = vadd.xlane.f32.xlu0 %v1631
        %v1633 = vpop.xlane.xlu0 %1632
        %v1634 = vmul.f32 %v1627, %v783
        %v1635 = vmul.f32 %v1630, %v783
        %v1636 = vmul.f32 %v1633, %v783
        %v1637 = vadd.f32 %v1634, 1e-05
        %v1638 = vadd.f32 %v1635, 1e-05
        %v1639 = vadd.f32 %v1636, 1e-05
        %v1640 = vrsqrt.pop %v1637
        %v1641 = vrsqrt.pop %v1638
        %v1642 = vrsqrt.pop %v1639
        %v1643 = vmul.f32 %v1619, %v1640
        %v1644 = vmul.f32 %v1620, %v1641
        %v1645 = vmul.f32 %v1621, %v1642
        %v1647 = vlaneseq
        %v1648 = vshrl.u32 %v1647, 7
        %v1649 = vsub.s32 0, %v1648
        %v1650 = vrot.slane %v1605, %v1649
        %v1652 = vmul.f32 %v1643, %v1650
        %v1653 = vmul.f32 %v1644, %v1650
        %v1654 = vmul.f32 %v1645, %v1650
        %v1656 = vlaneseq
        %v1657 = vshrl.u32 %v1656, 7
        %v1658 = vsub.s32 0, %v1657
        %v1659 = vrot.slane %v1606, %v1658
        %v1661 = vadd.f32 %v1652, %v1659
        %v1662 = vadd.f32 %v1653, %v1659
        %v1663 = vadd.f32 %v1654, %v1659
        %v1664 = vld [vmem:[%s13] sm:$0xff]
        %v1665 = vld [vmem:[%s13 + $0x8] sm:$0xff]
        %v1666 = vld [vmem:[%s13 + $0x10] sm:$0xff]
        %v1667 = vld [vmem:[%s13 + $0x18] sm:$0xff]
        %v1668 = vld [vmem:[%s14] sm:$0x1]
        %v1670 = vlaneseq
        %v1671 = vshrl.u32 %v1670, 7
        %v1672 = vsub.s32 0, %v1671
        %v1673 = vrot.slane %v1668, %v1672
        %v1676 = vsel %vm772, %v1661, 0
        %v1679 = vsel %vm772, %v1662, 0
        %v1682 = vsel %vm772, %v1663, 0
        %1684 = vmatprep.subr.mxu0 0.0
        %1685 = vmatpush1.msra.mxu0 %v1664
        %1686 = vmatprep.subr.mxu0 0.0
        %1687 = vmatpush1.msra.mxu0 %v1665
        %1688 = vmatprep.subr.mxu0 0.0
        %1689 = vmatpush1.msra.mxu0 %v1666
        %1690 = vmatprep.subr.mxu0 0.0
        %1691 = vmatpush1.msra.mxu0 %v1667
        %1692 = vmatprep.subr.mxu0 0.0
        %1693 = vmatpush1.msra.mxu0 0.0
        %1694 = vmatprep.subr.mxu0 0.0
        %1695 = vmatpush1.msra.mxu0 0.0
        %1696 = vmatprep.subr.mxu0 0.0
        %1697 = vmatpush1.msra.mxu0 0.0
        %1698 = vmatprep.subr.mxu0 0.0
        %1699 = vmatpush1.msra.mxu0 0.0
        %1700 = vmatprep.subr.mxu0 0.0
        %1701 = vmatpush1.msra.mxu0 0.0
        %1702 = vmatprep.subr.mxu0 0.0
        %1703 = vmatpush1.msra.mxu0 0.0
        %1704 = vmatprep.subr.mxu0 0.0
        %1705 = vmatpush1.msra.mxu0 0.0
        %1706 = vmatprep.subr.mxu0 0.0
        %1707 = vmatpush1.msra.mxu0 0.0
        %1708 = vmatprep.subr.mxu0 0.0
        %1709 = vmatpush1.msra.mxu0 0.0
        %1710 = vmatprep.subr.mxu0 0.0
        %1711 = vmatpush1.msra.mxu0 0.0
        %1712 = vmatprep.subr.mxu0 0.0
        %1713 = vmatpush1.msra.mxu0 0.0
        %1714 = vmatprep.subr.mxu0 0.0
        %1715 = vmatpush1.msra.mxu0 0.0
        %1716 = vmatprep.subr.mxu0 0.0
        %1717 = vmatpush1.msra.mxu0 0.0
        %1718 = vmatprep.subr.mxu0 0.0
        %1719 = vmatpush1.msra.mxu0 0.0
        %1720 = vmatprep.subr.mxu0 0.0
        %1721 = vmatpush1.msra.mxu0 0.0
        %1722 = vmatprep.subr.mxu0 0.0
        %1723 = vmatpush1.msra.mxu0 0.0
        %1724 = vmatprep.subr.mxu0 0.0
        %1725 = vmatpush1.msra.mxu0 0.0
        %1726 = vmatprep.subr.mxu0 0.0
        %1727 = vmatpush1.msra.mxu0 0.0
        %1728 = vmatprep.subr.mxu0 0.0
        %1729 = vmatpush1.msra.mxu0 0.0
        %1730 = vmatprep.subr.mxu0 0.0
        %1731 = vmatpush1.msra.mxu0 0.0
        %1732 = vmatprep.subr.mxu0 0.0
        %1733 = vmatpush1.msra.mxu0 0.0
        %1734 = vmatprep.subr.mxu0 0.0
        %1735 = vmatpush1.msra.mxu0 0.0
        %1736 = vmatprep.subr.mxu0 0.0
        %1737 = vmatpush1.msra.mxu0 0.0
        %1738 = vmatprep.subr.mxu0 0.0
        %1739 = vmatpush1.msra.mxu0 0.0
        %1740 = vmatprep.subr.mxu0 0.0
        %1741 = vmatpush1.msra.mxu0 0.0
        %1742 = vmatprep.subr.mxu0 0.0
        %1743 = vmatpush1.msra.mxu0 0.0
        %1744 = vmatprep.subr.mxu0 0.0
        %1745 = vmatpush1.msra.mxu0 0.0
        %1746 = vmatprep.subr.mxu0 0.0
        %1747 = vmatpush1.msra.mxu0 0.0
        %1748 = vmatprep.mubr.f32.mxu0 0.0
        %1749 = vmatmul.mubr.f32.gmra.mrb[0].mxu0 %v1676
        %v1750 = vpop.f32.mrb[0].mxu0
        %v1751 = vadd.f32 %v1673, %v1750
        %v1752 = vpop.f32.mrb[0].mxu0
        %1753 = vmatprep.mubr.f32.mxu0 0.0
        %1754 = vmatmul.mubr.f32.gmra.mrb[0].mxu0 %v1679
        %v1755 = vpop.f32.mrb[0].mxu0
        %v1756 = vadd.f32 %v1673, %v1755
        %v1757 = vpop.f32.mrb[0].mxu0
        %1758 = vmatprep.mubr.f32.mxu0 0.0
        %1759 = vmatmul.mubr.f32.gmra.mrb[0].mxu0 %v1682
        %v1760 = vpop.f32.mrb[0].mxu0
        %v1761 = vadd.f32 %v1673, %v1760
        %v1762 = vpop.f32.mrb[0].mxu0
        %1763 = vdwg.mxu0
        %v1764 = vmul.f32 %v1751, 0.5
        %v1765 = vmul.f32 %v1756, 0.5
        %v1766 = vmul.f32 %v1761, 0.5
        %v1767 = vrcp.pop 1.4142135
        %v1768 = vmul.f32 %v1751, %v1767
        %v1769 = vmul.f32 %v1756, %v1767
        %v1770 = vmul.f32 %v1761, %v1767
        %v1771 = verf.f32.pop %v1768
        %v1772 = verf.f32.pop %v1769
        %v1773 = verf.f32.pop %v1770
        %v1774 = vadd.f32 %v1771, 1.0
        %v1775 = vadd.f32 %v1772, 1.0
        %v1776 = vadd.f32 %v1773, 1.0
        %v1777 = vmul.f32 %v1764, %v1774
        %v1778 = vmul.f32 %v1765, %v1775
        %v1779 = vmul.f32 %v1766, %v1776
        %v1780 = vld [vmem:[%s15] sm:$0xff]
        %v1781 = vld [vmem:[%s15 + $0x8] sm:$0xff]
        %v1782 = vld [vmem:[%s15 + $0x10] sm:$0xff]
        %v1783 = vld [vmem:[%s15 + $0x18] sm:$0xff]
        %v1784 = vld [vmem:[%s15 + $0x20] sm:$0xff]
        %v1785 = vld [vmem:[%s15 + $0x28] sm:$0xff]
        %v1786 = vld [vmem:[%s15 + $0x30] sm:$0xff]
        %v1787 = vld [vmem:[%s15 + $0x38] sm:$0xff]
        %v1788 = vld [vmem:[%s15 + $0x40] sm:$0xff]
        %v1789 = vld [vmem:[%s15 + $0x48] sm:$0xff]
        %v1790 = vld [vmem:[%s15 + $0x50] sm:$0xff]
        %v1791 = vld [vmem:[%s15 + $0x58] sm:$0xff]
        %v1792 = vld [vmem:[%s15 + $0x60] sm:$0xff]
        %v1793 = vld [vmem:[%s15 + $0x68] sm:$0xff]
        %v1794 = vld [vmem:[%s15 + $0x70] sm:$0xff]
        %v1795 = vld [vmem:[%s15 + $0x78] sm:$0xff]
        %1796 = vmatprep.subr.mxu0 0.0
        %1797 = vmatpush1.msra.mxu0 %v1780
        %1798 = vmatprep.subr.mxu0 0.0
        %1799 = vmatpush1.msra.mxu0 %v1781
        %1800 = vmatprep.subr.mxu0 0.0
        %1801 = vmatpush1.msra.mxu0 %v1782
        %1802 = vmatprep.subr.mxu0 0.0
        %1803 = vmatpush1.msra.mxu0 %v1783
        %1804 = vmatprep.subr.mxu0 0.0
        %1805 = vmatpush1.msra.mxu0 %v1784
        %1806 = vmatprep.subr.mxu0 0.0
        %1807 = vmatpush1.msra.mxu0 %v1785
        %1808 = vmatprep.subr.mxu0 0.0
        %1809 = vmatpush1.msra.mxu0 %v1786
        %1810 = vmatprep.subr.mxu0 0.0
        %1811 = vmatpush1.msra.mxu0 %v1787
        %1812 = vmatprep.subr.mxu0 0.0
        %1813 = vmatpush1.msra.mxu0 %v1788
        %1814 = vmatprep.subr.mxu0 0.0
        %1815 = vmatpush1.msra.mxu0 %v1789
        %1816 = vmatprep.subr.mxu0 0.0
        %1817 = vmatpush1.msra.mxu0 %v1790
        %1818 = vmatprep.subr.mxu0 0.0
        %1819 = vmatpush1.msra.mxu0 %v1791
        %1820 = vmatprep.subr.mxu0 0.0
        %1821 = vmatpush1.msra.mxu0 %v1792
        %1822 = vmatprep.subr.mxu0 0.0
        %1823 = vmatpush1.msra.mxu0 %v1793
        %1824 = vmatprep.subr.mxu0 0.0
        %1825 = vmatpush1.msra.mxu0 %v1794
        %1826 = vmatprep.subr.mxu0 0.0
        %1827 = vmatpush1.msra.mxu0 %v1795
        %1828 = vmatprep.subr.mxu0 0.0
        %1829 = vmatpush1.msra.mxu0 0.0
        %1830 = vmatprep.subr.mxu0 0.0
        %1831 = vmatpush1.msra.mxu0 0.0
        %1832 = vmatprep.subr.mxu0 0.0
        %1833 = vmatpush1.msra.mxu0 0.0
        %1834 = vmatprep.subr.mxu0 0.0
        %1835 = vmatpush1.msra.mxu0 0.0
        %1836 = vmatprep.subr.mxu0 0.0
        %1837 = vmatpush1.msra.mxu0 0.0
        %1838 = vmatprep.subr.mxu0 0.0
        %1839 = vmatpush1.msra.mxu0 0.0
        %1840 = vmatprep.subr.mxu0 0.0
        %1841 = vmatpush1.msra.mxu0 0.0
        %1842 = vmatprep.subr.mxu0 0.0
        %1843 = vmatpush1.msra.mxu0 0.0
        %1844 = vmatprep.subr.mxu0 0.0
        %1845 = vmatpush1.msra.mxu0 0.0
        %1846 = vmatprep.subr.mxu0 0.0
        %1847 = vmatpush1.msra.mxu0 0.0
        %1848 = vmatprep.subr.mxu0 0.0
        %1849 = vmatpush1.msra.mxu0 0.0
        %1850 = vmatprep.subr.mxu0 0.0
        %1851 = vmatpush1.msra.mxu0 0.0
        %1852 = vmatprep.subr.mxu0 0.0
        %1853 = vmatpush1.msra.mxu0 0.0
        %1854 = vmatprep.subr.mxu0 0.0
        %1855 = vmatpush1.msra.mxu0 0.0
        %1856 = vmatprep.subr.mxu0 0.0
        %1857 = vmatpush1.msra.mxu0 0.0
        %1858 = vmatprep.subr.mxu0 0.0
        %1859 = vmatpush1.msra.mxu0 0.0
        %1860 = vmatprep.mubr.f32.mxu0 0.0
        %1861 = vmatmul.mubr.f32.gmra.mrb[0].mxu0 %v1777
        %v1862 = vpop.f32.mrb[0].mxu0
        %v1863 = vadd.f32 0.0, %v1862
        %v1864 = vpop.f32.mrb[0].mxu0
        %1865 = vmatprep.mubr.f32.mxu0 0.0
        %1866 = vmatmul.mubr.f32.gmra.mrb[0].mxu0 %v1778
        %v1867 = vpop.f32.mrb[0].mxu0
        %v1868 = vadd.f32 0.0, %v1867
        %v1869 = vpop.f32.mrb[0].mxu0
        %1870 = vmatprep.mubr.f32.mxu0 0.0
        %1871 = vmatmul.mubr.f32.gmra.mrb[0].mxu0 %v1779
        %v1872 = vpop.f32.mrb[0].mxu0
        %v1873 = vadd.f32 0.0, %v1872
        %v1874 = vpop.f32.mrb[0].mxu0
        %1875 = vdwg.mxu0
        %v1876 = vadd.f32 %v1602, %v1863
        %v1877 = vadd.f32 %v1603, %v1868
        %v1878 = vadd.f32 %v1604, %v1873
        %v1879 = vld [vmem:[%s16] sm:$0x1]
        %v1881 = vlaneseq
        %v1882 = vshrl.u32 %v1881, 7
        %v1883 = vsub.s32 0, %v1882
        %v1884 = vrot.slane %v1879, %v1883
        %v1886 = vadd.f32 %v1876, %v1884
        %v1887 = vadd.f32 %v1877, %v1884
        %v1888 = vadd.f32 %v1878, %v1884
        %s1889 = scalar_lea.vmem %s5, 1
        %v1890 = vld [vmem:[%s1889] sm:$0x1]
        %s1891 = scalar_lea.vmem %s6, 1
        %v1892 = vld [vmem:[%s1891] sm:$0x1]
        %v1893 = vsel %vm772, %v1886, 0.0
        %1894 = vadd.xlane.f32.xlu0 %v1893
        %v1895 = vpop.xlane.xlu0 %1894
        %v1896 = vsel %vm772, %v1887, 0.0
        %1897 = vadd.xlane.f32.xlu0 %v1896
        %v1898 = vpop.xlane.xlu0 %1897
        %v1899 = vsel %vm779, %v1888, 0.0
        %1900 = vadd.xlane.f32.xlu0 %v1899
        %v1901 = vpop.xlane.xlu0 %1900
        %v1902 = vmul.f32 %v1895, %v783
        %v1903 = vmul.f32 %v1898, %v783
        %v1904 = vmul.f32 %v1901, %v783
        %v1905 = vsub.f32 %v1886, %v1902
        %v1906 = vsub.f32 %v1887, %v1903
        %v1907 = vsub.f32 %v1888, %v1904
        %v1908 = vmul.f32 %v1905, %v1905
        %v1909 = vmul.f32 %v1906, %v1906
        %v1910 = vmul.f32 %v1907, %v1907
        %v1911 = vsel %vm772, %v1908, 0.0
        %1912 = vadd.xlane.f32.xlu0 %v1911
        %v1913 = vpop.xlane.xlu0 %1912
        %v1914 = vsel %vm772, %v1909, 0.0
        %1915 = vadd.xlane.f32.xlu0 %v1914
        %v1916 = vpop.xlane.xlu0 %1915
        %v1917 = vsel %vm779, %v1910, 0.0
        %1918 = vadd.xlane.f32.xlu0 %v1917
        %v1919 = vpop.xlane.xlu0 %1918
        %v1920 = vmul.f32 %v1913, %v783
        %v1921 = vmul.f32 %v1916, %v783
        %v1922 = vmul.f32 %v1919, %v783
        %v1923 = vadd.f32 %v1920, 1e-05
        %v1924 = vadd.f32 %v1921, 1e-05
        %v1925 = vadd.f32 %v1922, 1e-05
        %v1926 = vrsqrt.pop %v1923
        %v1927 = vrsqrt.pop %v1924
        %v1928 = vrsqrt.pop %v1925
        %v1929 = vmul.f32 %v1905, %v1926
        %v1930 = vmul.f32 %v1906, %v1927
        %v1931 = vmul.f32 %v1907, %v1928
        %v1933 = vlaneseq
        %v1934 = vshrl.u32 %v1933, 7
        %v1935 = vsub.s32 0, %v1934
        %v1936 = vrot.slane %v1890, %v1935
        %v1938 = vmul.f32 %v1929, %v1936
        %v1939 = vmul.f32 %v1930, %v1936
        %v1940 = vmul.f32 %v1931, %v1936
        %v1942 = vlaneseq
        %v1943 = vshrl.u32 %v1942, 7
        %v1944 = vsub.s32 0, %v1943
        %v1945 = vrot.slane %v1892, %v1944
        %v1947 = vadd.f32 %v1938, %v1945
        %v1948 = vadd.f32 %v1939, %v1945
        %v1949 = vadd.f32 %v1940, %v1945
        %s1950 = scalar_lea.vmem %s7, 32
        %v1951 = vld [vmem:[%s1950] sm:$0xff]
        %v1952 = vld [vmem:[%s1950 + $0x8] sm:$0xff]
        %v1953 = vld [vmem:[%s1950 + $0x10] sm:$0xff]
        %v1954 = vld [vmem:[%s1950 + $0x18] sm:$0xff]
        %s1955 = scalar_lea.vmem %s8, 1
        %v1956 = vld [vmem:[%s1955] sm:$0x1]
        %v1958 = vlaneseq
        %v1959 = vshrl.u32 %v1958, 7
        %v1960 = vsub.s32 0, %v1959
        %v1961 = vrot.slane %v1956, %v1960
        %v1964 = vsel %vm772, %v1947, 0
        %v1967 = vsel %vm772, %v1948, 0
        %v1970 = vsel %vm772, %v1949, 0
        %1972 = vmatprep.subr.mxu0 0.0
        %1973 = vmatpush1.msra.mxu0 %v1951
        %1974 = vmatprep.subr.mxu0 0.0
        %1975 = vmatpush1.msra.mxu0 %v1952
        %1976 = vmatprep.subr.mxu0 0.0
        %1977 = vmatpush1.msra.mxu0 %v1953
        %1978 = vmatprep.subr.mxu0 0.0
        %1979 = vmatpush1.msra.mxu0 %v1954
        %1980 = vmatprep.subr.mxu0 0.0
        %1981 = vmatpush1.msra.mxu0 0.0
        %1982 = vmatprep.subr.mxu0 0.0
        %1983 = vmatpush1.msra.mxu0 0.0
        %1984 = vmatprep.subr.mxu0 0.0
        %1985 = vmatpush1.msra.mxu0 0.0
        %1986 = vmatprep.subr.mxu0 0.0
        %1987 = vmatpush1.msra.mxu0 0.0
        %1988 = vmatprep.subr.mxu0 0.0
        %1989 = vmatpush1.msra.mxu0 0.0
        %1990 = vmatprep.subr.mxu0 0.0
        %1991 = vmatpush1.msra.mxu0 0.0
        %1992 = vmatprep.subr.mxu0 0.0
        %1993 = vmatpush1.msra.mxu0 0.0
        %1994 = vmatprep.subr.mxu0 0.0
        %1995 = vmatpush1.msra.mxu0 0.0
        %1996 = vmatprep.subr.mxu0 0.0
        %1997 = vmatpush1.msra.mxu0 0.0
        %1998 = vmatprep.subr.mxu0 0.0
        %1999 = vmatpush1.msra.mxu0 0.0
        %2000 = vmatprep.subr.mxu0 0.0
        %2001 = vmatpush1.msra.mxu0 0.0
        %2002 = vmatprep.subr.mxu0 0.0
        %2003 = vmatpush1.msra.mxu0 0.0
        %2004 = vmatprep.subr.mxu0 0.0
        %2005 = vmatpush1.msra.mxu0 0.0
        %2006 = vmatprep.subr.mxu0 0.0
        %2007 = vmatpush1.msra.mxu0 0.0
        %2008 = vmatprep.subr.mxu0 0.0
        %2009 = vmatpush1.msra.mxu0 0.0
        %2010 = vmatprep.subr.mxu0 0.0
        %2011 = vmatpush1.msra.mxu0 0.0
        %2012 = vmatprep.subr.mxu0 0.0
        %2013 = vmatpush1.msra.mxu0 0.0
        %2014 = vmatprep.subr.mxu0 0.0
        %2015 = vmatpush1.msra.mxu0 0.0
        %2016 = vmatprep.subr.mxu0 0.0
        %2017 = vmatpush1.msra.mxu0 0.0
        %2018 = vmatprep.subr.mxu0 0.0
        %2019 = vmatpush1.msra.mxu0 0.0
        %2020 = vmatprep.subr.mxu0 0.0
        %2021 = vmatpush1.msra.mxu0 0.0
        %2022 = vmatprep.subr.mxu0 0.0
        %2023 = vmatpush1.msra.mxu0 0.0
        %2024 = vmatprep.subr.mxu0 0.0
        %2025 = vmatpush1.msra.mxu0 0.0
        %2026 = vmatprep.subr.mxu0 0.0
        %2027 = vmatpush1.msra.mxu0 0.0
        %2028 = vmatprep.subr.mxu0 0.0
        %2029 = vmatpush1.msra.mxu0 0.0
        %2030 = vmatprep.subr.mxu0 0.0
        %2031 = vmatpush1.msra.mxu0 0.0
        %2032 = vmatprep.subr.mxu0 0.0
        %2033 = vmatpush1.msra.mxu0 0.0
        %2034 = vmatprep.subr.mxu0 0.0
        %2035 = vmatpush1.msra.mxu0 0.0
        %2036 = vmatprep.mubr.f32.mxu0 0.0
        %2037 = vmatmul.mubr.f32.gmra.mrb[0].mxu0 %v1964
        %v2038 = vpop.f32.mrb[0].mxu0
        %v2039 = vadd.f32 %v1961, %v2038
        %v2040 = vpop.f32.mrb[0].mxu0
        %2041 = vmatprep.mubr.f32.mxu0 0.0
        %2042 = vmatmul.mubr.f32.gmra.mrb[0].mxu0 %v1967
        %v2043 = vpop.f32.mrb[0].mxu0
        %v2044 = vadd.f32 %v1961, %v2043
        %v2045 = vpop.f32.mrb[0].mxu0
        %2046 = vmatprep.mubr.f32.mxu0 0.0
        %2047 = vmatmul.mubr.f32.gmra.mrb[0].mxu0 %v1970
        %v2048 = vpop.f32.mrb[0].mxu0
        %v2049 = vadd.f32 %v1961, %v2048
        %v2050 = vpop.f32.mrb[0].mxu0
        %2051 = vdwg.mxu0
        %s2052 = scalar_lea.vmem %s9, 32
        %v2053 = vld [vmem:[%s2052] sm:$0xff]
        %v2054 = vld [vmem:[%s2052 + $0x8] sm:$0xff]
        %v2055 = vld [vmem:[%s2052 + $0x10] sm:$0xff]
        %v2056 = vld [vmem:[%s2052 + $0x18] sm:$0xff]
        %2060 = vrot.lane.b32.xlu0 %v2039, 96
        %v2061 = vpop.permute.xlu0 %2060
        %2062 = vrot.lane.b32.xlu0 %v2044, 96
        %v2063 = vpop.permute.xlu0 %2062
        %2064 = vrot.lane.b32.xlu0 %v2049, 96
        %v2065 = vpop.permute.xlu0 %2064
        %v2066 = vsel %vm945, %v2039, 0
        %v2068 = vsel %vm945, %v2044, 0
        %v2070 = vsel %vm945, %v2049, 0
        %v2072 = vsel %vm945, %v2061, 0
        %v2074 = vsel %vm945, %v2063, 0
        %v2076 = vsel %vm945, %v2065, 0
        %2078 = vmatprep.subr.mxu0 0.0
        %2079 = vmatpush1.xpose.msra.mxu0 %v2072
        %2080 = vmatprep.subr.mxu0 0.0
        %2081 = vmatpush1.xpose.msra.mxu0 %v2074
        %2082 = vmatprep.subr.mxu0 0.0
        %2083 = vmatpush1.xpose.msra.mxu0 %v2076
        %2084 = vmatprep.subr.mxu0 0.0
        %2085 = vmatpush1.xpose.msra.mxu0 0.0
        %2086 = vmatprep.subr.mxu0 0.0
        %2087 = vmatpush1.xpose.msra.mxu0 0.0
        %2088 = vmatprep.subr.mxu0 0.0
        %2089 = vmatpush1.xpose.msra.mxu0 0.0
        %2090 = vmatprep.subr.mxu0 0.0
        %2091 = vmatpush1.xpose.msra.mxu0 0.0
        %2092 = vmatprep.subr.mxu0 0.0
        %2093 = vmatpush1.xpose.msra.mxu0 0.0
        %2094 = vmatprep.subr.mxu0 0.0
        %2095 = vmatpush1.xpose.msra.mxu0 0.0
        %2096 = vmatprep.subr.mxu0 0.0
        %2097 = vmatpush1.xpose.msra.mxu0 0.0
        %2098 = vmatprep.subr.mxu0 0.0
        %2099 = vmatpush1.xpose.msra.mxu0 0.0
        %2100 = vmatprep.subr.mxu0 0.0
        %2101 = vmatpush1.xpose.msra.mxu0 0.0
        %2102 = vmatprep.subr.mxu0 0.0
        %2103 = vmatpush1.xpose.msra.mxu0 0.0
        %2104 = vmatprep.subr.mxu0 0.0
        %2105 = vmatpush1.xpose.msra.mxu0 0.0
        %2106 = vmatprep.subr.mxu0 0.0
        %2107 = vmatpush1.xpose.msra.mxu0 0.0
        %2108 = vmatprep.subr.mxu0 0.0
        %2109 = vmatpush1.xpose.msra.mxu0 0.0
        %2110 = vmatprep.subr.mxu0 0.0
        %2111 = vmatpush1.xpose.msra.mxu0 0.0
        %2112 = vmatprep.subr.mxu0 0.0
        %2113 = vmatpush1.xpose.msra.mxu0 0.0
        %2114 = vmatprep.subr.mxu0 0.0
        %2115 = vmatpush1.xpose.msra.mxu0 0.0
        %2116 = vmatprep.subr.mxu0 0.0
        %2117 = vmatpush1.xpose.msra.mxu0 0.0
        %2118 = vmatprep.subr.mxu0 0.0
        %2119 = vmatpush1.xpose.msra.mxu0 0.0
        %2120 = vmatprep.subr.mxu0 0.0
        %2121 = vmatpush1.xpose.msra.mxu0 0.0
        %2122 = vmatprep.subr.mxu0 0.0
        %2123 = vmatpush1.xpose.msra.mxu0 0.0
        %2124 = vmatprep.subr.mxu0 0.0
        %2125 = vmatpush1.xpose.msra.mxu0 0.0
        %2126 = vmatprep.subr.mxu0 0.0
        %2127 = vmatpush1.xpose.msra.mxu0 0.0
        %2128 = vmatprep.subr.mxu0 0.0
        %2129 = vmatpush1.xpose.msra.mxu0 0.0
        %2130 = vmatprep.subr.mxu0 0.0
        %2131 = vmatpush1.xpose.msra.mxu0 0.0
        %2132 = vmatprep.subr.mxu0 0.0
        %2133 = vmatpush1.xpose.msra.mxu0 0.0
        %2134 = vmatprep.subr.mxu0 0.0
        %2135 = vmatpush1.xpose.msra.mxu0 0.0
        %2136 = vmatprep.subr.mxu0 0.0
        %2137 = vmatpush1.xpose.msra.mxu0 0.0
        %2138 = vmatprep.subr.mxu0 0.0
        %2139 = vmatpush1.xpose.msra.mxu0 0.0
        %2140 = vmatprep.subr.mxu0 0.0
        %2141 = vmatpush1.xpose.msra.mxu0 0.0
        %2142 = vmatprep.mubr.f32.mxu0 0.0
        %2143 = vmatmul.mubr.f32.gmra.mrb[0].mxu0 %v2066
        %v2144 = vpop.f32.mrb[0].mxu0
        %v2145 = vadd.f32 0.0, %v2144
        %v2146 = vpop.f32.mrb[0].mxu0
        %2147 = vmatprep.mubr.f32.mxu0 0.0
        %2148 = vmatmul.mubr.f32.gmra.mrb[0].mxu0 %v2068
        %v2149 = vpop.f32.mrb[0].mxu0
        %v2150 = vadd.f32 0.0, %v2149
        %v2151 = vpop.f32.mrb[0].mxu0
        %2152 = vmatprep.mubr.f32.mxu0 0.0
        %2153 = vmatmul.mubr.f32.gmra.mrb[0].mxu0 %v2070
        %v2154 = vpop.f32.mrb[0].mxu0
        %v2155 = vadd.f32 0.0, %v2154
        %v2156 = vpop.f32.mrb[0].mxu0
        %2157 = vdwg.mxu0
        %v2158 = vsel %vm1038, %v2145, -inf
        %2159 = vmax.xlane.f32.xlu0 %v2158
        %v2160 = vpop.xlane.xlu0 %2159
        %v2161 = vsel %vm1038, %v2150, -inf
        %2162 = vmax.xlane.f32.xlu0 %v2161
        %v2163 = vpop.xlane.xlu0 %2162
        %v2164 = vsel %vm1045, %v2155, -inf
        %2165 = vmax.xlane.f32.xlu0 %v2164
        %v2166 = vpop.xlane.xlu0 %2165
        %v2167 = vsub.f32 %v2145, %v2160
        %v2168 = vsub.f32 %v2150, %v2163
        %v2169 = vsub.f32 %v2155, %v2166
        %v2170 = vmul.f32 %v2167, 1.442695
        %v2171 = vpow.pop %v2170
        %v2172 = vmul.f32 %v2168, 1.442695
        %v2173 = vpow.pop %v2172
        %v2174 = vmul.f32 %v2169, 1.442695
        %v2175 = vpow.pop %v2174
        %v2176 = vsel %vm1038, %v2171, 0.0
        %2177 = vadd.xlane.f32.xlu0 %v2176
        %v2178 = vpop.xlane.xlu0 %2177
        %v2179 = vsel %vm1038, %v2173, 0.0
        %2180 = vadd.xlane.f32.xlu0 %v2179
        %v2181 = vpop.xlane.xlu0 %2180
        %v2182 = vsel %vm1045, %v2175, 0.0
        %2183 = vadd.xlane.f32.xlu0 %v2182
        %v2184 = vpop.xlane.xlu0 %2183
        %v2185 = vrcp.pop %v2178
        %v2186 = vrcp.pop %v2181
        %v2187 = vrcp.pop %v2184
        %v2188 = vmul.f32 %v2171, %v2185
        %v2189 = vmul.f32 %v2173, %v2186
        %v2190 = vmul.f32 %v2175, %v2187
        %v2191 = vmul.f32 %v2039, 0.25
        %v2192 = vmul.f32 %v2044, 0.25
        %v2193 = vmul.f32 %v2049, 0.25
        %2197 = vrot.lane.b32.xlu0 %v2191, 64
        %v2198 = vpop.permute.xlu0 %2197
        %2199 = vrot.lane.b32.xlu0 %v2192, 64
        %v2200 = vpop.permute.xlu0 %2199
        %2201 = vrot.lane.b32.xlu0 %v2193, 64
        %v2202 = vpop.permute.xlu0 %2201
        %v2206 = vsel %vm1038, %v2188, 0
        %v2209 = vsel %vm1038, %v2189, 0
        %v2212 = vsel %vm1038, %v2190, 0
        %v2214 = vsel %vm756, %v2202, 0
        %2216 = vmatprep.subr.mxu0 0.0
        %2217 = vmatpush1.msra.mxu0 %v2198
        %2218 = vmatprep.subr.mxu0 0.0
        %2219 = vmatpush1.msra.mxu0 %v2200
        %2220 = vmatprep.subr.mxu0 0.0
        %2221 = vmatpush1.msra.mxu0 %v2214
        %2222 = vmatprep.subr.mxu0 0.0
        %2223 = vmatpush1.msra.mxu0 0.0
        %2224 = vmatprep.subr.mxu0 0.0
        %2225 = vmatpush1.msra.mxu0 0.0
        %2226 = vmatprep.subr.mxu0 0.0
        %2227 = vmatpush1.msra.mxu0 0.0
        %2228 = vmatprep.subr.mxu0 0.0
        %2229 = vmatpush1.msra.mxu0 0.0
        %2230 = vmatprep.subr.mxu0 0.0
        %2231 = vmatpush1.msra.mxu0 0.0
        %2232 = vmatprep.subr.mxu0 0.0
        %2233 = vmatpush1.msra.mxu0 0.0
        %2234 = vmatprep.subr.mxu0 0.0
        %2235 = vmatpush1.msra.mxu0 0.0
        %2236 = vmatprep.subr.mxu0 0.0
        %2237 = vmatpush1.msra.mxu0 0.0
        %2238 = vmatprep.subr.mxu0 0.0
        %2239 = vmatpush1.msra.mxu0 0.0
        %2240 = vmatprep.subr.mxu0 0.0
        %2241 = vmatpush1.msra.mxu0 0.0
        %2242 = vmatprep.subr.mxu0 0.0
        %2243 = vmatpush1.msra.mxu0 0.0
        %2244 = vmatprep.subr.mxu0 0.0
        %2245 = vmatpush1.msra.mxu0 0.0
        %2246 = vmatprep.subr.mxu0 0.0
        %2247 = vmatpush1.msra.mxu0 0.0
        %2248 = vmatprep.subr.mxu0 0.0
        %2249 = vmatpush1.msra.mxu0 0.0
        %2250 = vmatprep.subr.mxu0 0.0
        %2251 = vmatpush1.msra.mxu0 0.0
        %2252 = vmatprep.subr.mxu0 0.0
        %2253 = vmatpush1.msra.mxu0 0.0
        %2254 = vmatprep.subr.mxu0 0.0
        %2255 = vmatpush1.msra.mxu0 0.0
        %2256 = vmatprep.subr.mxu0 0.0
        %2257 = vmatpush1.msra.mxu0 0.0
        %2258 = vmatprep.subr.mxu0 0.0
        %2259 = vmatpush1.msra.mxu0 0.0
        %2260 = vmatprep.subr.mxu0 0.0
        %2261 = vmatpush1.msra.mxu0 0.0
        %2262 = vmatprep.subr.mxu0 0.0
        %2263 = vmatpush1.msra.mxu0 0.0
        %2264 = vmatprep.subr.mxu0 0.0
        %2265 = vmatpush1.msra.mxu0 0.0
        %2266 = vmatprep.subr.mxu0 0.0
        %2267 = vmatpush1.msra.mxu0 0.0
        %2268 = vmatprep.subr.mxu0 0.0
        %2269 = vmatpush1.msra.mxu0 0.0
        %2270 = vmatprep.subr.mxu0 0.0
        %2271 = vmatpush1.msra.mxu0 0.0
        %2272 = vmatprep.subr.mxu0 0.0
        %2273 = vmatpush1.msra.mxu0 0.0
        %2274 = vmatprep.subr.mxu0 0.0
        %2275 = vmatpush1.msra.mxu0 0.0
        %2276 = vmatprep.subr.mxu0 0.0
        %2277 = vmatpush1.msra.mxu0 0.0
        %2278 = vmatprep.subr.mxu0 0.0
        %2279 = vmatpush1.msra.mxu0 0.0
        %2280 = vmatprep.mubr.f32.mxu0 0.0
        %2281 = vmatmul.mubr.f32.gmra.mrb[0].mxu0 %v2206
        %v2282 = vpop.f32.mrb[0].mxu0
        %v2283 = vadd.f32 0.0, %v2282
        %v2284 = vpop.f32.mrb[0].mxu0
        %2285 = vmatprep.mubr.f32.mxu0 0.0
        %2286 = vmatmul.mubr.f32.gmra.mrb[0].mxu0 %v2209
        %v2287 = vpop.f32.mrb[0].mxu0
        %v2288 = vadd.f32 0.0, %v2287
        %v2289 = vpop.f32.mrb[0].mxu0
        %2290 = vmatprep.mubr.f32.mxu0 0.0
        %2291 = vmatmul.mubr.f32.gmra.mrb[0].mxu0 %v2212
        %v2292 = vpop.f32.mrb[0].mxu0
        %v2293 = vadd.f32 0.0, %v2292
        %v2294 = vpop.f32.mrb[0].mxu0
        %2295 = vdwg.mxu0
        %2296 = vrot.lane.b32.xlu0 %v2039, 112
        %v2297 = vpop.permute.xlu0 %2296
        %2298 = vrot.lane.b32.xlu0 %v2044, 112
        %v2299 = vpop.permute.xlu0 %2298
        %2300 = vrot.lane.b32.xlu0 %v2049, 112
        %v2301 = vpop.permute.xlu0 %2300
        %2302 = vrot.lane.b32.xlu0 %v2039, 80
        %v2303 = vpop.permute.xlu0 %2302
        %2304 = vrot.lane.b32.xlu0 %v2044, 80
        %v2305 = vpop.permute.xlu0 %2304
        %2306 = vrot.lane.b32.xlu0 %v2049, 80
        %v2307 = vpop.permute.xlu0 %2306
        %v2308 = vsel %vm945, %v2297, 0
        %v2310 = vsel %vm945, %v2299, 0
        %v2312 = vsel %vm945, %v2301, 0
        %v2314 = vsel %vm945, %v2303, 0
        %v2316 = vsel %vm945, %v2305, 0
        %v2318 = vsel %vm945, %v2307, 0
        %2320 = vmatprep.subr.mxu0 0.0
        %2321 = vmatpush1.xpose.msra.mxu0 %v2314
        %2322 = vmatprep.subr.mxu0 0.0
        %2323 = vmatpush1.xpose.msra.mxu0 %v2316
        %2324 = vmatprep.subr.mxu0 0.0
        %2325 = vmatpush1.xpose.msra.mxu0 %v2318
        %2326 = vmatprep.subr.mxu0 0.0
        %2327 = vmatpush1.xpose.msra.mxu0 0.0
        %2328 = vmatprep.subr.mxu0 0.0
        %2329 = vmatpush1.xpose.msra.mxu0 0.0
        %2330 = vmatprep.subr.mxu0 0.0
        %2331 = vmatpush1.xpose.msra.mxu0 0.0
        %2332 = vmatprep.subr.mxu0 0.0
        %2333 = vmatpush1.xpose.msra.mxu0 0.0
        %2334 = vmatprep.subr.mxu0 0.0
        %2335 = vmatpush1.xpose.msra.mxu0 0.0
        %2336 = vmatprep.subr.mxu0 0.0
        %2337 = vmatpush1.xpose.msra.mxu0 0.0
        %2338 = vmatprep.subr.mxu0 0.0
        %2339 = vmatpush1.xpose.msra.mxu0 0.0
        %2340 = vmatprep.subr.mxu0 0.0
        %2341 = vmatpush1.xpose.msra.mxu0 0.0
        %2342 = vmatprep.subr.mxu0 0.0
        %2343 = vmatpush1.xpose.msra.mxu0 0.0
        %2344 = vmatprep.subr.mxu0 0.0
        %2345 = vmatpush1.xpose.msra.mxu0 0.0
        %2346 = vmatprep.subr.mxu0 0.0
        %2347 = vmatpush1.xpose.msra.mxu0 0.0
        %2348 = vmatprep.subr.mxu0 0.0
        %2349 = vmatpush1.xpose.msra.mxu0 0.0
        %2350 = vmatprep.subr.mxu0 0.0
        %2351 = vmatpush1.xpose.msra.mxu0 0.0
        %2352 = vmatprep.subr.mxu0 0.0
        %2353 = vmatpush1.xpose.msra.mxu0 0.0
        %2354 = vmatprep.subr.mxu0 0.0
        %2355 = vmatpush1.xpose.msra.mxu0 0.0
        %2356 = vmatprep.subr.mxu0 0.0
        %2357 = vmatpush1.xpose.msra.mxu0 0.0
        %2358 = vmatprep.subr.mxu0 0.0
        %2359 = vmatpush1.xpose.msra.mxu0 0.0
        %2360 = vmatprep.subr.mxu0 0.0
        %2361 = vmatpush1.xpose.msra.mxu0 0.0
        %2362 = vmatprep.subr.mxu0 0.0
        %2363 = vmatpush1.xpose.msra.mxu0 0.0
        %2364 = vmatprep.subr.mxu0 0.0
        %2365 = vmatpush1.xpose.msra.mxu0 0.0
        %2366 = vmatprep.subr.mxu0 0.0
        %2367 = vmatpush1.xpose.msra.mxu0 0.0
        %2368 = vmatprep.subr.mxu0 0.0
        %2369 = vmatpush1.xpose.msra.mxu0 0.0
        %2370 = vmatprep.subr.mxu0 0.0
        %2371 = vmatpush1.xpose.msra.mxu0 0.0
        %2372 = vmatprep.subr.mxu0 0.0
        %2373 = vmatpush1.xpose.msra.mxu0 0.0
        %2374 = vmatprep.subr.mxu0 0.0
        %2375 = vmatpush1.xpose.msra.mxu0 0.0
        %2376 = vmatprep.subr.mxu0 0.0
        %2377 = vmatpush1.xpose.msra.mxu0 0.0
        %2378 = vmatprep.subr.mxu0 0.0
        %2379 = vmatpush1.xpose.msra.mxu0 0.0
        %2380 = vmatprep.subr.mxu0 0.0
        %2381 = vmatpush1.xpose.msra.mxu0 0.0
        %2382 = vmatprep.subr.mxu0 0.0
        %2383 = vmatpush1.xpose.msra.mxu0 0.0
        %2384 = vmatprep.mubr.f32.mxu0 0.0
        %2385 = vmatmul.mubr.f32.gmra.mrb[0].mxu0 %v2308
        %v2386 = vpop.f32.mrb[0].mxu0
        %v2387 = vadd.f32 0.0, %v2386
        %v2388 = vpop.f32.mrb[0].mxu0
        %2389 = vmatprep.mubr.f32.mxu0 0.0
        %2390 = vmatmul.mubr.f32.gmra.mrb[0].mxu0 %v2310
        %v2391 = vpop.f32.mrb[0].mxu0
        %v2392 = vadd.f32 0.0, %v2391
        %v2393 = vpop.f32.mrb[0].mxu0
        %2394 = vmatprep.mubr.f32.mxu0 0.0
        %2395 = vmatmul.mubr.f32.gmra.mrb[0].mxu0 %v2312
        %v2396 = vpop.f32.mrb[0].mxu0
        %v2397 = vadd.f32 0.0, %v2396
        %v2398 = vpop.f32.mrb[0].mxu0
        %2399 = vdwg.mxu0
        %v2400 = vsel %vm1038, %v2387, -inf
        %2401 = vmax.xlane.f32.xlu0 %v2400
        %v2402 = vpop.xlane.xlu0 %2401
        %v2403 = vsel %vm1038, %v2392, -inf
        %2404 = vmax.xlane.f32.xlu0 %v2403
        %v2405 = vpop.xlane.xlu0 %2404
        %v2406 = vsel %vm1045, %v2397, -inf
        %2407 = vmax.xlane.f32.xlu0 %v2406
        %v2408 = vpop.xlane.xlu0 %2407
        %v2409 = vsub.f32 %v2387, %v2402
        %v2410 = vsub.f32 %v2392, %v2405
        %v2411 = vsub.f32 %v2397, %v2408
        %v2412 = vmul.f32 %v2409, 1.442695
        %v2413 = vpow.pop %v2412
        %v2414 = vmul.f32 %v2410, 1.442695
        %v2415 = vpow.pop %v2414
        %v2416 = vmul.f32 %v2411, 1.442695
        %v2417 = vpow.pop %v2416
        %v2418 = vsel %vm1038, %v2413, 0.0
        %2419 = vadd.xlane.f32.xlu0 %v2418
        %v2420 = vpop.xlane.xlu0 %2419
        %v2421 = vsel %vm1038, %v2415, 0.0
        %2422 = vadd.xlane.f32.xlu0 %v2421
        %v2423 = vpop.xlane.xlu0 %2422
        %v2424 = vsel %vm1045, %v2417, 0.0
        %2425 = vadd.xlane.f32.xlu0 %v2424
        %v2426 = vpop.xlane.xlu0 %2425
        %v2427 = vrcp.pop %v2420
        %v2428 = vrcp.pop %v2423
        %v2429 = vrcp.pop %v2426
        %v2430 = vmul.f32 %v2413, %v2427
        %v2431 = vmul.f32 %v2415, %v2428
        %v2432 = vmul.f32 %v2417, %v2429
        %2433 = vrot.lane.b32.xlu0 %v2191, 48
        %v2434 = vpop.permute.xlu0 %2433
        %2435 = vrot.lane.b32.xlu0 %v2192, 48
        %v2436 = vpop.permute.xlu0 %2435
        %2437 = vrot.lane.b32.xlu0 %v2193, 48
        %v2438 = vpop.permute.xlu0 %2437
        %v2442 = vsel %vm1038, %v2430, 0
        %v2445 = vsel %vm1038, %v2431, 0
        %v2448 = vsel %vm1038, %v2432, 0
        %v2450 = vsel %vm756, %v2438, 0
        %2452 = vmatprep.subr.mxu0 0.0
        %2453 = vmatpush1.msra.mxu0 %v2434
        %2454 = vmatprep.subr.mxu0 0.0
        %2455 = vmatpush1.msra.mxu0 %v2436
        %2456 = vmatprep.subr.mxu0 0.0
        %2457 = vmatpush1.msra.mxu0 %v2450
        %2458 = vmatprep.subr.mxu0 0.0
        %2459 = vmatpush1.msra.mxu0 0.0
        %2460 = vmatprep.subr.mxu0 0.0
        %2461 = vmatpush1.msra.mxu0 0.0
        %2462 = vmatprep.subr.mxu0 0.0
        %2463 = vmatpush1.msra.mxu0 0.0
        %2464 = vmatprep.subr.mxu0 0.0
        %2465 = vmatpush1.msra.mxu0 0.0
        %2466 = vmatprep.subr.mxu0 0.0
        %2467 = vmatpush1.msra.mxu0 0.0
        %2468 = vmatprep.subr.mxu0 0.0
        %2469 = vmatpush1.msra.mxu0 0.0
        %2470 = vmatprep.subr.mxu0 0.0
        %2471 = vmatpush1.msra.mxu0 0.0
        %2472 = vmatprep.subr.mxu0 0.0
        %2473 = vmatpush1.msra.mxu0 0.0
        %2474 = vmatprep.subr.mxu0 0.0
        %2475 = vmatpush1.msra.mxu0 0.0
        %2476 = vmatprep.subr.mxu0 0.0
        %2477 = vmatpush1.msra.mxu0 0.0
        %2478 = vmatprep.subr.mxu0 0.0
        %2479 = vmatpush1.msra.mxu0 0.0
        %2480 = vmatprep.subr.mxu0 0.0
        %2481 = vmatpush1.msra.mxu0 0.0
        %2482 = vmatprep.subr.mxu0 0.0
        %2483 = vmatpush1.msra.mxu0 0.0
        %2484 = vmatprep.subr.mxu0 0.0
        %2485 = vmatpush1.msra.mxu0 0.0
        %2486 = vmatprep.subr.mxu0 0.0
        %2487 = vmatpush1.msra.mxu0 0.0
        %2488 = vmatprep.subr.mxu0 0.0
        %2489 = vmatpush1.msra.mxu0 0.0
        %2490 = vmatprep.subr.mxu0 0.0
        %2491 = vmatpush1.msra.mxu0 0.0
        %2492 = vmatprep.subr.mxu0 0.0
        %2493 = vmatpush1.msra.mxu0 0.0
        %2494 = vmatprep.subr.mxu0 0.0
        %2495 = vmatpush1.msra.mxu0 0.0
        %2496 = vmatprep.subr.mxu0 0.0
        %2497 = vmatpush1.msra.mxu0 0.0
        %2498 = vmatprep.subr.mxu0 0.0
        %2499 = vmatpush1.msra.mxu0 0.0
        %2500 = vmatprep.subr.mxu0 0.0
        %2501 = vmatpush1.msra.mxu0 0.0
        %2502 = vmatprep.subr.mxu0 0.0
        %2503 = vmatpush1.msra.mxu0 0.0
        %2504 = vmatprep.subr.mxu0 0.0
        %2505 = vmatpush1.msra.mxu0 0.0
        %2506 = vmatprep.subr.mxu0 0.0
        %2507 = vmatpush1.msra.mxu0 0.0
        %2508 = vmatprep.subr.mxu0 0.0
        %2509 = vmatpush1.msra.mxu0 0.0
        %2510 = vmatprep.subr.mxu0 0.0
        %2511 = vmatpush1.msra.mxu0 0.0
        %2512 = vmatprep.subr.mxu0 0.0
        %2513 = vmatpush1.msra.mxu0 0.0
        %2514 = vmatprep.subr.mxu0 0.0
        %2515 = vmatpush1.msra.mxu0 0.0
        %2516 = vmatprep.mubr.f32.mxu0 0.0
        %2517 = vmatmul.mubr.f32.gmra.mrb[0].mxu0 %v2442
        %v2518 = vpop.f32.mrb[0].mxu0
        %v2519 = vadd.f32 0.0, %v2518
        %v2520 = vpop.f32.mrb[0].mxu0
        %2521 = vmatprep.mubr.f32.mxu0 0.0
        %2522 = vmatmul.mubr.f32.gmra.mrb[0].mxu0 %v2445
        %v2523 = vpop.f32.mrb[0].mxu0
        %v2524 = vadd.f32 0.0, %v2523
        %v2525 = vpop.f32.mrb[0].mxu0
        %2526 = vmatprep.mubr.f32.mxu0 0.0
        %2527 = vmatmul.mubr.f32.gmra.mrb[0].mxu0 %v2448
        %v2528 = vpop.f32.mrb[0].mxu0
        %v2529 = vadd.f32 0.0, %v2528
        %v2530 = vpop.f32.mrb[0].mxu0
        %2531 = vdwg.mxu0
        %v2533 = vsel %vm945, %v2519, 0
        %v2536 = vsel %vm945, %v2524, 0
        %v2539 = vsel %vm945, %v2529, 0
        %2541 = vmatprep.subr.mxu0 0.0
        %2542 = vmatpush1.msra.mxu0 %v2055
        %2543 = vmatprep.subr.mxu0 0.0
        %2544 = vmatpush1.msra.mxu0 %v2056
        %2545 = vmatprep.subr.mxu0 0.0
        %2546 = vmatpush1.msra.mxu0 0.0
        %2547 = vmatprep.subr.mxu0 0.0
        %2548 = vmatpush1.msra.mxu0 0.0
        %2549 = vmatprep.subr.mxu0 0.0
        %2550 = vmatpush1.msra.mxu0 0.0
        %2551 = vmatprep.subr.mxu0 0.0
        %2552 = vmatpush1.msra.mxu0 0.0
        %2553 = vmatprep.subr.mxu0 0.0
        %2554 = vmatpush1.msra.mxu0 0.0
        %2555 = vmatprep.subr.mxu0 0.0
        %2556 = vmatpush1.msra.mxu0 0.0
        %2557 = vmatprep.subr.mxu0 0.0
        %2558 = vmatpush1.msra.mxu0 0.0
        %2559 = vmatprep.subr.mxu0 0.0
        %2560 = vmatpush1.msra.mxu0 0.0
        %2561 = vmatprep.subr.mxu0 0.0
        %2562 = vmatpush1.msra.mxu0 0.0
        %2563 = vmatprep.subr.mxu0 0.0
        %2564 = vmatpush1.msra.mxu0 0.0
        %2565 = vmatprep.subr.mxu0 0.0
        %2566 = vmatpush1.msra.mxu0 0.0
        %2567 = vmatprep.subr.mxu0 0.0
        %2568 = vmatpush1.msra.mxu0 0.0
        %2569 = vmatprep.subr.mxu0 0.0
        %2570 = vmatpush1.msra.mxu0 0.0
        %2571 = vmatprep.subr.mxu0 0.0
        %2572 = vmatpush1.msra.mxu0 0.0
        %2573 = vmatprep.subr.mxu0 0.0
        %2574 = vmatpush1.msra.mxu0 0.0
        %2575 = vmatprep.subr.mxu0 0.0
        %2576 = vmatpush1.msra.mxu0 0.0
        %2577 = vmatprep.subr.mxu0 0.0
        %2578 = vmatpush1.msra.mxu0 0.0
        %2579 = vmatprep.subr.mxu0 0.0
        %2580 = vmatpush1.msra.mxu0 0.0
        %2581 = vmatprep.subr.mxu0 0.0
        %2582 = vmatpush1.msra.mxu0 0.0
        %2583 = vmatprep.subr.mxu0 0.0
        %2584 = vmatpush1.msra.mxu0 0.0
        %2585 = vmatprep.subr.mxu0 0.0
        %2586 = vmatpush1.msra.mxu0 0.0
        %2587 = vmatprep.subr.mxu0 0.0
        %2588 = vmatpush1.msra.mxu0 0.0
        %2589 = vmatprep.subr.mxu0 0.0
        %2590 = vmatpush1.msra.mxu0 0.0
        %2591 = vmatprep.subr.mxu0 0.0
        %2592 = vmatpush1.msra.mxu0 0.0
        %2593 = vmatprep.subr.mxu0 0.0
        %2594 = vmatpush1.msra.mxu0 0.0
        %2595 = vmatprep.subr.mxu0 0.0
        %2596 = vmatpush1.msra.mxu0 0.0
        %2597 = vmatprep.subr.mxu0 0.0
        %2598 = vmatpush1.msra.mxu0 0.0
        %2599 = vmatprep.subr.mxu0 0.0
        %2600 = vmatpush1.msra.mxu0 0.0
        %2601 = vmatprep.subr.mxu0 0.0
        %2602 = vmatpush1.msra.mxu0 0.0
        %2603 = vmatprep.subr.mxu0 0.0
        %2604 = vmatpush1.msra.mxu0 0.0
        %2605 = vmatprep.mubr.f32.mxu0 0.0
        %2606 = vmatmul.mubr.f32.gmra.mrb[0].mxu0 %v2533
        %v2607 = vpop.f32.mrb[0].mxu0
        %v2608 = vadd.f32 0.0, %v2607
        %v2609 = vpop.f32.mrb[0].mxu0
        %2610 = vmatprep.mubr.f32.mxu0 0.0
        %2611 = vmatmul.mubr.f32.gmra.mrb[0].mxu0 %v2536
        %v2612 = vpop.f32.mrb[0].mxu0
        %v2613 = vadd.f32 0.0, %v2612
        %v2614 = vpop.f32.mrb[0].mxu0
        %2615 = vmatprep.mubr.f32.mxu0 0.0
        %2616 = vmatmul.mubr.f32.gmra.mrb[0].mxu0 %v2539
        %v2617 = vpop.f32.mrb[0].mxu0
        %v2618 = vadd.f32 0.0, %v2617
        %v2619 = vpop.f32.mrb[0].mxu0
        %2620 = vdwg.mxu0
        %v2622 = vsel %vm945, %v2283, 0
        %v2625 = vsel %vm945, %v2288, 0
        %v2628 = vsel %vm945, %v2293, 0
        %2630 = vmatprep.subr.mxu0 0.0
        %2631 = vmatpush1.msra.mxu0 %v2053
        %2632 = vmatprep.subr.mxu0 0.0
        %2633 = vmatpush1.msra.mxu0 %v2054
        %2634 = vmatprep.subr.mxu0 0.0
        %2635 = vmatpush1.msra.mxu0 0.0
        %2636 = vmatprep.subr.mxu0 0.0
        %2637 = vmatpush1.msra.mxu0 0.0
        %2638 = vmatprep.subr.mxu0 0.0
        %2639 = vmatpush1.msra.mxu0 0.0
        %2640 = vmatprep.subr.mxu0 0.0
        %2641 = vmatpush1.msra.mxu0 0.0
        %2642 = vmatprep.subr.mxu0 0.0
        %2643 = vmatpush1.msra.mxu0 0.0
        %2644 = vmatprep.subr.mxu0 0.0
        %2645 = vmatpush1.msra.mxu0 0.0
        %2646 = vmatprep.subr.mxu0 0.0
        %2647 = vmatpush1.msra.mxu0 0.0
        %2648 = vmatprep.subr.mxu0 0.0
        %2649 = vmatpush1.msra.mxu0 0.0
        %2650 = vmatprep.subr.mxu0 0.0
        %2651 = vmatpush1.msra.mxu0 0.0
        %2652 = vmatprep.subr.mxu0 0.0
        %2653 = vmatpush1.msra.mxu0 0.0
        %2654 = vmatprep.subr.mxu0 0.0
        %2655 = vmatpush1.msra.mxu0 0.0
        %2656 = vmatprep.subr.mxu0 0.0
        %2657 = vmatpush1.msra.mxu0 0.0
        %2658 = vmatprep.subr.mxu0 0.0
        %2659 = vmatpush1.msra.mxu0 0.0
        %2660 = vmatprep.subr.mxu0 0.0
        %2661 = vmatpush1.msra.mxu0 0.0
        %2662 = vmatprep.subr.mxu0 0.0
        %2663 = vmatpush1.msra.mxu0 0.0
        %2664 = vmatprep.subr.mxu0 0.0
        %2665 = vmatpush1.msra.mxu0 0.0
        %2666 = vmatprep.subr.mxu0 0.0
        %2667 = vmatpush1.msra.mxu0 0.0
        %2668 = vmatprep.subr.mxu0 0.0
        %2669 = vmatpush1.msra.mxu0 0.0
        %2670 = vmatprep.subr.mxu0 0.0
        %2671 = vmatpush1.msra.mxu0 0.0
        %2672 = vmatprep.subr.mxu0 0.0
        %2673 = vmatpush1.msra.mxu0 0.0
        %2674 = vmatprep.subr.mxu0 0.0
        %2675 = vmatpush1.msra.mxu0 0.0
        %2676 = vmatprep.subr.mxu0 0.0
        %2677 = vmatpush1.msra.mxu0 0.0
        %2678 = vmatprep.subr.mxu0 0.0
        %2679 = vmatpush1.msra.mxu0 0.0
        %2680 = vmatprep.subr.mxu0 0.0
        %2681 = vmatpush1.msra.mxu0 0.0
        %2682 = vmatprep.subr.mxu0 0.0
        %2683 = vmatpush1.msra.mxu0 0.0
        %2684 = vmatprep.subr.mxu0 0.0
        %2685 = vmatpush1.msra.mxu0 0.0
        %2686 = vmatprep.subr.mxu0 0.0
        %2687 = vmatpush1.msra.mxu0 0.0
        %2688 = vmatprep.subr.mxu0 0.0
        %2689 = vmatpush1.msra.mxu0 0.0
        %2690 = vmatprep.subr.mxu0 0.0
        %2691 = vmatpush1.msra.mxu0 0.0
        %2692 = vmatprep.subr.mxu0 0.0
        %2693 = vmatpush1.msra.mxu0 0.0
        %2694 = vmatprep.mubr.f32.mxu0 0.0
        %2695 = vmatmul.mubr.f32.gmra.mrb[0].mxu0 %v2622
        %v2696 = vpop.f32.mrb[0].mxu0
        %v2697 = vadd.f32 %v2608, %v2696
        %v2698 = vpop.f32.mrb[0].mxu0
        %2699 = vmatprep.mubr.f32.mxu0 0.0
        %2700 = vmatmul.mubr.f32.gmra.mrb[0].mxu0 %v2625
        %v2701 = vpop.f32.mrb[0].mxu0
        %v2702 = vadd.f32 %v2613, %v2701
        %v2703 = vpop.f32.mrb[0].mxu0
        %2704 = vmatprep.mubr.f32.mxu0 0.0
        %2705 = vmatmul.mubr.f32.gmra.mrb[0].mxu0 %v2628
        %v2706 = vpop.f32.mrb[0].mxu0
        %v2707 = vadd.f32 %v2618, %v2706
        %v2708 = vpop.f32.mrb[0].mxu0
        %2709 = vdwg.mxu0
        %v2710 = vadd.f32 %v1886, %v2697
        %v2711 = vadd.f32 %v1887, %v2702
        %v2712 = vadd.f32 %v1888, %v2707
        %s2713 = scalar_lea.vmem %s10, 1
        %v2714 = vld [vmem:[%s2713] sm:$0x1]
        %v2716 = vlaneseq
        %v2717 = vshrl.u32 %v2716, 7
        %v2718 = vsub.s32 0, %v2717
        %v2719 = vrot.slane %v2714, %v2718
        %v2721 = vadd.f32 %v2710, %v2719
        %v2722 = vadd.f32 %v2711, %v2719
        %v2723 = vadd.f32 %v2712, %v2719
        %s2724 = scalar_lea.vmem %s11, 1
        %v2725 = vld [vmem:[%s2724] sm:$0x1]
        %s2726 = scalar_lea.vmem %s12, 1
        %v2727 = vld [vmem:[%s2726] sm:$0x1]
        %v2728 = vsel %vm772, %v2721, 0.0
        %2729 = vadd.xlane.f32.xlu0 %v2728
        %v2730 = vpop.xlane.xlu0 %2729
        %v2731 = vsel %vm772, %v2722, 0.0
        %2732 = vadd.xlane.f32.xlu0 %v2731
        %v2733 = vpop.xlane.xlu0 %2732
        %v2734 = vsel %vm779, %v2723, 0.0
        %2735 = vadd.xlane.f32.xlu0 %v2734
        %v2736 = vpop.xlane.xlu0 %2735
        %v2737 = vmul.f32 %v2730, %v783
        %v2738 = vmul.f32 %v2733, %v783
        %v2739 = vmul.f32 %v2736, %v783
        %v2740 = vsub.f32 %v2721, %v2737
        %v2741 = vsub.f32 %v2722, %v2738
        %v2742 = vsub.f32 %v2723, %v2739
        %v2743 = vmul.f32 %v2740, %v2740
        %v2744 = vmul.f32 %v2741, %v2741
        %v2745 = vmul.f32 %v2742, %v2742
        %v2746 = vsel %vm772, %v2743, 0.0
        %2747 = vadd.xlane.f32.xlu0 %v2746
        %v2748 = vpop.xlane.xlu0 %2747
        %v2749 = vsel %vm772, %v2744, 0.0
        %2750 = vadd.xlane.f32.xlu0 %v2749
        %v2751 = vpop.xlane.xlu0 %2750
        %v2752 = vsel %vm779, %v2745, 0.0
        %2753 = vadd.xlane.f32.xlu0 %v2752
        %v2754 = vpop.xlane.xlu0 %2753
        %v2755 = vmul.f32 %v2748, %v783
        %v2756 = vmul.f32 %v2751, %v783
        %v2757 = vmul.f32 %v2754, %v783
        %v2758 = vadd.f32 %v2755, 1e-05
        %v2759 = vadd.f32 %v2756, 1e-05
        %v2760 = vadd.f32 %v2757, 1e-05
        %v2761 = vrsqrt.pop %v2758
        %v2762 = vrsqrt.pop %v2759
        %v2763 = vrsqrt.pop %v2760
        %v2764 = vmul.f32 %v2740, %v2761
        %v2765 = vmul.f32 %v2741, %v2762
        %v2766 = vmul.f32 %v2742, %v2763
        %v2768 = vlaneseq
        %v2769 = vshrl.u32 %v2768, 7
        %v2770 = vsub.s32 0, %v2769
        %v2771 = vrot.slane %v2725, %v2770
        %v2773 = vmul.f32 %v2764, %v2771
        %v2774 = vmul.f32 %v2765, %v2771
        %v2775 = vmul.f32 %v2766, %v2771
        %v2777 = vlaneseq
        %v2778 = vshrl.u32 %v2777, 7
        %v2779 = vsub.s32 0, %v2778
        %v2780 = vrot.slane %v2727, %v2779
        %v2782 = vadd.f32 %v2773, %v2780
        %v2783 = vadd.f32 %v2774, %v2780
        %v2784 = vadd.f32 %v2775, %v2780
        %s2785 = scalar_lea.vmem %s13, 32
        %v2786 = vld [vmem:[%s2785] sm:$0xff]
        %v2787 = vld [vmem:[%s2785 + $0x8] sm:$0xff]
        %v2788 = vld [vmem:[%s2785 + $0x10] sm:$0xff]
        %v2789 = vld [vmem:[%s2785 + $0x18] sm:$0xff]
        %s2790 = scalar_lea.vmem %s14, 1
        %v2791 = vld [vmem:[%s2790] sm:$0x1]
        %v2793 = vlaneseq
        %v2794 = vshrl.u32 %v2793, 7
        %v2795 = vsub.s32 0, %v2794
        %v2796 = vrot.slane %v2791, %v2795
        %v2799 = vsel %vm772, %v2782, 0
        %v2802 = vsel %vm772, %v2783, 0
        %v2805 = vsel %vm772, %v2784, 0
        %2807 = vmatprep.subr.mxu0 0.0
        %2808 = vmatpush1.msra.mxu0 %v2786
        %2809 = vmatprep.subr.mxu0 0.0
        %2810 = vmatpush1.msra.mxu0 %v2787
        %2811 = vmatprep.subr.mxu0 0.0
        %2812 = vmatpush1.msra.mxu0 %v2788
        %2813 = vmatprep.subr.mxu0 0.0
        %2814 = vmatpush1.msra.mxu0 %v2789
        %2815 = vmatprep.subr.mxu0 0.0
        %2816 = vmatpush1.msra.mxu0 0.0
        %2817 = vmatprep.subr.mxu0 0.0
        %2818 = vmatpush1.msra.mxu0 0.0
        %2819 = vmatprep.subr.mxu0 0.0
        %2820 = vmatpush1.msra.mxu0 0.0
        %2821 = vmatprep.subr.mxu0 0.0
        %2822 = vmatpush1.msra.mxu0 0.0
        %2823 = vmatprep.subr.mxu0 0.0
        %2824 = vmatpush1.msra.mxu0 0.0
        %2825 = vmatprep.subr.mxu0 0.0
        %2826 = vmatpush1.msra.mxu0 0.0
        %2827 = vmatprep.subr.mxu0 0.0
        %2828 = vmatpush1.msra.mxu0 0.0
        %2829 = vmatprep.subr.mxu0 0.0
        %2830 = vmatpush1.msra.mxu0 0.0
        %2831 = vmatprep.subr.mxu0 0.0
        %2832 = vmatpush1.msra.mxu0 0.0
        %2833 = vmatprep.subr.mxu0 0.0
        %2834 = vmatpush1.msra.mxu0 0.0
        %2835 = vmatprep.subr.mxu0 0.0
        %2836 = vmatpush1.msra.mxu0 0.0
        %2837 = vmatprep.subr.mxu0 0.0
        %2838 = vmatpush1.msra.mxu0 0.0
        %2839 = vmatprep.subr.mxu0 0.0
        %2840 = vmatpush1.msra.mxu0 0.0
        %2841 = vmatprep.subr.mxu0 0.0
        %2842 = vmatpush1.msra.mxu0 0.0
        %2843 = vmatprep.subr.mxu0 0.0
        %2844 = vmatpush1.msra.mxu0 0.0
        %2845 = vmatprep.subr.mxu0 0.0
        %2846 = vmatpush1.msra.mxu0 0.0
        %2847 = vmatprep.subr.mxu0 0.0
        %2848 = vmatpush1.msra.mxu0 0.0
        %2849 = vmatprep.subr.mxu0 0.0
        %2850 = vmatpush1.msra.mxu0 0.0
        %2851 = vmatprep.subr.mxu0 0.0
        %2852 = vmatpush1.msra.mxu0 0.0
        %2853 = vmatprep.subr.mxu0 0.0
        %2854 = vmatpush1.msra.mxu0 0.0
        %2855 = vmatprep.subr.mxu0 0.0
        %2856 = vmatpush1.msra.mxu0 0.0
        %2857 = vmatprep.subr.mxu0 0.0
        %2858 = vmatpush1.msra.mxu0 0.0
        %2859 = vmatprep.subr.mxu0 0.0
        %2860 = vmatpush1.msra.mxu0 0.0
        %2861 = vmatprep.subr.mxu0 0.0
        %2862 = vmatpush1.msra.mxu0 0.0
        %2863 = vmatprep.subr.mxu0 0.0
        %2864 = vmatpush1.msra.mxu0 0.0
        %2865 = vmatprep.subr.mxu0 0.0
        %2866 = vmatpush1.msra.mxu0 0.0
        %2867 = vmatprep.subr.mxu0 0.0
        %2868 = vmatpush1.msra.mxu0 0.0
        %2869 = vmatprep.subr.mxu0 0.0
        %2870 = vmatpush1.msra.mxu0 0.0
        %2871 = vmatprep.mubr.f32.mxu0 0.0
        %2872 = vmatmul.mubr.f32.gmra.mrb[0].mxu0 %v2799
        %v2873 = vpop.f32.mrb[0].mxu0
        %v2874 = vadd.f32 %v2796, %v2873
        %v2875 = vpop.f32.mrb[0].mxu0
        %2876 = vmatprep.mubr.f32.mxu0 0.0
        %2877 = vmatmul.mubr.f32.gmra.mrb[0].mxu0 %v2802
        %v2878 = vpop.f32.mrb[0].mxu0
        %v2879 = vadd.f32 %v2796, %v2878
        %v2880 = vpop.f32.mrb[0].mxu0
        %2881 = vmatprep.mubr.f32.mxu0 0.0
        %2882 = vmatmul.mubr.f32.gmra.mrb[0].mxu0 %v2805
        %v2883 = vpop.f32.mrb[0].mxu0
        %v2884 = vadd.f32 %v2796, %v2883
        %v2885 = vpop.f32.mrb[0].mxu0
        %2886 = vdwg.mxu0
        %v2887 = vmul.f32 %v2874, 0.5
        %v2888 = vmul.f32 %v2879, 0.5
        %v2889 = vmul.f32 %v2884, 0.5
        %v2890 = vmul.f32 %v2874, %v1767
        %v2891 = vmul.f32 %v2879, %v1767
        %v2892 = vmul.f32 %v2884, %v1767
        %v2893 = verf.f32.pop %v2890
        %v2894 = verf.f32.pop %v2891
        %v2895 = verf.f32.pop %v2892
        %v2896 = vadd.f32 %v2893, 1.0
        %v2897 = vadd.f32 %v2894, 1.0
        %v2898 = vadd.f32 %v2895, 1.0
        %v2899 = vmul.f32 %v2887, %v2896
        %v2900 = vmul.f32 %v2888, %v2897
        %v2901 = vmul.f32 %v2889, %v2898
        %s2902 = scalar_lea.vmem %s15, 128
        %v2903 = vld [vmem:[%s2902] sm:$0xff]
        %v2904 = vld [vmem:[%s2902 + $0x8] sm:$0xff]
        %v2905 = vld [vmem:[%s2902 + $0x10] sm:$0xff]
        %v2906 = vld [vmem:[%s2902 + $0x18] sm:$0xff]
        %v2907 = vld [vmem:[%s2902 + $0x20] sm:$0xff]
        %v2908 = vld [vmem:[%s2902 + $0x28] sm:$0xff]
        %v2909 = vld [vmem:[%s2902 + $0x30] sm:$0xff]
        %v2910 = vld [vmem:[%s2902 + $0x38] sm:$0xff]
        %v2911 = vld [vmem:[%s2902 + $0x40] sm:$0xff]
        %v2912 = vld [vmem:[%s2902 + $0x48] sm:$0xff]
        %v2913 = vld [vmem:[%s2902 + $0x50] sm:$0xff]
        %v2914 = vld [vmem:[%s2902 + $0x58] sm:$0xff]
        %v2915 = vld [vmem:[%s2902 + $0x60] sm:$0xff]
        %v2916 = vld [vmem:[%s2902 + $0x68] sm:$0xff]
        %v2917 = vld [vmem:[%s2902 + $0x70] sm:$0xff]
        %v2918 = vld [vmem:[%s2902 + $0x78] sm:$0xff]
        %2919 = vmatprep.subr.mxu0 0.0
        %2920 = vmatpush1.msra.mxu0 %v2903
        %2921 = vmatprep.subr.mxu0 0.0
        %2922 = vmatpush1.msra.mxu0 %v2904
        %2923 = vmatprep.subr.mxu0 0.0
        %2924 = vmatpush1.msra.mxu0 %v2905
        %2925 = vmatprep.subr.mxu0 0.0
        %2926 = vmatpush1.msra.mxu0 %v2906
        %2927 = vmatprep.subr.mxu0 0.0
        %2928 = vmatpush1.msra.mxu0 %v2907
        %2929 = vmatprep.subr.mxu0 0.0
        %2930 = vmatpush1.msra.mxu0 %v2908
        %2931 = vmatprep.subr.mxu0 0.0
        %2932 = vmatpush1.msra.mxu0 %v2909
        %2933 = vmatprep.subr.mxu0 0.0
        %2934 = vmatpush1.msra.mxu0 %v2910
        %2935 = vmatprep.subr.mxu0 0.0
        %2936 = vmatpush1.msra.mxu0 %v2911
        %2937 = vmatprep.subr.mxu0 0.0
        %2938 = vmatpush1.msra.mxu0 %v2912
        %2939 = vmatprep.subr.mxu0 0.0
        %2940 = vmatpush1.msra.mxu0 %v2913
        %2941 = vmatprep.subr.mxu0 0.0
        %2942 = vmatpush1.msra.mxu0 %v2914
        %2943 = vmatprep.subr.mxu0 0.0
        %2944 = vmatpush1.msra.mxu0 %v2915
        %2945 = vmatprep.subr.mxu0 0.0
        %2946 = vmatpush1.msra.mxu0 %v2916
        %2947 = vmatprep.subr.mxu0 0.0
        %2948 = vmatpush1.msra.mxu0 %v2917
        %2949 = vmatprep.subr.mxu0 0.0
        %2950 = vmatpush1.msra.mxu0 %v2918
        %2951 = vmatprep.subr.mxu0 0.0
        %2952 = vmatpush1.msra.mxu0 0.0
        %2953 = vmatprep.subr.mxu0 0.0
        %2954 = vmatpush1.msra.mxu0 0.0
        %2955 = vmatprep.subr.mxu0 0.0
        %2956 = vmatpush1.msra.mxu0 0.0
        %2957 = vmatprep.subr.mxu0 0.0
        %2958 = vmatpush1.msra.mxu0 0.0
        %2959 = vmatprep.subr.mxu0 0.0
        %2960 = vmatpush1.msra.mxu0 0.0
        %2961 = vmatprep.subr.mxu0 0.0
        %2962 = vmatpush1.msra.mxu0 0.0
        %2963 = vmatprep.subr.mxu0 0.0
        %2964 = vmatpush1.msra.mxu0 0.0
        %2965 = vmatprep.subr.mxu0 0.0
        %2966 = vmatpush1.msra.mxu0 0.0
        %2967 = vmatprep.subr.mxu0 0.0
        %2968 = vmatpush1.msra.mxu0 0.0
        %2969 = vmatprep.subr.mxu0 0.0
        %2970 = vmatpush1.msra.mxu0 0.0
        %2971 = vmatprep.subr.mxu0 0.0
        %2972 = vmatpush1.msra.mxu0 0.0
        %2973 = vmatprep.subr.mxu0 0.0
        %2974 = vmatpush1.msra.mxu0 0.0
        %2975 = vmatprep.subr.mxu0 0.0
        %2976 = vmatpush1.msra.mxu0 0.0
        %2977 = vmatprep.subr.mxu0 0.0
        %2978 = vmatpush1.msra.mxu0 0.0
        %2979 = vmatprep.subr.mxu0 0.0
        %2980 = vmatpush1.msra.mxu0 0.0
        %2981 = vmatprep.subr.mxu0 0.0
        %2982 = vmatpush1.msra.mxu0 0.0
        %2983 = vmatprep.mubr.f32.mxu0 0.0
        %2984 = vmatmul.mubr.f32.gmra.mrb[0].mxu0 %v2899
        %v2985 = vpop.f32.mrb[0].mxu0
        %v2986 = vadd.f32 0.0, %v2985
        %v2987 = vpop.f32.mrb[0].mxu0
        %2988 = vmatprep.mubr.f32.mxu0 0.0
        %2989 = vmatmul.mubr.f32.gmra.mrb[0].mxu0 %v2900
        %v2990 = vpop.f32.mrb[0].mxu0
        %v2991 = vadd.f32 0.0, %v2990
        %v2992 = vpop.f32.mrb[0].mxu0
        %2993 = vmatprep.mubr.f32.mxu0 0.0
        %2994 = vmatmul.mubr.f32.gmra.mrb[0].mxu0 %v2901
        %v2995 = vpop.f32.mrb[0].mxu0
        %v2996 = vadd.f32 0.0, %v2995
        %v2997 = vpop.f32.mrb[0].mxu0
        %2998 = vdwg.mxu0
        %v2999 = vadd.f32 %v2721, %v2986
        %v3000 = vadd.f32 %v2722, %v2991
        %v3001 = vadd.f32 %v2723, %v2996
        %s3002 = scalar_lea.vmem %s16, 1
        %v3003 = vld [vmem:[%s3002] sm:$0x1]
        %v3005 = vlaneseq
        %v3006 = vshrl.u32 %v3005, 7
        %v3007 = vsub.s32 0, %v3006
        %v3008 = vrot.slane %v3003, %v3007
        %v3010 = vadd.f32 %v2999, %v3008
        %v3011 = vadd.f32 %v3000, %v3008
        %v3012 = vadd.f32 %v3001, %v3008
        %v3013 = vsel %vm772, %v3010, 0.0
        %v3014 = vsel %vm772, %v3011, 0.0
        %v3015 = vadd.f32 %v3013, %v3014
        %v3016 = vsel %vm779, %v3012, 0.0
        %v3017 = vadd.f32 %v3015, %v3016
        %v3018 = vrot.slane %v3017, 4
        %v3019 = vadd.f32 %v3017, %v3018
        %v3020 = vrot.slane %v3019, 2
        %v3021 = vadd.f32 %v3019, %v3020
        %v3022 = vrot.slane %v3021, 1
        %v3023 = vadd.f32 %v3021, %v3022
        %v3024 = vrcp.pop 17.0
        %v3025 = vmul.f32 %v3023, %v3024
        %v3026 = vld [vmem:[%s17] sm:$0x1]
        %v3027 = vld [vmem:[%s18] sm:$0x1]
        %v3028 = vsel %vm772, %v3025, 0.0
        %3029 = vadd.xlane.f32.xlu0 %v3028
        %v3030 = vpop.xlane.xlu0 %3029
        %v3031 = vmul.f32 %v3030, %v783
        %v3032 = vsub.f32 %v3025, %v3031
        %v3033 = vmul.f32 %v3032, %v3032
        %v3034 = vsel %vm772, %v3033, 0.0
        %3035 = vadd.xlane.f32.xlu0 %v3034
        %v3036 = vpop.xlane.xlu0 %3035
        %v3037 = vmul.f32 %v3036, %v783
        %v3038 = vadd.f32 %v3037, 1e-05
        %v3039 = vrsqrt.pop %v3038
        %v3040 = vmul.f32 %v3032, %v3039
        %v3041 = vmul.f32 %v3040, %v3026
        %v3042 = vadd.f32 %v3041, %v3027
        %v3043 = vld [vmem:[%s19] sm:$0xff]
        %v3044 = vld [vmem:[%s19 + $0x8] sm:$0xff]
        %v3045 = vld [vmem:[%s19 + $0x10] sm:$0xff]
        %v3046 = vld [vmem:[%s19 + $0x18] sm:$0xff]
        %v3047 = vld [vmem:[%s20] sm:$0x1]
        %v3049 = vsel %vm772, %v3042, 0
        %3051 = vmatprep.subr.mxu0 0.0
        %3052 = vmatpush1.msra.mxu0 %v3043
        %3053 = vmatprep.subr.mxu0 0.0
        %3054 = vmatpush1.msra.mxu0 %v3044
        %3055 = vmatprep.subr.mxu0 0.0
        %3056 = vmatpush1.msra.mxu0 %v3045
        %3057 = vmatprep.subr.mxu0 0.0
        %3058 = vmatpush1.msra.mxu0 %v3046
        %3059 = vmatprep.subr.mxu0 0.0
        %3060 = vmatpush1.msra.mxu0 0.0
        %3061 = vmatprep.subr.mxu0 0.0
        %3062 = vmatpush1.msra.mxu0 0.0
        %3063 = vmatprep.subr.mxu0 0.0
        %3064 = vmatpush1.msra.mxu0 0.0
        %3065 = vmatprep.subr.mxu0 0.0
        %3066 = vmatpush1.msra.mxu0 0.0
        %3067 = vmatprep.subr.mxu0 0.0
        %3068 = vmatpush1.msra.mxu0 0.0
        %3069 = vmatprep.subr.mxu0 0.0
        %3070 = vmatpush1.msra.mxu0 0.0
        %3071 = vmatprep.subr.mxu0 0.0
        %3072 = vmatpush1.msra.mxu0 0.0
        %3073 = vmatprep.subr.mxu0 0.0
        %3074 = vmatpush1.msra.mxu0 0.0
        %3075 = vmatprep.subr.mxu0 0.0
        %3076 = vmatpush1.msra.mxu0 0.0
        %3077 = vmatprep.subr.mxu0 0.0
        %3078 = vmatpush1.msra.mxu0 0.0
        %3079 = vmatprep.subr.mxu0 0.0
        %3080 = vmatpush1.msra.mxu0 0.0
        %3081 = vmatprep.subr.mxu0 0.0
        %3082 = vmatpush1.msra.mxu0 0.0
        %3083 = vmatprep.subr.mxu0 0.0
        %3084 = vmatpush1.msra.mxu0 0.0
        %3085 = vmatprep.subr.mxu0 0.0
        %3086 = vmatpush1.msra.mxu0 0.0
        %3087 = vmatprep.subr.mxu0 0.0
        %3088 = vmatpush1.msra.mxu0 0.0
        %3089 = vmatprep.subr.mxu0 0.0
        %3090 = vmatpush1.msra.mxu0 0.0
        %3091 = vmatprep.subr.mxu0 0.0
        %3092 = vmatpush1.msra.mxu0 0.0
        %3093 = vmatprep.subr.mxu0 0.0
        %3094 = vmatpush1.msra.mxu0 0.0
        %3095 = vmatprep.subr.mxu0 0.0
        %3096 = vmatpush1.msra.mxu0 0.0
        %3097 = vmatprep.subr.mxu0 0.0
        %3098 = vmatpush1.msra.mxu0 0.0
        %3099 = vmatprep.subr.mxu0 0.0
        %3100 = vmatpush1.msra.mxu0 0.0
        %3101 = vmatprep.subr.mxu0 0.0
        %3102 = vmatpush1.msra.mxu0 0.0
        %3103 = vmatprep.subr.mxu0 0.0
        %3104 = vmatpush1.msra.mxu0 0.0
        %3105 = vmatprep.subr.mxu0 0.0
        %3106 = vmatpush1.msra.mxu0 0.0
        %3107 = vmatprep.subr.mxu0 0.0
        %3108 = vmatpush1.msra.mxu0 0.0
        %3109 = vmatprep.subr.mxu0 0.0
        %3110 = vmatpush1.msra.mxu0 0.0
        %3111 = vmatprep.subr.mxu0 0.0
        %3112 = vmatpush1.msra.mxu0 0.0
        %3113 = vmatprep.subr.mxu0 0.0
        %3114 = vmatpush1.msra.mxu0 0.0
        %3115 = vmatprep.mubr.f32.mxu0 0.0
        %3116 = vmatmul.mubr.f32.gmra.mrb[0].mxu0 %v3049
        %v3117 = vpop.f32.mrb[0].mxu0
        %v3118 = vadd.f32 %v3047, %v3117
        %v3119 = vpop.f32.mrb[0].mxu0
        %3120 = vdwg.mxu0
        %vm3121 = vcmask 73728
        %3122 = vst.msk [vmem:[%s648] sm:$0x1] %vm3121, %v3118
        %s3123 = sand.u32 %s489, 1
        %s3124 = scalar_lea.sflag [#allocation3], %s3123
        %s3125 = sand.u32 %s489, 1
        %s3126 = scalar_lea.vmem [#allocation2], %s3125
        // Predicated region
        $region105: #{vit_forward.1} parent=103 // pred_check
          %p3127 = pneg %p499
        $region106: #{vit_forward.1} parent=103 // pred_check_branch
          %3129 = sbr.rel (%p3127) target = $region108
        $region107: #{vit_forward.1} parent=103 // pred_region
          %s3131 = ssub.s32 16, 16
          %3132 = vsyncadd %s3124, %s3131
          %s3133 = smul.addr %s35, 16
          %s3134 = scalar_lea.hbm %s21, %s3133
          %s3136 = sshll.u32 %s3126, 4
          %s3137 = int_to_ptr.vmem [resolvable:$true] %s3136
          %3139 = dma.vmem_to_hbm [thread:$0]  %s3137, 16, %s3134, %s3124
        $region108: #{vit_forward.1} parent=103 // pred_fallthru
          _
      $region104: #{vit_forward.1} parent=5 // pred_fallthru
        _
      %p3140 = scmp.le.s32.totalorder 2, %s30
      // Predicated region
      $region109: #{vit_forward.1} parent=5 // pred_check
        %p3141 = pneg %p3140
      $region110: #{vit_forward.1} parent=5 // pred_check_branch
        %3143 = sbr.rel (%p3141) target = $region112
      $region111: #{vit_forward.1} parent=5 // pred_region
        %s3144 = ssub.s32 %s30, 2
        // Predicated region
        $region113: #{vit_forward.1} parent=111 // pred_check
          %p3145 = pneg %p505
        $region114: #{vit_forward.1} parent=111 // pred_check_branch
          %3147 = sbr.rel (%p3145) target = $region116
        $region115: #{vit_forward.1} parent=111 // pred_region
          %s3148 = sand.u32 %s490, 1
          %s3149 = scalar_lea.sflag [#allocation3], %s3148
          %s3150 = sand.u32 %s490, 1
          %s3151 = scalar_lea.vmem [#allocation2], %s3150
          %3152 = dma.done %s3149, 16
        $region116: #{vit_forward.1} parent=111 // pred_fallthru
          _
      $region112: #{vit_forward.1} parent=5 // pred_fallthru
        _
    $region6: #{vit_forward.1} parent=1 // loop_footer
      %s34 = sadd.s32 1, %s30
    $region7: #{vit_forward.1} parent=1 // loop_footer_branch
      %29 = sbr.rel target = $region3
    $region8: #{vit_forward.1} parent=1 // loop_exit
      _
    %3153 = vsyncpa [#allocation3], 1
    %s3154 = scalar_lea.sflag [#allocation3], 1
    %3155 = vsyncpa %s3154, 1

</llo_original>
